<compile_context>
chip_gen: v7x
topology: tpu7x:2x2x1
jax: 0.10.0
libtpu: 0.0.40
codegen_flags: <defaults>
</compile_context>

<pallas_src>
import numpy as np
import jax
import jax.numpy as jnp
from jax.experimental import pallas as pl
from jax.experimental.pallas import tpu as pltpu

# ---- Config (ResNet.__init__ defaults, small shapes) ------------------------
MODEL_DIM  = 128                    # model_dim
UAV_RAYS   = 16                     # uav_num_rays (even -> ini_conv halves it)
LH         = UAV_RAYS // 2          # spatial length after ini_conv
STATE_DIM  = 16                     # in_dim - uav_num_rays
IN_DIM     = STATE_DIM + UAV_RAYS   # 32
OUT_DIM    = 8
DIM_MULT   = [1, 1, 1]
NUM_BLOCKS = 2
N_RES      = len(DIM_MULT) * NUM_BLOCKS   # 6 ResNetBlocks
SKIP_SCALE = 1.0
BATCH      = 4
B_PAD      = 8                      # pad batch to one full sublane group

VMEM_SPEC = pl.BlockSpec(memory_space=pltpu.MemorySpace.VMEM)
HBM_SPEC  = pl.BlockSpec(memory_space=pl.ANY)     # late-use weights stay in HBM


# ---------------------------------------------------------------------------
# Single fused Pallas kernel
# ---------------------------------------------------------------------------
def _fused_resnet_kernel(x_ref, m1_ref, b1_ref, w2_ref, b2_ref, be_ref,
                         fw_ref, fb_ref, mcb_ref, lb_ref,
                         pa_ref, pb_ref, qa_ref, qb_ref, ow_ref, ob_ref,
                         g_hbm, mcw_hbm, lw_hbm,
                         out_ref,
                         g_vmem, mcw_vmem, lw_vmem, sem):
    f32, bf16 = jnp.float32, jnp.bfloat16
    silu = lambda v: v * jax.nn.sigmoid(v)
    # bf16 weights / bf16 MXU inputs, f32 accumulation, f32 elementwise math.
    dot = lambda a, w: jnp.dot(a.astype(bf16), w, preferred_element_type=f32)

    B, C = B_PAD, MODEL_DIM
    R = LH * B                                   # conv rows, (t, b)-major

    # ---- Kick off DMAs for the late-use weights so they overlap the conv
    # compute instead of serializing ahead of the kernel body.
    cp_g  = pltpu.make_async_copy(g_hbm,   g_vmem,   sem.at[0]); cp_g.start()
    cp_mc = pltpu.make_async_copy(mcw_hbm, mcw_vmem, sem.at[1]); cp_mc.start()
    cp_lw = pltpu.make_async_copy(lw_hbm,  lw_vmem,  sem.at[2]); cp_lw.start()

    xb = x_ref[...]                              # (B, IN_DIM) f32
    xs = xb[:, :STATE_DIM]                       # (B, 16) state part
    obs = xb[:, STATE_DIM:]                      # (B, 16) ray part

    # ---- ini_conv: Conv1d(1, C, k=4, s=2, pad=1, circular) + SiLU,
    # folded into ONE matmul: obs (B,16) @ M1 (16, LH*C) -> (B, LH*C), where
    # lane j = t*C + c holds output position t, channel c.
    pre1 = silu(dot(obs, m1_ref[...]) + b1_ref[...])                 # (B, LH*C)
    # Re-lay to (t,b)-major (R, C): each 128-lane slice is one whole f32 vreg,
    # so this concat is pure vreg placement (no cross-lane/sublane movement).
    h1 = jnp.concatenate([pre1[:, t * C:(t + 1) * C] for t in range(LH)],
                         axis=0)                                     # (R, C)

    # ---- mid_conv: Conv1d(C, C, k=3, s=1, pad=1, circular) + SiLU.
    # Circular padding along spatial t == rotate by one row-group (B rows);
    # the rotations are vreg-aligned slice+concat (no XLU gather).
    h1m = jnp.concatenate([h1[R - B:, :], h1[:R - B, :]], axis=0)    # tap t-1
    h1p = jnp.concatenate([h1[B:, :], h1[:B, :]], axis=0)            # tap t+1
    h1c = jnp.concatenate([h1m, h1, h1p], axis=1)                    # (R, 3C)
    h2 = silu(dot(h1c, w2_ref[...]) + b2_ref[...])                   # (R, C)

    # ---- out_conv (ConvTranspose1d C->1) folded with map_obs into stacked
    # G (LH*C, C): view h2 as (B, LH*C) (whole (8,128) row-groups become
    # 128-lane slices) and contract K=1024 in a single MXU pass.
    h2v = jnp.concatenate([h2[t * B:(t + 1) * B, :] for t in range(LH)],
                          axis=1)                                    # (B, LH*C)
    cp_g.wait()
    emb = dot(h2v, g_vmem[...]) + be_ref[...]                        # (B, C)

    # ---- first_layer on the state part
    x = dot(xs, fw_ref[...]) + fb_ref[...]                           # (B, C)

    # ---- map_cond is loop-invariant: hoisted into one big matmul, sliced
    # per block at 128-lane-aligned boundaries.
    cp_mc.wait()
    pr = silu(dot(emb, mcw_vmem[...]) + mcb_ref[...])                # (B, N_RES*2C)

    cp_lw.wait()
    for i in range(N_RES):                                           # static unroll
        scale = pr[:, 2 * C * i: 2 * C * i + C]
        shift = pr[:, 2 * C * i + C: 2 * C * (i + 1)]
        xn = pa_ref[i] * x + pb_ref[i]                   # Affine pre_norm
        h = silu(shift + xn * (scale + 1.0))             # addcmul + SiLU
        h = dot(h, lw_vmem[i]) + lb_ref[i]               # linear (dropout p=0)
        h = qa_ref[i] * h + qb_ref[i]                    # Affine post_norm
        x = (h + x) * SKIP_SCALE                         # residual

    out = dot(silu(x), ow_ref[...]) + ob_ref[...]
    out_ref[...] = out.astype(out_ref.dtype)


# ---------------------------------------------------------------------------
# Forward pass: one pallas_call, everything resident in VMEM
# ---------------------------------------------------------------------------
def resnet_forward(x, KP):
    B = x.shape[0]
    assert B <= B_PAD, "kernel is specialized for batch <= 8 (padded to 8)"
    xp = x if B == B_PAD else jnp.pad(x, ((0, B_PAD - B), (0, 0)))
    out = pl.pallas_call(
        _fused_resnet_kernel,
        out_shape=jax.ShapeDtypeStruct((B_PAD, OUT_DIM), jnp.float32),
        in_specs=[VMEM_SPEC] * 16 + [HBM_SPEC] * 3,
        out_specs=VMEM_SPEC,
        scratch_shapes=[
            pltpu.VMEM((LH * MODEL_DIM, MODEL_DIM), jnp.bfloat16),           # g
            pltpu.VMEM((MODEL_DIM, N_RES * 2 * MODEL_DIM), jnp.bfloat16),    # mc_w_all
            pltpu.VMEM((N_RES, MODEL_DIM, MODEL_DIM), jnp.bfloat16),         # lin_w
            pltpu.SemaphoreType.DMA((3,)),
        ],
    )(xp, KP["m1"], KP["b1w"], KP["w2mm"], KP["b2"], KP["b_emb"],
      KP["first_w"], KP["first_b"], KP["mc_b_all"], KP["lin_b"],
      KP["pre_a"], KP["pre_b"], KP["post_a"], KP["post_b"],
      KP["final_w"], KP["final_b"],
      KP["g"], KP["mc_w_all"], KP["lin_w"])
    return out[:B]


# ---------------------------------------------------------------------------
# Deterministic parameter init: raw PyTorch-layout params (for the reference)
# plus folded / bf16 kernel-layout params.
# ---------------------------------------------------------------------------
def init_params(key):
    C, L, Lh = MODEL_DIM, UAV_RAYS, LH
    ks = iter(jax.random.split(key, 32))

    def nrm(shape, scale):
        return scale * jax.random.normal(next(ks), shape, jnp.float32)

    # --- raw parameters in PyTorch layout ---
    W1 = nrm((C, 1, 4), 0.5)                      # ini_conv  (Cout, Cin, K)
    W2 = nrm((C, C, 3), 1.0 / np.sqrt(3 * C))     # mid_conv  (Cout, Cin, K)
    W3 = nrm((C, 1, 4), 1.0 / np.sqrt(C))         # out_conv  (Cin, Cout, K)
    b1, b2, b3 = nrm((C,), 0.1), nrm((C,), 0.1), nrm((1,), 0.1)
    first_w = nrm((STATE_DIM, C), 1.0 / np.sqrt(STATE_DIM))   # stored (in, out)
    first_b = nrm((1, C), 0.1)
    mapobs_w = nrm((UAV_RAYS, C), 1.0 / np.sqrt(UAV_RAYS))
    mapobs_b = nrm((1, C), 0.1)
    mc_w = nrm((N_RES, C, 2 * C), 1.0 / np.sqrt(C))
    mc_b = nrm((N_RES, 1, 2 * C), 0.1)
    lin_w = nrm((N_RES, C, C), 1.0 / np.sqrt(C))
    lin_b = nrm((N_RES, 1, C), 0.1)
    pre_a = 1.0 + nrm((N_RES, 1, C), 0.1)
    pre_b = nrm((N_RES, 1, C), 0.1)
    post_a = 1.0 + nrm((N_RES, 1, C), 0.1)
    post_b = nrm((N_RES, 1, C), 0.1)
    final_w = nrm((C, OUT_DIM), 1.0 / np.sqrt(C))
    final_b = nrm((1, OUT_DIM), 0.1)

    P = dict(ini_W_t=W1, ini_b_t=b1, mid_W_t=W2, mid_b_t=b2, out_W_t=W3, out_b_t=b3,
             first_w=first_w, first_b=first_b, mapobs_w=mapobs_w, mapobs_b=mapobs_b,
             mc_w=mc_w, mc_b=mc_b, lin_w=lin_w, lin_b=lin_b,
             pre_a=pre_a, pre_b=pre_b, post_a=post_a, post_b=post_b,
             final_w=final_w, final_b=final_b)

    # --- folded kernel-layout parameters (folds done in f64, weights -> bf16) ---
    W1n = np.asarray(W1, np.float64)
    W2n = np.asarray(W2, np.float64)
    W3n = np.asarray(W3, np.float64)
    mwn = np.asarray(mapobs_w, np.float64)
    mbn = np.asarray(mapobs_b, np.float64)

    # ini_conv: circular pad + stride-2 taps -> ONE (L, Lh*C) matrix; column
    # t*C + c is the weight from input ray j to output (position t, channel c).
    M1w = np.zeros((L, Lh * C), np.float64)
    for t in range(Lh):
        for k in range(4):
            j = (2 * t + k - 1) % L
            M1w[j, t * C:(t + 1) * C] += W1n[:, 0, k]
    b1w = np.tile(np.asarray(b1, np.float64), Lh)[None, :]           # (1, Lh*C)

    # out_conv (crop [1:1+L]) folded with map_obs -> stacked G (Lh*C, C).
    Kmat = np.zeros((Lh, C, L), np.float64)
    for t in range(Lh):
        for k in range(4):
            i = 2 * t + k - 1
            if 0 <= i < L:
                Kmat[t, :, i] += W3n[:, 0, k]
    G = np.einsum("tci,id->tcd", Kmat, mwn)                          # (Lh, C, C)
    Gs = G.reshape(Lh * C, C)                                        # (Lh*C, C)
    b_emb = float(np.asarray(b3)[0]) * mwn.sum(axis=0, keepdims=True) + mbn  # (1, C)

    mid_mm = np.transpose(W2n, (2, 1, 0)).reshape(3 * C, C)          # (3C, C)
    mc_all = np.transpose(np.asarray(mc_w, np.float64), (1, 0, 2)).reshape(
        C, N_RES * 2 * C)                                            # (C, N_RES*2C)
    mcb_all = np.asarray(mc_b, np.float64).reshape(1, N_RES * 2 * C)

    bf = lambda a: jnp.asarray(np.asarray(a), jnp.bfloat16)
    fp = lambda a: jnp.asarray(np.asarray(a), jnp.float32)

    KP = dict(
        m1=bf(M1w), b1w=fp(b1w),
        w2mm=bf(mid_mm), b2=fp(np.asarray(b2)[None, :]),
        g=bf(Gs), b_emb=fp(b_emb),
        first_w=bf(first_w), first_b=fp(first_b),
        mc_w_all=bf(mc_all), mc_b_all=fp(mcb_all),
        lin_w=bf(lin_w), lin_b=fp(lin_b),
        pre_a=fp(pre_a), pre_b=fp(pre_b),
        post_a=fp(post_a), post_b=fp(post_b),
        final_w=bf(final_w), final_b=fp(final_b),
    )
    return P, KP


# ---------------------------------------------------------------------------
# Independent numpy reference (mirrors the PyTorch forward exactly)
# ---------------------------------------------------------------------------
def _np_silu(v):
    return v / (1.0 + np.exp(-v))


def reference_forward(x, P):
    x = np.asarray(x, np.float64)
    C, L = MODEL_DIM, UAV_RAYS
    Lh = L // 2
    B = x.shape[0]
    obs, xs = x[:, -L:], x[:, :-L]
    W1 = np.asarray(P["ini_W_t"], np.float64); b1 = np.asarray(P["ini_b_t"], np.float64)
    W2 = np.asarray(P["mid_W_t"], np.float64); b2 = np.asarray(P["mid_b_t"], np.float64)
    W3 = np.asarray(P["out_W_t"], np.float64); b3 = np.asarray(P["out_b_t"], np.float64)

    o = obs[:, None, :]                                                   # (B,1,L)
    op = np.concatenate([o[:, :, -1:], o, o[:, :, :1]], axis=2)           # circular pad 1
    c1 = np.zeros((B, C, Lh))
    for t in range(Lh):
        c1[:, :, t] = np.einsum("bck,ock->bo", op[:, :, 2 * t:2 * t + 4], W1) + b1
    c1 = _np_silu(c1)
    cp = np.concatenate([c1[:, :, -1:], c1, c1[:, :, :1]], axis=2)
    c2 = np.zeros((B, C, Lh))
    for t in range(Lh):
        c2[:, :, t] = np.einsum("bck,ock->bo", cp[:, :, t:t + 3], W2) + b2
    c2 = _np_silu(c2)
    full = np.zeros((B, 1, 2 * (Lh - 1) + 4))
    for t in range(Lh):
        for k in range(4):
            full[:, :, 2 * t + k] += np.einsum("bc,co->bo", c2[:, :, t], W3[:, :, k])
    obs_feat = full[:, 0, 1:1 + L] + b3[0]

    h = xs @ np.asarray(P["first_w"], np.float64) + np.asarray(P["first_b"], np.float64)
    emb = obs_feat @ np.asarray(P["mapobs_w"], np.float64) + np.asarray(P["mapobs_b"], np.float64)
    for i in range(N_RES):
        params = _np_silu(emb @ np.asarray(P["mc_w"][i], np.float64)
                          + np.asarray(P["mc_b"][i], np.float64))
        scale, shift = params[:, :C], params[:, C:]
        xn = np.asarray(P["pre_a"][i], np.float64) * h + np.asarray(P["pre_b"][i], np.float64)
        t = _np_silu(shift + xn * (scale + 1.0))
        t = t @ np.asarray(P["lin_w"][i], np.float64) + np.asarray(P["lin_b"][i], np.float64)
        t = np.asarray(P["post_a"][i], np.float64) * t + np.asarray(P["post_b"][i], np.float64)
        h = (t + h) * SKIP_SCALE
    return _np_silu(h) @ np.asarray(P["final_w"], np.float64) + np.asarray(P["final_b"], np.float64)


# ---------------------------------------------------------------------------
if __name__ == "__main__":
    key = jax.random.PRNGKey(0)
    pkey, xkey = jax.random.split(key)
    P, KP = init_params(pkey)
    x = jax.random.normal(xkey, (BATCH, IN_DIM), jnp.float32)

    fwd = jax.jit(resnet_forward)
    out = jax.block_until_ready(fwd(x, KP))

    assert out.shape == (BATCH, OUT_DIM)
    assert np.isfinite(np.asarray(out)).all()
    ref = reference_forward(np.asarray(x), P)
    err = float(np.max(np.abs(np.asarray(out, np.float64) - ref))) / (float(np.max(np.abs(ref))) + 1e-6)
    assert err < 2e-2, f"mismatch vs reference: {err}"
    print("KERNEL_OK")
</pallas_src>

<mosaic_0001>
module attributes {stable_mosaic.version = 11 : i64} {
  func.func @_fused_resnet_kernel(%arg0: memref<8x32xf32, #tpu.memory_space<vmem>>, %arg1: memref<16x1024xbf16, #tpu.memory_space<vmem>>, %arg2: memref<1x1024xf32, #tpu.memory_space<vmem>>, %arg3: memref<384x128xbf16, #tpu.memory_space<vmem>>, %arg4: memref<1x128xf32, #tpu.memory_space<vmem>>, %arg5: memref<1x128xf32, #tpu.memory_space<vmem>>, %arg6: memref<16x128xbf16, #tpu.memory_space<vmem>>, %arg7: memref<1x128xf32, #tpu.memory_space<vmem>>, %arg8: memref<1x1536xf32, #tpu.memory_space<vmem>>, %arg9: memref<6x1x128xf32, #tpu.memory_space<vmem>>, %arg10: memref<6x1x128xf32, #tpu.memory_space<vmem>>, %arg11: memref<6x1x128xf32, #tpu.memory_space<vmem>>, %arg12: memref<6x1x128xf32, #tpu.memory_space<vmem>>, %arg13: memref<6x1x128xf32, #tpu.memory_space<vmem>>, %arg14: memref<128x8xbf16, #tpu.memory_space<vmem>>, %arg15: memref<1x8xf32, #tpu.memory_space<vmem>>, %arg16: memref<1024x128xbf16, #tpu.memory_space<any>>, %arg17: memref<128x1536xbf16, #tpu.memory_space<any>>, %arg18: memref<6x128x128xbf16, #tpu.memory_space<any>>, %arg19: memref<8x8xf32, #tpu.memory_space<vmem>>, %arg20: memref<1024x128xbf16, #tpu.memory_space<vmem>>, %arg21: memref<128x1536xbf16, #tpu.memory_space<vmem>>, %arg22: memref<6x128x128xbf16, #tpu.memory_space<vmem>>, %arg23: memref<3x!tpu.dma_semaphore, #tpu.memory_space<semaphore_mem>>) attributes {dimension_semantics = [], scalar_prefetch = 0 : i64, scratch_operands = 4 : i64, tpu.core_type = #tpu.core_type<tc>} {
    %c0_i32 = arith.constant 0 : i32
    %0 = tpu.memref_slice %arg23[%c0_i32] : memref<3x!tpu.dma_semaphore, #tpu.memory_space<semaphore_mem>> -> memref<1x!tpu.dma_semaphore, #tpu.memory_space<semaphore_mem>>
    %1 = tpu.memref_squeeze %0 : memref<1x!tpu.dma_semaphore, #tpu.memory_space<semaphore_mem>> -> memref<!tpu.dma_semaphore, #tpu.memory_space<semaphore_mem>>
    tpu.enqueue_dma source(%arg16 : memref<1024x128xbf16, #tpu.memory_space<any>>) target(%arg20 : memref<1024x128xbf16, #tpu.memory_space<vmem>>) target_semaphore(%1 : memref<!tpu.dma_semaphore, #tpu.memory_space<semaphore_mem>>)
    %c1_i32 = arith.constant 1 : i32
    %2 = tpu.memref_slice %arg23[%c1_i32] : memref<3x!tpu.dma_semaphore, #tpu.memory_space<semaphore_mem>> -> memref<1x!tpu.dma_semaphore, #tpu.memory_space<semaphore_mem>>
    %3 = tpu.memref_squeeze %2 : memref<1x!tpu.dma_semaphore, #tpu.memory_space<semaphore_mem>> -> memref<!tpu.dma_semaphore, #tpu.memory_space<semaphore_mem>>
    tpu.enqueue_dma source(%arg17 : memref<128x1536xbf16, #tpu.memory_space<any>>) target(%arg21 : memref<128x1536xbf16, #tpu.memory_space<vmem>>) target_semaphore(%3 : memref<!tpu.dma_semaphore, #tpu.memory_space<semaphore_mem>>)
    %c2_i32 = arith.constant 2 : i32
    %4 = tpu.memref_slice %arg23[%c2_i32] : memref<3x!tpu.dma_semaphore, #tpu.memory_space<semaphore_mem>> -> memref<1x!tpu.dma_semaphore, #tpu.memory_space<semaphore_mem>>
    %5 = tpu.memref_squeeze %4 : memref<1x!tpu.dma_semaphore, #tpu.memory_space<semaphore_mem>> -> memref<!tpu.dma_semaphore, #tpu.memory_space<semaphore_mem>>
    tpu.enqueue_dma source(%arg18 : memref<6x128x128xbf16, #tpu.memory_space<any>>) target(%arg22 : memref<6x128x128xbf16, #tpu.memory_space<vmem>>) target_semaphore(%5 : memref<!tpu.dma_semaphore, #tpu.memory_space<semaphore_mem>>)
    %c0 = arith.constant 0 : index
    %c0_0 = arith.constant 0 : index
    %6 = vector.load %arg0[%c0, %c0_0] : memref<8x32xf32, #tpu.memory_space<vmem>>, vector<8x32xf32>
    %7 = vector.extract_strided_slice %6 {offsets = [0, 0], sizes = [8, 16], strides = [1, 1]} : vector<8x32xf32> to vector<8x16xf32>
    %8 = vector.extract_strided_slice %6 {offsets = [0, 16], sizes = [8, 16], strides = [1, 1]} : vector<8x32xf32> to vector<8x16xf32>
    %c0_1 = arith.constant 0 : index
    %c0_2 = arith.constant 0 : index
    %9 = vector.load %arg1[%c0_1, %c0_2] : memref<16x1024xbf16, #tpu.memory_space<vmem>>, vector<16x1024xbf16>
    %10 = arith.truncf %8 : vector<8x16xf32> to vector<8x16xbf16>
    %cst = arith.constant dense<0.000000e+00> : vector<8x1024xf32>
    %11 = tpu.matmul %10, %9, %cst {dimension_numbers = #tpu.dot_dimension_numbers<[1], [0], [0], [1], [0, 0, 1, 1], [], []>} : vector<8x16xbf16>, vector<16x1024xbf16>, vector<8x1024xf32> -> vector<8x1024xf32>
    %c0_3 = arith.constant 0 : index
    %c0_4 = arith.constant 0 : index
    %12 = vector.load %arg2[%c0_3, %c0_4] : memref<1x1024xf32, #tpu.memory_space<vmem>>, vector<1x1024xf32>
    %13 = vector.broadcast %12 : vector<1x1024xf32> to vector<8x1024xf32>
    %14 = arith.addf %11, %13 : vector<8x1024xf32>
    %15 = arith.negf %14 : vector<8x1024xf32>
    %16 = math.exp %15 : vector<8x1024xf32>
    %cst_5 = arith.constant 1.000000e+00 : f32
    %17 = vector.broadcast %cst_5 : f32 to vector<8x1024xf32>
    %18 = arith.addf %17, %16 : vector<8x1024xf32>
    %19 = arith.divf %17, %18 : vector<8x1024xf32>
    %20 = arith.mulf %14, %19 : vector<8x1024xf32>
    %21 = vector.extract_strided_slice %20 {offsets = [0, 0], sizes = [8, 128], strides = [1, 1]} : vector<8x1024xf32> to vector<8x128xf32>
    %22 = vector.extract_strided_slice %20 {offsets = [0, 128], sizes = [8, 128], strides = [1, 1]} : vector<8x1024xf32> to vector<8x128xf32>
    %23 = vector.extract_strided_slice %20 {offsets = [0, 256], sizes = [8, 128], strides = [1, 1]} : vector<8x1024xf32> to vector<8x128xf32>
    %24 = vector.extract_strided_slice %20 {offsets = [0, 384], sizes = [8, 128], strides = [1, 1]} : vector<8x1024xf32> to vector<8x128xf32>
    %25 = vector.extract_strided_slice %20 {offsets = [0, 512], sizes = [8, 128], strides = [1, 1]} : vector<8x1024xf32> to vector<8x128xf32>
    %26 = vector.extract_strided_slice %20 {offsets = [0, 640], sizes = [8, 128], strides = [1, 1]} : vector<8x1024xf32> to vector<8x128xf32>
    %27 = vector.extract_strided_slice %20 {offsets = [0, 768], sizes = [8, 128], strides = [1, 1]} : vector<8x1024xf32> to vector<8x128xf32>
    %28 = vector.extract_strided_slice %20 {offsets = [0, 896], sizes = [8, 128], strides = [1, 1]} : vector<8x1024xf32> to vector<8x128xf32>
    %29 = tpu.concatenate %21, %22, %23, %24, %25, %26, %27, %28 in 0 : vector<8x128xf32>, vector<8x128xf32>, vector<8x128xf32>, vector<8x128xf32>, vector<8x128xf32>, vector<8x128xf32>, vector<8x128xf32>, vector<8x128xf32> -> vector<64x128xf32>
    %30 = vector.extract_strided_slice %29 {offsets = [56, 0], sizes = [8, 128], strides = [1, 1]} : vector<64x128xf32> to vector<8x128xf32>
    %31 = vector.extract_strided_slice %29 {offsets = [0, 0], sizes = [56, 128], strides = [1, 1]} : vector<64x128xf32> to vector<56x128xf32>
    %32 = tpu.concatenate %30, %31 in 0 : vector<8x128xf32>, vector<56x128xf32> -> vector<64x128xf32>
    %33 = vector.extract_strided_slice %29 {offsets = [8, 0], sizes = [56, 128], strides = [1, 1]} : vector<64x128xf32> to vector<56x128xf32>
    %34 = vector.extract_strided_slice %29 {offsets = [0, 0], sizes = [8, 128], strides = [1, 1]} : vector<64x128xf32> to vector<8x128xf32>
    %35 = tpu.concatenate %33, %34 in 0 : vector<56x128xf32>, vector<8x128xf32> -> vector<64x128xf32>
    %36 = tpu.concatenate %32, %29, %35 in 1 : vector<64x128xf32>, vector<64x128xf32>, vector<64x128xf32> -> vector<64x384xf32>
    %c0_6 = arith.constant 0 : index
    %c0_7 = arith.constant 0 : index
    %37 = vector.load %arg3[%c0_6, %c0_7] : memref<384x128xbf16, #tpu.memory_space<vmem>>, vector<384x128xbf16>
    %38 = arith.truncf %36 : vector<64x384xf32> to vector<64x384xbf16>
    %cst_8 = arith.constant dense<0.000000e+00> : vector<64x128xf32>
    %39 = tpu.matmul %38, %37, %cst_8 {dimension_numbers = #tpu.dot_dimension_numbers<[1], [0], [0], [1], [0, 0, 1, 1], [], []>} : vector<64x384xbf16>, vector<384x128xbf16>, vector<64x128xf32> -> vector<64x128xf32>
    %c0_9 = arith.constant 0 : index
    %c0_10 = arith.constant 0 : index
    %40 = vector.load %arg4[%c0_9, %c0_10] : memref<1x128xf32, #tpu.memory_space<vmem>>, vector<1x128xf32>
    %41 = vector.broadcast %40 : vector<1x128xf32> to vector<64x128xf32>
    %42 = arith.addf %39, %41 : vector<64x128xf32>
    %43 = arith.negf %42 : vector<64x128xf32>
    %44 = math.exp %43 : vector<64x128xf32>
    %cst_11 = arith.constant 1.000000e+00 : f32
    %45 = vector.broadcast %cst_11 : f32 to vector<64x128xf32>
    %46 = arith.addf %45, %44 : vector<64x128xf32>
    %47 = arith.divf %45, %46 : vector<64x128xf32>
    %48 = arith.mulf %42, %47 : vector<64x128xf32>
    %49 = vector.extract_strided_slice %48 {offsets = [0, 0], sizes = [8, 128], strides = [1, 1]} : vector<64x128xf32> to vector<8x128xf32>
    %50 = vector.extract_strided_slice %48 {offsets = [8, 0], sizes = [8, 128], strides = [1, 1]} : vector<64x128xf32> to vector<8x128xf32>
    %51 = vector.extract_strided_slice %48 {offsets = [16, 0], sizes = [8, 128], strides = [1, 1]} : vector<64x128xf32> to vector<8x128xf32>
    %52 = vector.extract_strided_slice %48 {offsets = [24, 0], sizes = [8, 128], strides = [1, 1]} : vector<64x128xf32> to vector<8x128xf32>
    %53 = vector.extract_strided_slice %48 {offsets = [32, 0], sizes = [8, 128], strides = [1, 1]} : vector<64x128xf32> to vector<8x128xf32>
    %54 = vector.extract_strided_slice %48 {offsets = [40, 0], sizes = [8, 128], strides = [1, 1]} : vector<64x128xf32> to vector<8x128xf32>
    %55 = vector.extract_strided_slice %48 {offsets = [48, 0], sizes = [8, 128], strides = [1, 1]} : vector<64x128xf32> to vector<8x128xf32>
    %56 = vector.extract_strided_slice %48 {offsets = [56, 0], sizes = [8, 128], strides = [1, 1]} : vector<64x128xf32> to vector<8x128xf32>
    %57 = tpu.concatenate %49, %50, %51, %52, %53, %54, %55, %56 in 1 : vector<8x128xf32>, vector<8x128xf32>, vector<8x128xf32>, vector<8x128xf32>, vector<8x128xf32>, vector<8x128xf32>, vector<8x128xf32>, vector<8x128xf32> -> vector<8x1024xf32>
    %c0_i32_12 = arith.constant 0 : i32
    %58 = tpu.memref_slice %arg23[%c0_i32_12] : memref<3x!tpu.dma_semaphore, #tpu.memory_space<semaphore_mem>> -> memref<1x!tpu.dma_semaphore, #tpu.memory_space<semaphore_mem>>
    %59 = tpu.memref_squeeze %58 : memref<1x!tpu.dma_semaphore, #tpu.memory_space<semaphore_mem>> -> memref<!tpu.dma_semaphore, #tpu.memory_space<semaphore_mem>>
    tpu.wait_dma2 semaphore(%59 : memref<!tpu.dma_semaphore, #tpu.memory_space<semaphore_mem>>) src(%arg16 : memref<1024x128xbf16, #tpu.memory_space<any>>) dst(%arg20 : memref<1024x128xbf16, #tpu.memory_space<vmem>>)
    %c0_13 = arith.constant 0 : index
    %c0_14 = arith.constant 0 : index
    %60 = vector.load %arg20[%c0_13, %c0_14] : memref<1024x128xbf16, #tpu.memory_space<vmem>>, vector<1024x128xbf16>
    %61 = arith.truncf %57 : vector<8x1024xf32> to vector<8x1024xbf16>
    %cst_15 = arith.constant dense<0.000000e+00> : vector<8x128xf32>
    %62 = tpu.matmul %61, %60, %cst_15 {dimension_numbers = #tpu.dot_dimension_numbers<[1], [0], [0], [1], [0, 0, 1, 1], [], []>} : vector<8x1024xbf16>, vector<1024x128xbf16>, vector<8x128xf32> -> vector<8x128xf32>
    %c0_16 = arith.constant 0 : index
    %c0_17 = arith.constant 0 : index
    %63 = vector.load %arg5[%c0_16, %c0_17] : memref<1x128xf32, #tpu.memory_space<vmem>>, vector<1x128xf32>
    %64 = vector.broadcast %63 : vector<1x128xf32> to vector<8x128xf32>
    %65 = arith.addf %62, %64 : vector<8x128xf32>
    %c0_18 = arith.constant 0 : index
    %c0_19 = arith.constant 0 : index
    %66 = vector.load %arg6[%c0_18, %c0_19] : memref<16x128xbf16, #tpu.memory_space<vmem>>, vector<16x128xbf16>
    %67 = arith.truncf %7 : vector<8x16xf32> to vector<8x16xbf16>
    %cst_20 = arith.constant dense<0.000000e+00> : vector<8x128xf32>
    %68 = tpu.matmul %67, %66, %cst_20 {dimension_numbers = #tpu.dot_dimension_numbers<[1], [0], [0], [1], [0, 0, 1, 1], [], []>} : vector<8x16xbf16>, vector<16x128xbf16>, vector<8x128xf32> -> vector<8x128xf32>
    %c0_21 = arith.constant 0 : index
    %c0_22 = arith.constant 0 : index
    %69 = vector.load %arg7[%c0_21, %c0_22] : memref<1x128xf32, #tpu.memory_space<vmem>>, vector<1x128xf32>
    %70 = vector.broadcast %69 : vector<1x128xf32> to vector<8x128xf32>
    %71 = arith.addf %68, %70 : vector<8x128xf32>
    %c1_i32_23 = arith.constant 1 : i32
    %72 = tpu.memref_slice %arg23[%c1_i32_23] : memref<3x!tpu.dma_semaphore, #tpu.memory_space<semaphore_mem>> -> memref<1x!tpu.dma_semaphore, #tpu.memory_space<semaphore_mem>>
    %73 = tpu.memref_squeeze %72 : memref<1x!tpu.dma_semaphore, #tpu.memory_space<semaphore_mem>> -> memref<!tpu.dma_semaphore, #tpu.memory_space<semaphore_mem>>
    tpu.wait_dma2 semaphore(%73 : memref<!tpu.dma_semaphore, #tpu.memory_space<semaphore_mem>>) src(%arg17 : memref<128x1536xbf16, #tpu.memory_space<any>>) dst(%arg21 : memref<128x1536xbf16, #tpu.memory_space<vmem>>)
    %c0_24 = arith.constant 0 : index
    %c0_25 = arith.constant 0 : index
    %74 = vector.load %arg21[%c0_24, %c0_25] : memref<128x1536xbf16, #tpu.memory_space<vmem>>, vector<128x1536xbf16>
    %75 = arith.truncf %65 : vector<8x128xf32> to vector<8x128xbf16>
    %cst_26 = arith.constant dense<0.000000e+00> : vector<8x1536xf32>
    %76 = tpu.matmul %75, %74, %cst_26 {dimension_numbers = #tpu.dot_dimension_numbers<[1], [0], [0], [1], [0, 0, 1, 1], [], []>} : vector<8x128xbf16>, vector<128x1536xbf16>, vector<8x1536xf32> -> vector<8x1536xf32>
    %c0_27 = arith.constant 0 : index
    %c0_28 = arith.constant 0 : index
    %77 = vector.load %arg8[%c0_27, %c0_28] : memref<1x1536xf32, #tpu.memory_space<vmem>>, vector<1x1536xf32>
    %78 = vector.broadcast %77 : vector<1x1536xf32> to vector<8x1536xf32>
    %79 = arith.addf %76, %78 : vector<8x1536xf32>
    %80 = arith.negf %79 : vector<8x1536xf32>
    %81 = math.exp %80 : vector<8x1536xf32>
    %cst_29 = arith.constant 1.000000e+00 : f32
    %82 = vector.broadcast %cst_29 : f32 to vector<8x1536xf32>
    %83 = arith.addf %82, %81 : vector<8x1536xf32>
    %84 = arith.divf %82, %83 : vector<8x1536xf32>
    %85 = arith.mulf %79, %84 : vector<8x1536xf32>
    %c2_i32_30 = arith.constant 2 : i32
    %86 = tpu.memref_slice %arg23[%c2_i32_30] : memref<3x!tpu.dma_semaphore, #tpu.memory_space<semaphore_mem>> -> memref<1x!tpu.dma_semaphore, #tpu.memory_space<semaphore_mem>>
    %87 = tpu.memref_squeeze %86 : memref<1x!tpu.dma_semaphore, #tpu.memory_space<semaphore_mem>> -> memref<!tpu.dma_semaphore, #tpu.memory_space<semaphore_mem>>
    tpu.wait_dma2 semaphore(%87 : memref<!tpu.dma_semaphore, #tpu.memory_space<semaphore_mem>>) src(%arg18 : memref<6x128x128xbf16, #tpu.memory_space<any>>) dst(%arg22 : memref<6x128x128xbf16, #tpu.memory_space<vmem>>)
    %88 = vector.extract_strided_slice %85 {offsets = [0, 0], sizes = [8, 128], strides = [1, 1]} : vector<8x1536xf32> to vector<8x128xf32>
    %89 = vector.extract_strided_slice %85 {offsets = [0, 128], sizes = [8, 128], strides = [1, 1]} : vector<8x1536xf32> to vector<8x128xf32>
    %c0_31 = arith.constant 0 : index
    %c0_32 = arith.constant 0 : index
    %c0_33 = arith.constant 0 : index
    %90 = vector.load %arg10[%c0_31, %c0_32, %c0_33] : memref<6x1x128xf32, #tpu.memory_space<vmem>>, vector<1x1x128xf32>
    %91 = vector.shape_cast %90 : vector<1x1x128xf32> to vector<1x128xf32>
    %92 = vector.broadcast %91 : vector<1x128xf32> to vector<8x128xf32>
    %93 = arith.mulf %92, %71 : vector<8x128xf32>
    %c0_34 = arith.constant 0 : index
    %c0_35 = arith.constant 0 : index
    %c0_36 = arith.constant 0 : index
    %94 = vector.load %arg11[%c0_34, %c0_35, %c0_36] : memref<6x1x128xf32, #tpu.memory_space<vmem>>, vector<1x1x128xf32>
    %95 = vector.shape_cast %94 : vector<1x1x128xf32> to vector<1x128xf32>
    %96 = vector.broadcast %95 : vector<1x128xf32> to vector<8x128xf32>
    %97 = arith.addf %93, %96 : vector<8x128xf32>
    %cst_37 = arith.constant 1.000000e+00 : f32
    %98 = vector.broadcast %cst_37 : f32 to vector<8x128xf32>
    %99 = arith.addf %88, %98 : vector<8x128xf32>
    %100 = arith.mulf %97, %99 : vector<8x128xf32>
    %101 = arith.addf %89, %100 : vector<8x128xf32>
    %102 = arith.negf %101 : vector<8x128xf32>
    %103 = math.exp %102 : vector<8x128xf32>
    %cst_38 = arith.constant 1.000000e+00 : f32
    %104 = vector.broadcast %cst_38 : f32 to vector<8x128xf32>
    %105 = arith.addf %104, %103 : vector<8x128xf32>
    %106 = arith.divf %104, %105 : vector<8x128xf32>
    %107 = arith.mulf %101, %106 : vector<8x128xf32>
    %c0_39 = arith.constant 0 : index
    %c0_40 = arith.constant 0 : index
    %c0_41 = arith.constant 0 : index
    %108 = vector.load %arg22[%c0_39, %c0_40, %c0_41] : memref<6x128x128xbf16, #tpu.memory_space<vmem>>, vector<1x128x128xbf16>
    %109 = vector.shape_cast %108 : vector<1x128x128xbf16> to vector<128x128xbf16>
    %110 = arith.truncf %107 : vector<8x128xf32> to vector<8x128xbf16>
    %cst_42 = arith.constant dense<0.000000e+00> : vector<8x128xf32>
    %111 = tpu.matmul %110, %109, %cst_42 {dimension_numbers = #tpu.dot_dimension_numbers<[1], [0], [0], [1], [0, 0, 1, 1], [], []>} : vector<8x128xbf16>, vector<128x128xbf16>, vector<8x128xf32> -> vector<8x128xf32>
    %c0_43 = arith.constant 0 : index
    %c0_44 = arith.constant 0 : index
    %c0_45 = arith.constant 0 : index
    %112 = vector.load %arg9[%c0_43, %c0_44, %c0_45] : memref<6x1x128xf32, #tpu.memory_space<vmem>>, vector<1x1x128xf32>
    %113 = vector.shape_cast %112 : vector<1x1x128xf32> to vector<1x128xf32>
    %114 = vector.broadcast %113 : vector<1x128xf32> to vector<8x128xf32>
    %115 = arith.addf %111, %114 : vector<8x128xf32>
    %c0_46 = arith.constant 0 : index
    %c0_47 = arith.constant 0 : index
    %c0_48 = arith.constant 0 : index
    %116 = vector.load %arg12[%c0_46, %c0_47, %c0_48] : memref<6x1x128xf32, #tpu.memory_space<vmem>>, vector<1x1x128xf32>
    %117 = vector.shape_cast %116 : vector<1x1x128xf32> to vector<1x128xf32>
    %118 = vector.broadcast %117 : vector<1x128xf32> to vector<8x128xf32>
    %119 = arith.mulf %118, %115 : vector<8x128xf32>
    %c0_49 = arith.constant 0 : index
    %c0_50 = arith.constant 0 : index
    %c0_51 = arith.constant 0 : index
    %120 = vector.load %arg13[%c0_49, %c0_50, %c0_51] : memref<6x1x128xf32, #tpu.memory_space<vmem>>, vector<1x1x128xf32>
    %121 = vector.shape_cast %120 : vector<1x1x128xf32> to vector<1x128xf32>
    %122 = vector.broadcast %121 : vector<1x128xf32> to vector<8x128xf32>
    %123 = arith.addf %119, %122 : vector<8x128xf32>
    %124 = arith.addf %123, %71 : vector<8x128xf32>
    %cst_52 = arith.constant 1.000000e+00 : f32
    %125 = vector.broadcast %cst_52 : f32 to vector<8x128xf32>
    %126 = arith.mulf %124, %125 : vector<8x128xf32>
    %127 = vector.extract_strided_slice %85 {offsets = [0, 256], sizes = [8, 128], strides = [1, 1]} : vector<8x1536xf32> to vector<8x128xf32>
    %128 = vector.extract_strided_slice %85 {offsets = [0, 384], sizes = [8, 128], strides = [1, 1]} : vector<8x1536xf32> to vector<8x128xf32>
    %c1 = arith.constant 1 : index
    %c0_53 = arith.constant 0 : index
    %c0_54 = arith.constant 0 : index
    %129 = vector.load %arg10[%c1, %c0_53, %c0_54] : memref<6x1x128xf32, #tpu.memory_space<vmem>>, vector<1x1x128xf32>
    %130 = vector.shape_cast %129 : vector<1x1x128xf32> to vector<1x128xf32>
    %131 = vector.broadcast %130 : vector<1x128xf32> to vector<8x128xf32>
    %132 = arith.mulf %131, %126 : vector<8x128xf32>
    %c1_55 = arith.constant 1 : index
    %c0_56 = arith.constant 0 : index
    %c0_57 = arith.constant 0 : index
    %133 = vector.load %arg11[%c1_55, %c0_56, %c0_57] : memref<6x1x128xf32, #tpu.memory_space<vmem>>, vector<1x1x128xf32>
    %134 = vector.shape_cast %133 : vector<1x1x128xf32> to vector<1x128xf32>
    %135 = vector.broadcast %134 : vector<1x128xf32> to vector<8x128xf32>
    %136 = arith.addf %132, %135 : vector<8x128xf32>
    %cst_58 = arith.constant 1.000000e+00 : f32
    %137 = vector.broadcast %cst_58 : f32 to vector<8x128xf32>
    %138 = arith.addf %127, %137 : vector<8x128xf32>
    %139 = arith.mulf %136, %138 : vector<8x128xf32>
    %140 = arith.addf %128, %139 : vector<8x128xf32>
    %141 = arith.negf %140 : vector<8x128xf32>
    %142 = math.exp %141 : vector<8x128xf32>
    %cst_59 = arith.constant 1.000000e+00 : f32
    %143 = vector.broadcast %cst_59 : f32 to vector<8x128xf32>
    %144 = arith.addf %143, %142 : vector<8x128xf32>
    %145 = arith.divf %143, %144 : vector<8x128xf32>
    %146 = arith.mulf %140, %145 : vector<8x128xf32>
    %c1_60 = arith.constant 1 : index
    %c0_61 = arith.constant 0 : index
    %c0_62 = arith.constant 0 : index
    %147 = vector.load %arg22[%c1_60, %c0_61, %c0_62] : memref<6x128x128xbf16, #tpu.memory_space<vmem>>, vector<1x128x128xbf16>
    %148 = vector.shape_cast %147 : vector<1x128x128xbf16> to vector<128x128xbf16>
    %149 = arith.truncf %146 : vector<8x128xf32> to vector<8x128xbf16>
    %cst_63 = arith.constant dense<0.000000e+00> : vector<8x128xf32>
    %150 = tpu.matmul %149, %148, %cst_63 {dimension_numbers = #tpu.dot_dimension_numbers<[1], [0], [0], [1], [0, 0, 1, 1], [], []>} : vector<8x128xbf16>, vector<128x128xbf16>, vector<8x128xf32> -> vector<8x128xf32>
    %c1_64 = arith.constant 1 : index
    %c0_65 = arith.constant 0 : index
    %c0_66 = arith.constant 0 : index
    %151 = vector.load %arg9[%c1_64, %c0_65, %c0_66] : memref<6x1x128xf32, #tpu.memory_space<vmem>>, vector<1x1x128xf32>
    %152 = vector.shape_cast %151 : vector<1x1x128xf32> to vector<1x128xf32>
    %153 = vector.broadcast %152 : vector<1x128xf32> to vector<8x128xf32>
    %154 = arith.addf %150, %153 : vector<8x128xf32>
    %c1_67 = arith.constant 1 : index
    %c0_68 = arith.constant 0 : index
    %c0_69 = arith.constant 0 : index
    %155 = vector.load %arg12[%c1_67, %c0_68, %c0_69] : memref<6x1x128xf32, #tpu.memory_space<vmem>>, vector<1x1x128xf32>
    %156 = vector.shape_cast %155 : vector<1x1x128xf32> to vector<1x128xf32>
    %157 = vector.broadcast %156 : vector<1x128xf32> to vector<8x128xf32>
    %158 = arith.mulf %157, %154 : vector<8x128xf32>
    %c1_70 = arith.constant 1 : index
    %c0_71 = arith.constant 0 : index
    %c0_72 = arith.constant 0 : index
    %159 = vector.load %arg13[%c1_70, %c0_71, %c0_72] : memref<6x1x128xf32, #tpu.memory_space<vmem>>, vector<1x1x128xf32>
    %160 = vector.shape_cast %159 : vector<1x1x128xf32> to vector<1x128xf32>
    %161 = vector.broadcast %160 : vector<1x128xf32> to vector<8x128xf32>
    %162 = arith.addf %158, %161 : vector<8x128xf32>
    %163 = arith.addf %162, %126 : vector<8x128xf32>
    %cst_73 = arith.constant 1.000000e+00 : f32
    %164 = vector.broadcast %cst_73 : f32 to vector<8x128xf32>
    %165 = arith.mulf %163, %164 : vector<8x128xf32>
    %166 = vector.extract_strided_slice %85 {offsets = [0, 512], sizes = [8, 128], strides = [1, 1]} : vector<8x1536xf32> to vector<8x128xf32>
    %167 = vector.extract_strided_slice %85 {offsets = [0, 640], sizes = [8, 128], strides = [1, 1]} : vector<8x1536xf32> to vector<8x128xf32>
    %c2 = arith.constant 2 : index
    %c0_74 = arith.constant 0 : index
    %c0_75 = arith.constant 0 : index
    %168 = vector.load %arg10[%c2, %c0_74, %c0_75] : memref<6x1x128xf32, #tpu.memory_space<vmem>>, vector<1x1x128xf32>
    %169 = vector.shape_cast %168 : vector<1x1x128xf32> to vector<1x128xf32>
    %170 = vector.broadcast %169 : vector<1x128xf32> to vector<8x128xf32>
    %171 = arith.mulf %170, %165 : vector<8x128xf32>
    %c2_76 = arith.constant 2 : index
    %c0_77 = arith.constant 0 : index
    %c0_78 = arith.constant 0 : index
    %172 = vector.load %arg11[%c2_76, %c0_77, %c0_78] : memref<6x1x128xf32, #tpu.memory_space<vmem>>, vector<1x1x128xf32>
    %173 = vector.shape_cast %172 : vector<1x1x128xf32> to vector<1x128xf32>
    %174 = vector.broadcast %173 : vector<1x128xf32> to vector<8x128xf32>
    %175 = arith.addf %171, %174 : vector<8x128xf32>
    %cst_79 = arith.constant 1.000000e+00 : f32
    %176 = vector.broadcast %cst_79 : f32 to vector<8x128xf32>
    %177 = arith.addf %166, %176 : vector<8x128xf32>
    %178 = arith.mulf %175, %177 : vector<8x128xf32>
    %179 = arith.addf %167, %178 : vector<8x128xf32>
    %180 = arith.negf %179 : vector<8x128xf32>
    %181 = math.exp %180 : vector<8x128xf32>
    %cst_80 = arith.constant 1.000000e+00 : f32
    %182 = vector.broadcast %cst_80 : f32 to vector<8x128xf32>
    %183 = arith.addf %182, %181 : vector<8x128xf32>
    %184 = arith.divf %182, %183 : vector<8x128xf32>
    %185 = arith.mulf %179, %184 : vector<8x128xf32>
    %c2_81 = arith.constant 2 : index
    %c0_82 = arith.constant 0 : index
    %c0_83 = arith.constant 0 : index
    %186 = vector.load %arg22[%c2_81, %c0_82, %c0_83] : memref<6x128x128xbf16, #tpu.memory_space<vmem>>, vector<1x128x128xbf16>
    %187 = vector.shape_cast %186 : vector<1x128x128xbf16> to vector<128x128xbf16>
    %188 = arith.truncf %185 : vector<8x128xf32> to vector<8x128xbf16>
    %cst_84 = arith.constant dense<0.000000e+00> : vector<8x128xf32>
    %189 = tpu.matmul %188, %187, %cst_84 {dimension_numbers = #tpu.dot_dimension_numbers<[1], [0], [0], [1], [0, 0, 1, 1], [], []>} : vector<8x128xbf16>, vector<128x128xbf16>, vector<8x128xf32> -> vector<8x128xf32>
    %c2_85 = arith.constant 2 : index
    %c0_86 = arith.constant 0 : index
    %c0_87 = arith.constant 0 : index
    %190 = vector.load %arg9[%c2_85, %c0_86, %c0_87] : memref<6x1x128xf32, #tpu.memory_space<vmem>>, vector<1x1x128xf32>
    %191 = vector.shape_cast %190 : vector<1x1x128xf32> to vector<1x128xf32>
    %192 = vector.broadcast %191 : vector<1x128xf32> to vector<8x128xf32>
    %193 = arith.addf %189, %192 : vector<8x128xf32>
    %c2_88 = arith.constant 2 : index
    %c0_89 = arith.constant 0 : index
    %c0_90 = arith.constant 0 : index
    %194 = vector.load %arg12[%c2_88, %c0_89, %c0_90] : memref<6x1x128xf32, #tpu.memory_space<vmem>>, vector<1x1x128xf32>
    %195 = vector.shape_cast %194 : vector<1x1x128xf32> to vector<1x128xf32>
    %196 = vector.broadcast %195 : vector<1x128xf32> to vector<8x128xf32>
    %197 = arith.mulf %196, %193 : vector<8x128xf32>
    %c2_91 = arith.constant 2 : index
    %c0_92 = arith.constant 0 : index
    %c0_93 = arith.constant 0 : index
    %198 = vector.load %arg13[%c2_91, %c0_92, %c0_93] : memref<6x1x128xf32, #tpu.memory_space<vmem>>, vector<1x1x128xf32>
    %199 = vector.shape_cast %198 : vector<1x1x128xf32> to vector<1x128xf32>
    %200 = vector.broadcast %199 : vector<1x128xf32> to vector<8x128xf32>
    %201 = arith.addf %197, %200 : vector<8x128xf32>
    %202 = arith.addf %201, %165 : vector<8x128xf32>
    %cst_94 = arith.constant 1.000000e+00 : f32
    %203 = vector.broadcast %cst_94 : f32 to vector<8x128xf32>
    %204 = arith.mulf %202, %203 : vector<8x128xf32>
    %205 = vector.extract_strided_slice %85 {offsets = [0, 768], sizes = [8, 128], strides = [1, 1]} : vector<8x1536xf32> to vector<8x128xf32>
    %206 = vector.extract_strided_slice %85 {offsets = [0, 896], sizes = [8, 128], strides = [1, 1]} : vector<8x1536xf32> to vector<8x128xf32>
    %c3 = arith.constant 3 : index
    %c0_95 = arith.constant 0 : index
    %c0_96 = arith.constant 0 : index
    %207 = vector.load %arg10[%c3, %c0_95, %c0_96] : memref<6x1x128xf32, #tpu.memory_space<vmem>>, vector<1x1x128xf32>
    %208 = vector.shape_cast %207 : vector<1x1x128xf32> to vector<1x128xf32>
    %209 = vector.broadcast %208 : vector<1x128xf32> to vector<8x128xf32>
    %210 = arith.mulf %209, %204 : vector<8x128xf32>
    %c3_97 = arith.constant 3 : index
    %c0_98 = arith.constant 0 : index
    %c0_99 = arith.constant 0 : index
    %211 = vector.load %arg11[%c3_97, %c0_98, %c0_99] : memref<6x1x128xf32, #tpu.memory_space<vmem>>, vector<1x1x128xf32>
    %212 = vector.shape_cast %211 : vector<1x1x128xf32> to vector<1x128xf32>
    %213 = vector.broadcast %212 : vector<1x128xf32> to vector<8x128xf32>
    %214 = arith.addf %210, %213 : vector<8x128xf32>
    %cst_100 = arith.constant 1.000000e+00 : f32
    %215 = vector.broadcast %cst_100 : f32 to vector<8x128xf32>
    %216 = arith.addf %205, %215 : vector<8x128xf32>
    %217 = arith.mulf %214, %216 : vector<8x128xf32>
    %218 = arith.addf %206, %217 : vector<8x128xf32>
    %219 = arith.negf %218 : vector<8x128xf32>
    %220 = math.exp %219 : vector<8x128xf32>
    %cst_101 = arith.constant 1.000000e+00 : f32
    %221 = vector.broadcast %cst_101 : f32 to vector<8x128xf32>
    %222 = arith.addf %221, %220 : vector<8x128xf32>
    %223 = arith.divf %221, %222 : vector<8x128xf32>
    %224 = arith.mulf %218, %223 : vector<8x128xf32>
    %c3_102 = arith.constant 3 : index
    %c0_103 = arith.constant 0 : index
    %c0_104 = arith.constant 0 : index
    %225 = vector.load %arg22[%c3_102, %c0_103, %c0_104] : memref<6x128x128xbf16, #tpu.memory_space<vmem>>, vector<1x128x128xbf16>
    %226 = vector.shape_cast %225 : vector<1x128x128xbf16> to vector<128x128xbf16>
    %227 = arith.truncf %224 : vector<8x128xf32> to vector<8x128xbf16>
    %cst_105 = arith.constant dense<0.000000e+00> : vector<8x128xf32>
    %228 = tpu.matmul %227, %226, %cst_105 {dimension_numbers = #tpu.dot_dimension_numbers<[1], [0], [0], [1], [0, 0, 1, 1], [], []>} : vector<8x128xbf16>, vector<128x128xbf16>, vector<8x128xf32> -> vector<8x128xf32>
    %c3_106 = arith.constant 3 : index
    %c0_107 = arith.constant 0 : index
    %c0_108 = arith.constant 0 : index
    %229 = vector.load %arg9[%c3_106, %c0_107, %c0_108] : memref<6x1x128xf32, #tpu.memory_space<vmem>>, vector<1x1x128xf32>
    %230 = vector.shape_cast %229 : vector<1x1x128xf32> to vector<1x128xf32>
    %231 = vector.broadcast %230 : vector<1x128xf32> to vector<8x128xf32>
    %232 = arith.addf %228, %231 : vector<8x128xf32>
    %c3_109 = arith.constant 3 : index
    %c0_110 = arith.constant 0 : index
    %c0_111 = arith.constant 0 : index
    %233 = vector.load %arg12[%c3_109, %c0_110, %c0_111] : memref<6x1x128xf32, #tpu.memory_space<vmem>>, vector<1x1x128xf32>
    %234 = vector.shape_cast %233 : vector<1x1x128xf32> to vector<1x128xf32>
    %235 = vector.broadcast %234 : vector<1x128xf32> to vector<8x128xf32>
    %236 = arith.mulf %235, %232 : vector<8x128xf32>
    %c3_112 = arith.constant 3 : index
    %c0_113 = arith.constant 0 : index
    %c0_114 = arith.constant 0 : index
    %237 = vector.load %arg13[%c3_112, %c0_113, %c0_114] : memref<6x1x128xf32, #tpu.memory_space<vmem>>, vector<1x1x128xf32>
    %238 = vector.shape_cast %237 : vector<1x1x128xf32> to vector<1x128xf32>
    %239 = vector.broadcast %238 : vector<1x128xf32> to vector<8x128xf32>
    %240 = arith.addf %236, %239 : vector<8x128xf32>
    %241 = arith.addf %240, %204 : vector<8x128xf32>
    %cst_115 = arith.constant 1.000000e+00 : f32
    %242 = vector.broadcast %cst_115 : f32 to vector<8x128xf32>
    %243 = arith.mulf %241, %242 : vector<8x128xf32>
    %244 = vector.extract_strided_slice %85 {offsets = [0, 1024], sizes = [8, 128], strides = [1, 1]} : vector<8x1536xf32> to vector<8x128xf32>
    %245 = vector.extract_strided_slice %85 {offsets = [0, 1152], sizes = [8, 128], strides = [1, 1]} : vector<8x1536xf32> to vector<8x128xf32>
    %c4 = arith.constant 4 : index
    %c0_116 = arith.constant 0 : index
    %c0_117 = arith.constant 0 : index
    %246 = vector.load %arg10[%c4, %c0_116, %c0_117] : memref<6x1x128xf32, #tpu.memory_space<vmem>>, vector<1x1x128xf32>
    %247 = vector.shape_cast %246 : vector<1x1x128xf32> to vector<1x128xf32>
    %248 = vector.broadcast %247 : vector<1x128xf32> to vector<8x128xf32>
    %249 = arith.mulf %248, %243 : vector<8x128xf32>
    %c4_118 = arith.constant 4 : index
    %c0_119 = arith.constant 0 : index
    %c0_120 = arith.constant 0 : index
    %250 = vector.load %arg11[%c4_118, %c0_119, %c0_120] : memref<6x1x128xf32, #tpu.memory_space<vmem>>, vector<1x1x128xf32>
    %251 = vector.shape_cast %250 : vector<1x1x128xf32> to vector<1x128xf32>
    %252 = vector.broadcast %251 : vector<1x128xf32> to vector<8x128xf32>
    %253 = arith.addf %249, %252 : vector<8x128xf32>
    %cst_121 = arith.constant 1.000000e+00 : f32
    %254 = vector.broadcast %cst_121 : f32 to vector<8x128xf32>
    %255 = arith.addf %244, %254 : vector<8x128xf32>
    %256 = arith.mulf %253, %255 : vector<8x128xf32>
    %257 = arith.addf %245, %256 : vector<8x128xf32>
    %258 = arith.negf %257 : vector<8x128xf32>
    %259 = math.exp %258 : vector<8x128xf32>
    %cst_122 = arith.constant 1.000000e+00 : f32
    %260 = vector.broadcast %cst_122 : f32 to vector<8x128xf32>
    %261 = arith.addf %260, %259 : vector<8x128xf32>
    %262 = arith.divf %260, %261 : vector<8x128xf32>
    %263 = arith.mulf %257, %262 : vector<8x128xf32>
    %c4_123 = arith.constant 4 : index
    %c0_124 = arith.constant 0 : index
    %c0_125 = arith.constant 0 : index
    %264 = vector.load %arg22[%c4_123, %c0_124, %c0_125] : memref<6x128x128xbf16, #tpu.memory_space<vmem>>, vector<1x128x128xbf16>
    %265 = vector.shape_cast %264 : vector<1x128x128xbf16> to vector<128x128xbf16>
    %266 = arith.truncf %263 : vector<8x128xf32> to vector<8x128xbf16>
    %cst_126 = arith.constant dense<0.000000e+00> : vector<8x128xf32>
    %267 = tpu.matmul %266, %265, %cst_126 {dimension_numbers = #tpu.dot_dimension_numbers<[1], [0], [0], [1], [0, 0, 1, 1], [], []>} : vector<8x128xbf16>, vector<128x128xbf16>, vector<8x128xf32> -> vector<8x128xf32>
    %c4_127 = arith.constant 4 : index
    %c0_128 = arith.constant 0 : index
    %c0_129 = arith.constant 0 : index
    %268 = vector.load %arg9[%c4_127, %c0_128, %c0_129] : memref<6x1x128xf32, #tpu.memory_space<vmem>>, vector<1x1x128xf32>
    %269 = vector.shape_cast %268 : vector<1x1x128xf32> to vector<1x128xf32>
    %270 = vector.broadcast %269 : vector<1x128xf32> to vector<8x128xf32>
    %271 = arith.addf %267, %270 : vector<8x128xf32>
    %c4_130 = arith.constant 4 : index
    %c0_131 = arith.constant 0 : index
    %c0_132 = arith.constant 0 : index
    %272 = vector.load %arg12[%c4_130, %c0_131, %c0_132] : memref<6x1x128xf32, #tpu.memory_space<vmem>>, vector<1x1x128xf32>
    %273 = vector.shape_cast %272 : vector<1x1x128xf32> to vector<1x128xf32>
    %274 = vector.broadcast %273 : vector<1x128xf32> to vector<8x128xf32>
    %275 = arith.mulf %274, %271 : vector<8x128xf32>
    %c4_133 = arith.constant 4 : index
    %c0_134 = arith.constant 0 : index
    %c0_135 = arith.constant 0 : index
    %276 = vector.load %arg13[%c4_133, %c0_134, %c0_135] : memref<6x1x128xf32, #tpu.memory_space<vmem>>, vector<1x1x128xf32>
    %277 = vector.shape_cast %276 : vector<1x1x128xf32> to vector<1x128xf32>
    %278 = vector.broadcast %277 : vector<1x128xf32> to vector<8x128xf32>
    %279 = arith.addf %275, %278 : vector<8x128xf32>
    %280 = arith.addf %279, %243 : vector<8x128xf32>
    %cst_136 = arith.constant 1.000000e+00 : f32
    %281 = vector.broadcast %cst_136 : f32 to vector<8x128xf32>
    %282 = arith.mulf %280, %281 : vector<8x128xf32>
    %283 = vector.extract_strided_slice %85 {offsets = [0, 1280], sizes = [8, 128], strides = [1, 1]} : vector<8x1536xf32> to vector<8x128xf32>
    %284 = vector.extract_strided_slice %85 {offsets = [0, 1408], sizes = [8, 128], strides = [1, 1]} : vector<8x1536xf32> to vector<8x128xf32>
    %c5 = arith.constant 5 : index
    %c0_137 = arith.constant 0 : index
    %c0_138 = arith.constant 0 : index
    %285 = vector.load %arg10[%c5, %c0_137, %c0_138] : memref<6x1x128xf32, #tpu.memory_space<vmem>>, vector<1x1x128xf32>
    %286 = vector.shape_cast %285 : vector<1x1x128xf32> to vector<1x128xf32>
    %287 = vector.broadcast %286 : vector<1x128xf32> to vector<8x128xf32>
    %288 = arith.mulf %287, %282 : vector<8x128xf32>
    %c5_139 = arith.constant 5 : index
    %c0_140 = arith.constant 0 : index
    %c0_141 = arith.constant 0 : index
    %289 = vector.load %arg11[%c5_139, %c0_140, %c0_141] : memref<6x1x128xf32, #tpu.memory_space<vmem>>, vector<1x1x128xf32>
    %290 = vector.shape_cast %289 : vector<1x1x128xf32> to vector<1x128xf32>
    %291 = vector.broadcast %290 : vector<1x128xf32> to vector<8x128xf32>
    %292 = arith.addf %288, %291 : vector<8x128xf32>
    %cst_142 = arith.constant 1.000000e+00 : f32
    %293 = vector.broadcast %cst_142 : f32 to vector<8x128xf32>
    %294 = arith.addf %283, %293 : vector<8x128xf32>
    %295 = arith.mulf %292, %294 : vector<8x128xf32>
    %296 = arith.addf %284, %295 : vector<8x128xf32>
    %297 = arith.negf %296 : vector<8x128xf32>
    %298 = math.exp %297 : vector<8x128xf32>
    %cst_143 = arith.constant 1.000000e+00 : f32
    %299 = vector.broadcast %cst_143 : f32 to vector<8x128xf32>
    %300 = arith.addf %299, %298 : vector<8x128xf32>
    %301 = arith.divf %299, %300 : vector<8x128xf32>
    %302 = arith.mulf %296, %301 : vector<8x128xf32>
    %c5_144 = arith.constant 5 : index
    %c0_145 = arith.constant 0 : index
    %c0_146 = arith.constant 0 : index
    %303 = vector.load %arg22[%c5_144, %c0_145, %c0_146] : memref<6x128x128xbf16, #tpu.memory_space<vmem>>, vector<1x128x128xbf16>
    %304 = vector.shape_cast %303 : vector<1x128x128xbf16> to vector<128x128xbf16>
    %305 = arith.truncf %302 : vector<8x128xf32> to vector<8x128xbf16>
    %cst_147 = arith.constant dense<0.000000e+00> : vector<8x128xf32>
    %306 = tpu.matmul %305, %304, %cst_147 {dimension_numbers = #tpu.dot_dimension_numbers<[1], [0], [0], [1], [0, 0, 1, 1], [], []>} : vector<8x128xbf16>, vector<128x128xbf16>, vector<8x128xf32> -> vector<8x128xf32>
    %c5_148 = arith.constant 5 : index
    %c0_149 = arith.constant 0 : index
    %c0_150 = arith.constant 0 : index
    %307 = vector.load %arg9[%c5_148, %c0_149, %c0_150] : memref<6x1x128xf32, #tpu.memory_space<vmem>>, vector<1x1x128xf32>
    %308 = vector.shape_cast %307 : vector<1x1x128xf32> to vector<1x128xf32>
    %309 = vector.broadcast %308 : vector<1x128xf32> to vector<8x128xf32>
    %310 = arith.addf %306, %309 : vector<8x128xf32>
    %c5_151 = arith.constant 5 : index
    %c0_152 = arith.constant 0 : index
    %c0_153 = arith.constant 0 : index
    %311 = vector.load %arg12[%c5_151, %c0_152, %c0_153] : memref<6x1x128xf32, #tpu.memory_space<vmem>>, vector<1x1x128xf32>
    %312 = vector.shape_cast %311 : vector<1x1x128xf32> to vector<1x128xf32>
    %313 = vector.broadcast %312 : vector<1x128xf32> to vector<8x128xf32>
    %314 = arith.mulf %313, %310 : vector<8x128xf32>
    %c5_154 = arith.constant 5 : index
    %c0_155 = arith.constant 0 : index
    %c0_156 = arith.constant 0 : index
    %315 = vector.load %arg13[%c5_154, %c0_155, %c0_156] : memref<6x1x128xf32, #tpu.memory_space<vmem>>, vector<1x1x128xf32>
    %316 = vector.shape_cast %315 : vector<1x1x128xf32> to vector<1x128xf32>
    %317 = vector.broadcast %316 : vector<1x128xf32> to vector<8x128xf32>
    %318 = arith.addf %314, %317 : vector<8x128xf32>
    %319 = arith.addf %318, %282 : vector<8x128xf32>
    %cst_157 = arith.constant 1.000000e+00 : f32
    %320 = vector.broadcast %cst_157 : f32 to vector<8x128xf32>
    %321 = arith.mulf %319, %320 : vector<8x128xf32>
    %322 = arith.negf %321 : vector<8x128xf32>
    %323 = math.exp %322 : vector<8x128xf32>
    %cst_158 = arith.constant 1.000000e+00 : f32
    %324 = vector.broadcast %cst_158 : f32 to vector<8x128xf32>
    %325 = arith.addf %324, %323 : vector<8x128xf32>
    %326 = arith.divf %324, %325 : vector<8x128xf32>
    %327 = arith.mulf %321, %326 : vector<8x128xf32>
    %c0_159 = arith.constant 0 : index
    %c0_160 = arith.constant 0 : index
    %328 = vector.load %arg14[%c0_159, %c0_160] : memref<128x8xbf16, #tpu.memory_space<vmem>>, vector<128x8xbf16>
    %329 = arith.truncf %327 : vector<8x128xf32> to vector<8x128xbf16>
    %cst_161 = arith.constant dense<0.000000e+00> : vector<8x8xf32>
    %330 = tpu.matmul %329, %328, %cst_161 {dimension_numbers = #tpu.dot_dimension_numbers<[1], [0], [0], [1], [0, 0, 1, 1], [], []>} : vector<8x128xbf16>, vector<128x8xbf16>, vector<8x8xf32> -> vector<8x8xf32>
    %c0_162 = arith.constant 0 : index
    %c0_163 = arith.constant 0 : index
    %331 = vector.load %arg15[%c0_162, %c0_163] : memref<1x8xf32, #tpu.memory_space<vmem>>, vector<1x8xf32>
    %332 = vector.broadcast %331 : vector<1x8xf32> to vector<8x8xf32>
    %333 = arith.addf %330, %332 : vector<8x8xf32>
    %c0_164 = arith.constant 0 : index
    %c0_165 = arith.constant 0 : index
    %334 = vector.load %arg19[%c0_164, %c0_165] : memref<8x8xf32, #tpu.memory_space<vmem>>, vector<8x8xf32>
    tpu.vector_store %arg19[%c0_164, %c0_165], %333 {strides = array<i32>} : memref<8x8xf32, #tpu.memory_space<vmem>>, vector<8x8xf32>,
    return
  }
}

</mosaic_0001>

<llo_original>
// kernel: resnet_forward.1
$region0: #{resnet_forward.1}
  #allocation0 [shape = 'u32[]', space=smem, size = 0x4, offset = 0x4, fixed_abs, tag = 'smem constant byte address 0x4 - core index']
  #allocation1 [shape = 'u32[144,128]{1,0:T(1,128)}', space=vmem, size = 0x12000, scoped, tag = 'internal scratch']
  #allocation2 [shape = 'bf16[1024,128]{1,0:T(16,128)(2,1)}', space=vmem, size = 0x40000, scoped, tag = 'scratch operand']
  #allocation3 [shape = 'bf16[128,1536]{1,0:T(16,128)(2,1)}', space=vmem, size = 0x60000, scoped, tag = 'scratch operand']
  #allocation4 [shape = 'bf16[6,128,128]{2,1,0:T(16,128)(2,1)}', space=vmem, size = 0x30000, scoped, tag = 'scratch operand']
  #allocation5 [shape = 's32[3]{0}', space=sflag, size = 0xc, scoped, tag = 'scratch operand']
  #allocation14 [shape = 's32[]', space=sflag, size = 0x4, offset = 0, fixed_abs, tag = 'sflag constant byte address 0x0 - dummy sync flag']
  #allocation15 [shape = 's32[]', space=sflag, size = 0x4, offset = 0, fixed_abs, tag = 'sflag constant byte address 0x0 - dummy sync flag']
  #allocation16 [shape = 'u32[]', space=smem, size = 0x4, offset = 0x44, fixed_abs, tag = 'smem constant byte address 0x44 - assertion arg 0']
  #allocation17 [shape = 'u32[]', space=smem, size = 0x4, offset = 0x48, fixed_abs, tag = 'smem constant byte address 0x48 - assertion arg 1']
  #allocation18 [shape = 's32[]', space=sflag, size = 0x4, offset = 0, fixed_abs, tag = 'sflag constant byte address 0x0 - dummy sync flag']
  #allocation20 [shape = 's32[]', space=sflag, size = 0x4, offset = 0, fixed_abs, tag = 'sflag constant byte address 0x0 - dummy sync flag']
  #allocation21 [shape = 's32[]', space=sflag, size = 0x4, offset = 0, fixed_abs, tag = 'sflag constant byte address 0x0 - dummy sync flag']
  %s0 = inlined_call_operand.vmem [shape: f32[8,32], index: 0, kind: input, shape index: {}]
  %s1 = inlined_call_operand.vmem [shape: bf16[16,1024], index: 1, kind: input, shape index: {}]
  %s2 = inlined_call_operand.vmem [shape: f32[1,1024], index: 2, kind: input, shape index: {}]
  %s3 = inlined_call_operand.hbm [shape: bf16[384,128], index: 3, kind: input, shape index: {}]
  %s4 = inlined_call_operand.hbm [shape: f32[1,128], index: 4, kind: input, shape index: {}]
  %s5 = inlined_call_operand.hbm [shape: f32[1,128], index: 5, kind: input, shape index: {}]
  %s6 = inlined_call_operand.vmem [shape: bf16[16,128], index: 6, kind: input, shape index: {}]
  %s7 = inlined_call_operand.hbm [shape: f32[1,128], index: 7, kind: input, shape index: {}]
  %s8 = inlined_call_operand.vmem [shape: f32[1,1536], index: 8, kind: input, shape index: {}]
  %s9 = inlined_call_operand.vmem [shape: f32[6,1,128], index: 9, kind: input, shape index: {}]
  %s10 = inlined_call_operand.vmem [shape: f32[6,1,128], index: 10, kind: input, shape index: {}]
  %s11 = inlined_call_operand.vmem [shape: f32[6,1,128], index: 11, kind: input, shape index: {}]
  %s12 = inlined_call_operand.vmem [shape: f32[6,1,128], index: 12, kind: input, shape index: {}]
  %s13 = inlined_call_operand.vmem [shape: f32[6,1,128], index: 13, kind: input, shape index: {}]
  %s14 = inlined_call_operand.vmem [shape: bf16[128,8], index: 14, kind: input, shape index: {}]
  %s15 = inlined_call_operand.hbm [shape: f32[1,8], index: 15, kind: input, shape index: {}]
  %s16 = inlined_call_operand.hbm [shape: bf16[1024,128], index: 16, kind: input, shape index: {}]
  %s17 = inlined_call_operand.hbm [shape: bf16[128,1536], index: 17, kind: input, shape index: {}]
  %s18 = inlined_call_operand.hbm [shape: bf16[6,128,128], index: 18, kind: input, shape index: {}]
  %s19 = inlined_call_operand.vmem [shape: f32[8,8], index: 19, kind: output, shape index: {}]
  %s20 = sld [smem:[#allocation0]]
  $region102: #{resnet_forward.1} parent=0
    _
  %s22 = ssub.s32 1, %s20
  %s23 = scalar_select 0, %s22, %s20
  $region1: #{resnet_forward.1} parent=0
    #allocation6 [shape = 'u8[98304]{0}', space=vmem, size = 0x18000, scoped, tag = 'input window, operand 3, single buffered']
    #allocation7 [shape = 's32[1]{0}', space=sflag, size = 0x4, scoped, tag = 'scoped memory for resnet_forward.1']
    #allocation8 [shape = 'u8[512]{0}', space=vmem, size = 0x400, scoped, tag = 'input window, operand 4, single buffered']
    #allocation9 [shape = 's32[1]{0}', space=sflag, size = 0x4, scoped, tag = 'scoped memory for resnet_forward.1']
    #allocation10 [shape = 'u8[512]{0}', space=vmem, size = 0x400, scoped, tag = 'input window, operand 5, single buffered']
    #allocation11 [shape = 'u8[512]{0}', space=vmem, size = 0x400, scoped, tag = 'input window, operand 7, single buffered']
    #allocation12 [shape = 's32[1]{0}', space=sflag, size = 0x4, scoped, tag = 'scoped memory for resnet_forward.1']
    #allocation13 [shape = 'u8[512]{0}', space=vmem, size = 0x400, scoped, tag = 'input window, operand 15, single buffered']
    #allocation19 [shape = 'u32[9]{0}', space=smem, size = 0x24, scoped, tag = 'DMA stride descriptor']
    %24 = vsyncpa [#allocation7], 0
    %25 = vsyncpa [#allocation9], 0
    %26 = vsyncpa [#allocation12], 0
    // Predicated region
    $region2: #{resnet_forward.1} parent=1 // pred_check
      _
    $region3: #{resnet_forward.1} parent=1 // pred_check_branch
      %28 = sbr.rel (0) target = $region5
    $region4: #{resnet_forward.1} parent=1 // pred_region
      _
    $region5: #{resnet_forward.1} parent=1 // pred_fallthru
      _
    // Predicated region
    $region6: #{resnet_forward.1} parent=1 // pred_check
      _
    $region7: #{resnet_forward.1} parent=1 // pred_check_branch
      %30 = sbr.rel (0) target = $region9
    $region8: #{resnet_forward.1} parent=1 // pred_region
      _
    $region9: #{resnet_forward.1} parent=1 // pred_fallthru
      _
    // Predicated region
    $region10: #{resnet_forward.1} parent=1 // pred_check
      _
    $region11: #{resnet_forward.1} parent=1 // pred_check_branch
      %32 = sbr.rel (0) target = $region13
    $region12: #{resnet_forward.1} parent=1 // pred_region
      _
    $region13: #{resnet_forward.1} parent=1 // pred_fallthru
      _
    // Predicated region
    $region14: #{resnet_forward.1} parent=1 // pred_check
      _
    $region15: #{resnet_forward.1} parent=1 // pred_check_branch
      %34 = sbr.rel (0) target = $region17
    $region16: #{resnet_forward.1} parent=1 // pred_region
      %s36 = ssub.s32 3072, 3072
      %37 = vsyncadd [#allocation7], %s36
      %s38 = sshll.u32 [#allocation6], 4
      %s39 = int_to_ptr.vmem [resolvable:$true] %s38
      %44 = dma.hbm_to_vmem [thread:$0]  %s3, 3072, %s39, [#allocation7], 64, 64, 4
    $region17: #{resnet_forward.1} parent=1 // pred_fallthru
      _
    // Predicated region
    $region18: #{resnet_forward.1} parent=1 // pred_check
      _
    $region19: #{resnet_forward.1} parent=1 // pred_check_branch
      %46 = sbr.rel (0) target = $region21
    $region20: #{resnet_forward.1} parent=1 // pred_region
      %s48 = ssub.s32 16, 16
      %49 = vsyncadd [#allocation9], %s48
      %s51 = sshll.u32 [#allocation8], 4
      %s52 = int_to_ptr.vmem [resolvable:$true] %s51
      %54 = dma.hbm_to_vmem [thread:$0]  %s4, 16, %s52, [#allocation9]
    $region21: #{resnet_forward.1} parent=1 // pred_fallthru
      _
    // Predicated region
    $region22: #{resnet_forward.1} parent=1 // pred_check
      _
    $region23: #{resnet_forward.1} parent=1 // pred_check_branch
      %56 = sbr.rel (0) target = $region25
    $region24: #{resnet_forward.1} parent=1 // pred_region
      %s58 = ssub.s32 16, 16
      %59 = vsyncadd [#allocation9], %s58
      %s61 = sshll.u32 [#allocation10], 4
      %s62 = int_to_ptr.vmem [resolvable:$true] %s61
      %64 = dma.hbm_to_vmem [thread:$0]  %s5, 16, %s62, [#allocation9]
    $region25: #{resnet_forward.1} parent=1 // pred_fallthru
      _
    // Predicated region
    $region26: #{resnet_forward.1} parent=1 // pred_check
      _
    $region27: #{resnet_forward.1} parent=1 // pred_check_branch
      %66 = sbr.rel (0) target = $region29
    $region28: #{resnet_forward.1} parent=1 // pred_region
      _
    $region29: #{resnet_forward.1} parent=1 // pred_fallthru
      _
    // Predicated region
    $region30: #{resnet_forward.1} parent=1 // pred_check
      _
    $region31: #{resnet_forward.1} parent=1 // pred_check_branch
      %68 = sbr.rel (0) target = $region33
    $region32: #{resnet_forward.1} parent=1 // pred_region
      %s70 = ssub.s32 16, 16
      %71 = vsyncadd [#allocation12], %s70
      %s73 = sshll.u32 [#allocation11], 4
      %s74 = int_to_ptr.vmem [resolvable:$true] %s73
      %76 = dma.hbm_to_vmem [thread:$0]  %s7, 16, %s74, [#allocation12]
    $region33: #{resnet_forward.1} parent=1 // pred_fallthru
      _
    // Predicated region
    $region34: #{resnet_forward.1} parent=1 // pred_check
      _
    $region35: #{resnet_forward.1} parent=1 // pred_check_branch
      %78 = sbr.rel (0) target = $region37
    $region36: #{resnet_forward.1} parent=1 // pred_region
      _
    $region37: #{resnet_forward.1} parent=1 // pred_fallthru
      _
    // Predicated region
    $region38: #{resnet_forward.1} parent=1 // pred_check
      _
    $region39: #{resnet_forward.1} parent=1 // pred_check_branch
      %80 = sbr.rel (0) target = $region41
    $region40: #{resnet_forward.1} parent=1 // pred_region
      _
    $region41: #{resnet_forward.1} parent=1 // pred_fallthru
      _
    // Predicated region
    $region42: #{resnet_forward.1} parent=1 // pred_check
      _
    $region43: #{resnet_forward.1} parent=1 // pred_check_branch
      %82 = sbr.rel (0) target = $region45
    $region44: #{resnet_forward.1} parent=1 // pred_region
      _
    $region45: #{resnet_forward.1} parent=1 // pred_fallthru
      _
    // Predicated region
    $region46: #{resnet_forward.1} parent=1 // pred_check
      _
    $region47: #{resnet_forward.1} parent=1 // pred_check_branch
      %84 = sbr.rel (0) target = $region49
    $region48: #{resnet_forward.1} parent=1 // pred_region
      _
    $region49: #{resnet_forward.1} parent=1 // pred_fallthru
      _
    // Predicated region
    $region50: #{resnet_forward.1} parent=1 // pred_check
      _
    $region51: #{resnet_forward.1} parent=1 // pred_check_branch
      %86 = sbr.rel (0) target = $region53
    $region52: #{resnet_forward.1} parent=1 // pred_region
      _
    $region53: #{resnet_forward.1} parent=1 // pred_fallthru
      _
    // Predicated region
    $region54: #{resnet_forward.1} parent=1 // pred_check
      _
    $region55: #{resnet_forward.1} parent=1 // pred_check_branch
      %88 = sbr.rel (0) target = $region57
    $region56: #{resnet_forward.1} parent=1 // pred_region
      _
    $region57: #{resnet_forward.1} parent=1 // pred_fallthru
      _
    // Predicated region
    $region58: #{resnet_forward.1} parent=1 // pred_check
      _
    $region59: #{resnet_forward.1} parent=1 // pred_check_branch
      %90 = sbr.rel (0) target = $region61
    $region60: #{resnet_forward.1} parent=1 // pred_region
      _
    $region61: #{resnet_forward.1} parent=1 // pred_fallthru
      _
    // Predicated region
    $region62: #{resnet_forward.1} parent=1 // pred_check
      _
    $region63: #{resnet_forward.1} parent=1 // pred_check_branch
      %92 = sbr.rel (0) target = $region65
    $region64: #{resnet_forward.1} parent=1 // pred_region
      %s94 = ssub.s32 16, 16
      %95 = vsyncadd [#allocation12], %s94
      %s97 = sshll.u32 [#allocation13], 4
      %s98 = int_to_ptr.vmem [resolvable:$true] %s97
      %100 = dma.hbm_to_vmem [thread:$0]  %s15, 16, %s98, [#allocation12]
    $region65: #{resnet_forward.1} parent=1 // pred_fallthru
      _
    // Predicated region
    $region66: #{resnet_forward.1} parent=1 // pred_check
      _
    $region67: #{resnet_forward.1} parent=1 // pred_check_branch
      %102 = sbr.rel (0) target = $region69
    $region68: #{resnet_forward.1} parent=1 // pred_region
      %103 = dma.done [#allocation7], 3072
    $region69: #{resnet_forward.1} parent=1 // pred_fallthru
      _
    // Predicated region
    $region70: #{resnet_forward.1} parent=1 // pred_check
      _
    $region71: #{resnet_forward.1} parent=1 // pred_check_branch
      %105 = sbr.rel (0) target = $region73
    $region72: #{resnet_forward.1} parent=1 // pred_region
      %106 = dma.done [#allocation9], 16
    $region73: #{resnet_forward.1} parent=1 // pred_fallthru
      _
    // Predicated region
    $region74: #{resnet_forward.1} parent=1 // pred_check
      _
    $region75: #{resnet_forward.1} parent=1 // pred_check_branch
      %108 = sbr.rel (0) target = $region77
    $region76: #{resnet_forward.1} parent=1 // pred_region
      %109 = dma.done [#allocation9], 16
    $region77: #{resnet_forward.1} parent=1 // pred_fallthru
      _
    // Predicated region
    $region78: #{resnet_forward.1} parent=1 // pred_check
      _
    $region79: #{resnet_forward.1} parent=1 // pred_check_branch
      %111 = sbr.rel (0) target = $region81
    $region80: #{resnet_forward.1} parent=1 // pred_region
      %112 = dma.done [#allocation12], 16
    $region81: #{resnet_forward.1} parent=1 // pred_fallthru
      _
    // Predicated region
    $region82: #{resnet_forward.1} parent=1 // pred_check
      _
    $region83: #{resnet_forward.1} parent=1 // pred_check_branch
      %114 = sbr.rel (0) target = $region85
    $region84: #{resnet_forward.1} parent=1 // pred_region
      %115 = dma.done [#allocation12], 16
    $region85: #{resnet_forward.1} parent=1 // pred_fallthru
      _
    // Predicated region
    $region86: #{resnet_forward.1} parent=1 // pred_check
      _
    $region87: #{resnet_forward.1} parent=1 // pred_check_branch
      %118 = sbr.rel target = $region89
    $region88: #{resnet_forward.1} parent=1 // pred_region
      %119 = sst [smem:[#allocation16]] [#allocation15]
      %120 = sst [smem:[#allocation17]] [#allocation14]
    $region89: #{resnet_forward.1} parent=1 // pred_fallthru
      _
    %122 = shalt.err (0)
    %s124 = sshll.u32 [#allocation2], 4
    %s125 = int_to_ptr.vmem [resolvable:$true] %s124
    %127 = dma.hbm_to_vmem [thread:$0]  %s16, 8192, %s125, [#allocation5]
    %s128 = scalar_lea.sflag [#allocation5], 1
    %s130 = sshll.u32 1, 14
    %s131 = sxor.u32 4294967295, %s130
    %s133 = sld [smem:[#allocation0]]
    %s134 = sadd.s32 2, %s133
    %s136 = sshll.u32 7, 26
    %s137 = sxor.u32 4294967295, %s136
    %s138 = sand.u32 0, %s137
    %s139 = sshll.u32 %s134, 26
    %s140 = sor.u32 %s138, %s139
    %s141 = sshll.u32 [#allocation3], 4
    %s142 = int_to_ptr.vmem [resolvable:$true] %s141
    %145 = sst [smem:[#allocation19]] 1536
    %s146 = scalar_lea.smem [#allocation19], 1
    %147 = sst [smem:[%s146]] 1536
    %s148 = scalar_lea.smem [#allocation19], 2
    %149 = sst [smem:[%s148]] 12
    %s150 = scalar_lea.smem [#allocation19], 3
    %151 = sst [smem:[%s150]] 64
    %s152 = scalar_lea.smem [#allocation19], 4
    %153 = sst [smem:[%s152]] 128
    %s154 = scalar_lea.smem [#allocation19], 5
    %155 = sst [smem:[%s154]] 2
    %s156 = scalar_lea.smem [#allocation19], 6
    %157 = sst [smem:[%s156]] 768
    %s158 = scalar_lea.smem [#allocation19], 7
    %159 = sst [smem:[%s158]] 64
    %s160 = scalar_lea.smem [#allocation19], 8
    %161 = sst [smem:[%s160]] 4
    %163 = dma.general %s17, 12288, %s142, %s128, [#allocation18], [#allocation19], %s140, 0
    %s164 = scalar_lea.sflag [#allocation5], 2
    // Predicated region
    $region90: #{resnet_forward.1} parent=1 // pred_check
      _
    $region91: #{resnet_forward.1} parent=1 // pred_check_branch
      %166 = sbr.rel target = $region93
    $region92: #{resnet_forward.1} parent=1 // pred_region
      %167 = sst [smem:[#allocation16]] [#allocation21]
      %168 = sst [smem:[#allocation17]] [#allocation20]
    $region93: #{resnet_forward.1} parent=1 // pred_fallthru
      _
    %170 = shalt.err (0)
    %s172 = sshll.u32 [#allocation4], 4
    %s173 = int_to_ptr.vmem [resolvable:$true] %s172
    %175 = dma.hbm_to_vmem [thread:$0]  %s18, 6144, %s173, %s164
    %v176 = vld [vmem:[%s0] sm:$0xff]
    %v177 = vld [vmem:[%s1] sm:$0xff]
    %v178 = vld [vmem:[%s1 + $0x8] sm:$0xff]
    %v179 = vld [vmem:[%s1 + $0x10] sm:$0xff]
    %v180 = vld [vmem:[%s1 + $0x18] sm:$0xff]
    %v181 = vld [vmem:[%s1 + $0x20] sm:$0xff]
    %v182 = vld [vmem:[%s1 + $0x28] sm:$0xff]
    %v183 = vld [vmem:[%s1 + $0x30] sm:$0xff]
    %v184 = vld [vmem:[%s1 + $0x38] sm:$0xff]
    %v185 = vpack.c.bf16 %v176, %v176
    %v186 = vld [vmem:[%s2] sm:$0xff]
    %v188 = vlaneseq
    %v189 = vshrl.u32 %v188, 7
    %v190 = vsub.s32 0, %v189
    %v191 = vrot.slane %v186, %v190
    %v192 = vlaneseq
    %v193 = vshrl.u32 %v192, 7
    %v194 = vsub.s32 1, %v193
    %v195 = vrot.slane %v186, %v194
    %v196 = vlaneseq
    %v197 = vshrl.u32 %v196, 7
    %v198 = vsub.s32 2, %v197
    %v199 = vrot.slane %v186, %v198
    %v200 = vlaneseq
    %v201 = vshrl.u32 %v200, 7
    %v202 = vsub.s32 3, %v201
    %v203 = vrot.slane %v186, %v202
    %v204 = vlaneseq
    %v205 = vshrl.u32 %v204, 7
    %v206 = vsub.s32 4, %v205
    %v207 = vrot.slane %v186, %v206
    %v208 = vlaneseq
    %v209 = vshrl.u32 %v208, 7
    %v210 = vsub.s32 5, %v209
    %v211 = vrot.slane %v186, %v210
    %v212 = vlaneseq
    %v213 = vshrl.u32 %v212, 7
    %v214 = vsub.s32 6, %v213
    %v215 = vrot.slane %v186, %v214
    %v216 = vlaneseq
    %v217 = vshrl.u32 %v216, 7
    %v218 = vsub.s32 7, %v217
    %v219 = vrot.slane %v186, %v218
    %229 = vrot.lane.b32.xlu0 %v185, 112
    %v230 = vpop.permute.xlu0 %229
    %v239 = vunpack.c.l.b16 %v177
    %v240 = vunpack.c.h.b16 %v177
    %v241 = vunpack.c.l.b16 %v178
    %v242 = vunpack.c.h.b16 %v178
    %v243 = vunpack.c.l.b16 %v179
    %v244 = vunpack.c.h.b16 %v179
    %v245 = vunpack.c.l.b16 %v180
    %v246 = vunpack.c.h.b16 %v180
    %v247 = vunpack.c.l.b16 %v181
    %v248 = vunpack.c.h.b16 %v181
    %v249 = vunpack.c.l.b16 %v182
    %v250 = vunpack.c.h.b16 %v182
    %v251 = vunpack.c.l.b16 %v183
    %v252 = vunpack.c.h.b16 %v183
    %v253 = vunpack.c.l.b16 %v184
    %v254 = vunpack.c.h.b16 %v184
    %v255 = vpack.c.b16 %v247, %v239
    %v256 = vpack.c.b16 %v248, %v240
    %v257 = vpack.c.b16 %v249, %v241
    %v258 = vpack.c.b16 %v250, %v242
    %v259 = vpack.c.b16 %v251, %v243
    %v260 = vpack.c.b16 %v252, %v244
    %v261 = vpack.c.b16 %v253, %v245
    %v262 = vpack.c.b16 %v254, %v246
    %vm271 = vcmask 130048
    %v273 = vsel %vm271, %v230, 0
    %275 = vmatprep.subr.bf16.mxu0 %v256
    %276 = vmatpush1.bf16.msra.mxu0 %v255
    %277 = vmatprep.subr.bf16.mxu0 0
    %278 = vmatpush1.bf16.msra.mxu0 0
    %279 = vmatprep.subr.bf16.mxu0 0
    %280 = vmatpush1.bf16.msra.mxu0 0
    %281 = vmatprep.subr.bf16.mxu0 0
    %282 = vmatpush1.bf16.msra.mxu0 0
    %283 = vmatprep.subr.bf16.mxu0 0
    %284 = vmatpush1.bf16.msra.mxu0 0
    %285 = vmatprep.subr.bf16.mxu0 0
    %286 = vmatpush1.bf16.msra.mxu0 0
    %287 = vmatprep.subr.bf16.mxu0 0
    %288 = vmatpush1.bf16.msra.mxu0 0
    %289 = vmatprep.subr.bf16.mxu0 0
    %290 = vmatpush1.bf16.msra.mxu0 0
    %291 = vmatprep.subr.bf16.mxu0 0
    %292 = vmatpush1.bf16.msra.mxu0 0
    %293 = vmatprep.subr.bf16.mxu0 0
    %294 = vmatpush1.bf16.msra.mxu0 0
    %295 = vmatprep.subr.bf16.mxu0 0
    %296 = vmatpush1.bf16.msra.mxu0 0
    %297 = vmatprep.subr.bf16.mxu0 0
    %298 = vmatpush1.bf16.msra.mxu0 0
    %299 = vmatprep.subr.bf16.mxu0 0
    %300 = vmatpush1.bf16.msra.mxu0 0
    %301 = vmatprep.subr.bf16.mxu0 0
    %302 = vmatpush1.bf16.msra.mxu0 0
    %303 = vmatprep.subr.bf16.mxu0 0
    %304 = vmatpush1.bf16.msra.mxu0 0
    %305 = vmatprep.subr.bf16.mxu0 0
    %306 = vmatpush1.bf16.msra.mxu0 0
    %307 = vmatprep.mubr.bf16.mxu0 0
    %308 = vmatmul.mubr.bf16.gmra.mrb[0].mxu0 %v273
    %v309 = vpop.f32.mrb[0].mxu0
    %v310 = vadd.f32 %v191, %v309
    %v311 = vpop.f32.mrb[0].mxu0
    %v312 = vadd.f32 %v195, %v311
    %v313 = vpop.f32.mrb[0].mxu0
    %v314 = vpop.f32.mrb[0].mxu0
    %315 = vdwg.mxu0
    %316 = vmatprep.subr.bf16.mxu0 %v258
    %317 = vmatpush1.bf16.msra.mxu0 %v257
    %318 = vmatprep.subr.bf16.mxu0 0
    %319 = vmatpush1.bf16.msra.mxu0 0
    %320 = vmatprep.subr.bf16.mxu0 0
    %321 = vmatpush1.bf16.msra.mxu0 0
    %322 = vmatprep.subr.bf16.mxu0 0
    %323 = vmatpush1.bf16.msra.mxu0 0
    %324 = vmatprep.subr.bf16.mxu0 0
    %325 = vmatpush1.bf16.msra.mxu0 0
    %326 = vmatprep.subr.bf16.mxu0 0
    %327 = vmatpush1.bf16.msra.mxu0 0
    %328 = vmatprep.subr.bf16.mxu0 0
    %329 = vmatpush1.bf16.msra.mxu0 0
    %330 = vmatprep.subr.bf16.mxu0 0
    %331 = vmatpush1.bf16.msra.mxu0 0
    %332 = vmatprep.subr.bf16.mxu0 0
    %333 = vmatpush1.bf16.msra.mxu0 0
    %334 = vmatprep.subr.bf16.mxu0 0
    %335 = vmatpush1.bf16.msra.mxu0 0
    %336 = vmatprep.subr.bf16.mxu0 0
    %337 = vmatpush1.bf16.msra.mxu0 0
    %338 = vmatprep.subr.bf16.mxu0 0
    %339 = vmatpush1.bf16.msra.mxu0 0
    %340 = vmatprep.subr.bf16.mxu0 0
    %341 = vmatpush1.bf16.msra.mxu0 0
    %342 = vmatprep.subr.bf16.mxu0 0
    %343 = vmatpush1.bf16.msra.mxu0 0
    %344 = vmatprep.subr.bf16.mxu0 0
    %345 = vmatpush1.bf16.msra.mxu0 0
    %346 = vmatprep.subr.bf16.mxu0 0
    %347 = vmatpush1.bf16.msra.mxu0 0
    %348 = vmatprep.mubr.bf16.mxu0 0
    %349 = vmatmul.mubr.bf16.gmra.mrb[0].mxu0 %v273
    %v350 = vpop.f32.mrb[0].mxu0
    %v351 = vadd.f32 %v199, %v350
    %v352 = vpop.f32.mrb[0].mxu0
    %v353 = vadd.f32 %v203, %v352
    %v354 = vpop.f32.mrb[0].mxu0
    %v355 = vpop.f32.mrb[0].mxu0
    %356 = vdwg.mxu0
    %357 = vmatprep.subr.bf16.mxu0 %v260
    %358 = vmatpush1.bf16.msra.mxu0 %v259
    %359 = vmatprep.subr.bf16.mxu0 0
    %360 = vmatpush1.bf16.msra.mxu0 0
    %361 = vmatprep.subr.bf16.mxu0 0
    %362 = vmatpush1.bf16.msra.mxu0 0
    %363 = vmatprep.subr.bf16.mxu0 0
    %364 = vmatpush1.bf16.msra.mxu0 0
    %365 = vmatprep.subr.bf16.mxu0 0
    %366 = vmatpush1.bf16.msra.mxu0 0
    %367 = vmatprep.subr.bf16.mxu0 0
    %368 = vmatpush1.bf16.msra.mxu0 0
    %369 = vmatprep.subr.bf16.mxu0 0
    %370 = vmatpush1.bf16.msra.mxu0 0
    %371 = vmatprep.subr.bf16.mxu0 0
    %372 = vmatpush1.bf16.msra.mxu0 0
    %373 = vmatprep.subr.bf16.mxu0 0
    %374 = vmatpush1.bf16.msra.mxu0 0
    %375 = vmatprep.subr.bf16.mxu0 0
    %376 = vmatpush1.bf16.msra.mxu0 0
    %377 = vmatprep.subr.bf16.mxu0 0
    %378 = vmatpush1.bf16.msra.mxu0 0
    %379 = vmatprep.subr.bf16.mxu0 0
    %380 = vmatpush1.bf16.msra.mxu0 0
    %381 = vmatprep.subr.bf16.mxu0 0
    %382 = vmatpush1.bf16.msra.mxu0 0
    %383 = vmatprep.subr.bf16.mxu0 0
    %384 = vmatpush1.bf16.msra.mxu0 0
    %385 = vmatprep.subr.bf16.mxu0 0
    %386 = vmatpush1.bf16.msra.mxu0 0
    %387 = vmatprep.subr.bf16.mxu0 0
    %388 = vmatpush1.bf16.msra.mxu0 0
    %389 = vmatprep.mubr.bf16.mxu0 0
    %390 = vmatmul.mubr.bf16.gmra.mrb[0].mxu0 %v273
    %v391 = vpop.f32.mrb[0].mxu0
    %v392 = vadd.f32 %v207, %v391
    %v393 = vpop.f32.mrb[0].mxu0
    %v394 = vadd.f32 %v211, %v393
    %v395 = vpop.f32.mrb[0].mxu0
    %v396 = vpop.f32.mrb[0].mxu0
    %397 = vdwg.mxu0
    %398 = vmatprep.subr.bf16.mxu0 %v262
    %399 = vmatpush1.bf16.msra.mxu0 %v261
    %400 = vmatprep.subr.bf16.mxu0 0
    %401 = vmatpush1.bf16.msra.mxu0 0
    %402 = vmatprep.subr.bf16.mxu0 0
    %403 = vmatpush1.bf16.msra.mxu0 0
    %404 = vmatprep.subr.bf16.mxu0 0
    %405 = vmatpush1.bf16.msra.mxu0 0
    %406 = vmatprep.subr.bf16.mxu0 0
    %407 = vmatpush1.bf16.msra.mxu0 0
    %408 = vmatprep.subr.bf16.mxu0 0
    %409 = vmatpush1.bf16.msra.mxu0 0
    %410 = vmatprep.subr.bf16.mxu0 0
    %411 = vmatpush1.bf16.msra.mxu0 0
    %412 = vmatprep.subr.bf16.mxu0 0
    %413 = vmatpush1.bf16.msra.mxu0 0
    %414 = vmatprep.subr.bf16.mxu0 0
    %415 = vmatpush1.bf16.msra.mxu0 0
    %416 = vmatprep.subr.bf16.mxu0 0
    %417 = vmatpush1.bf16.msra.mxu0 0
    %418 = vmatprep.subr.bf16.mxu0 0
    %419 = vmatpush1.bf16.msra.mxu0 0
    %420 = vmatprep.subr.bf16.mxu0 0
    %421 = vmatpush1.bf16.msra.mxu0 0
    %422 = vmatprep.subr.bf16.mxu0 0
    %423 = vmatpush1.bf16.msra.mxu0 0
    %424 = vmatprep.subr.bf16.mxu0 0
    %425 = vmatpush1.bf16.msra.mxu0 0
    %426 = vmatprep.subr.bf16.mxu0 0
    %427 = vmatpush1.bf16.msra.mxu0 0
    %428 = vmatprep.subr.bf16.mxu0 0
    %429 = vmatpush1.bf16.msra.mxu0 0
    %430 = vmatprep.mubr.bf16.mxu0 0
    %431 = vmatmul.mubr.bf16.gmra.mrb[0].mxu0 %v273
    %v432 = vpop.f32.mrb[0].mxu0
    %v433 = vadd.f32 %v215, %v432
    %v434 = vpop.f32.mrb[0].mxu0
    %v435 = vadd.f32 %v219, %v434
    %v436 = vpop.f32.mrb[0].mxu0
    %v437 = vpop.f32.mrb[0].mxu0
    %438 = vdwg.mxu0
    %v439 = vxor.u32 %v310, 2147483648
    %v440 = vxor.u32 %v312, 2147483648
    %v441 = vxor.u32 %v351, 2147483648
    %v442 = vxor.u32 %v353, 2147483648
    %v443 = vxor.u32 %v392, 2147483648
    %v444 = vxor.u32 %v394, 2147483648
    %v445 = vxor.u32 %v433, 2147483648
    %v446 = vxor.u32 %v435, 2147483648
    %v447 = vmul.f32 %v439, 1.442695
    %v448 = vpow.pop %v447
    %v449 = vmul.f32 %v440, 1.442695
    %v450 = vpow.pop %v449
    %v451 = vmul.f32 %v441, 1.442695
    %v452 = vpow.pop %v451
    %v453 = vmul.f32 %v442, 1.442695
    %v454 = vpow.pop %v453
    %v455 = vmul.f32 %v443, 1.442695
    %v456 = vpow.pop %v455
    %v457 = vmul.f32 %v444, 1.442695
    %v458 = vpow.pop %v457
    %v459 = vmul.f32 %v445, 1.442695
    %v460 = vpow.pop %v459
    %v461 = vmul.f32 %v446, 1.442695
    %v462 = vpow.pop %v461
    %v463 = vadd.f32 %v448, 1.0
    %v464 = vadd.f32 %v450, 1.0
    %v465 = vadd.f32 %v452, 1.0
    %v466 = vadd.f32 %v454, 1.0
    %v467 = vadd.f32 %v456, 1.0
    %v468 = vadd.f32 %v458, 1.0
    %v469 = vadd.f32 %v460, 1.0
    %v470 = vadd.f32 %v462, 1.0
    %v471 = vrcp.pop %v463
    %v472 = vmul.f32 1.0, %v471
    %v473 = vrcp.pop %v464
    %v474 = vmul.f32 1.0, %v473
    %v475 = vrcp.pop %v465
    %v476 = vmul.f32 1.0, %v475
    %v477 = vrcp.pop %v466
    %v478 = vmul.f32 1.0, %v477
    %v479 = vrcp.pop %v467
    %v480 = vmul.f32 1.0, %v479
    %v481 = vrcp.pop %v468
    %v482 = vmul.f32 1.0, %v481
    %v483 = vrcp.pop %v469
    %v484 = vmul.f32 1.0, %v483
    %v485 = vrcp.pop %v470
    %v486 = vmul.f32 1.0, %v485
    %v487 = vmul.f32 %v310, %v472
    %v488 = vmul.f32 %v312, %v474
    %v489 = vmul.f32 %v351, %v476
    %v490 = vmul.f32 %v353, %v478
    %v491 = vmul.f32 %v392, %v480
    %v492 = vmul.f32 %v394, %v482
    %v493 = vmul.f32 %v433, %v484
    %v494 = vmul.f32 %v435, %v486
    %v495 = vld [vmem:[#allocation6] sm:$0xf]
    %v496 = vld [vmem:[#allocation6 + $0x4] sm:$0xf]
    %v497 = vld [vmem:[#allocation6 + $0x8] sm:$0xf]
    %v498 = vld [vmem:[#allocation6 + $0xc] sm:$0xf]
    %v499 = vld [vmem:[#allocation6 + $0x10] sm:$0xf]
    %v500 = vld [vmem:[#allocation6 + $0x14] sm:$0xf]
    %v501 = vld [vmem:[#allocation6 + $0x18] sm:$0xf]
    %v502 = vld [vmem:[#allocation6 + $0x1c] sm:$0xf]
    %v503 = vld [vmem:[#allocation6 + $0x20] sm:$0xf]
    %v504 = vld [vmem:[#allocation6 + $0x24] sm:$0xf]
    %v505 = vld [vmem:[#allocation6 + $0x28] sm:$0xf]
    %v506 = vld [vmem:[#allocation6 + $0x2c] sm:$0xf]
    %v507 = vld [vmem:[#allocation6 + $0x30] sm:$0xf]
    %v508 = vld [vmem:[#allocation6 + $0x34] sm:$0xf]
    %v509 = vld [vmem:[#allocation6 + $0x38] sm:$0xf]
    %v510 = vld [vmem:[#allocation6 + $0x3c] sm:$0xf]
    %v511 = vld [vmem:[#allocation6 + $0x40] sm:$0xf]
    %v512 = vld [vmem:[#allocation6 + $0x44] sm:$0xf]
    %v513 = vld [vmem:[#allocation6 + $0x48] sm:$0xf]
    %v514 = vld [vmem:[#allocation6 + $0x4c] sm:$0xf]
    %v515 = vld [vmem:[#allocation6 + $0x50] sm:$0xf]
    %v516 = vld [vmem:[#allocation6 + $0x54] sm:$0xf]
    %v517 = vld [vmem:[#allocation6 + $0x58] sm:$0xf]
    %v518 = vld [vmem:[#allocation6 + $0x5c] sm:$0xf]
    %v519 = vld [vmem:[#allocation6 + $0x60] sm:$0xf]
    %v520 = vld [vmem:[#allocation6 + $0x64] sm:$0xf]
    %v521 = vld [vmem:[#allocation6 + $0x68] sm:$0xf]
    %v522 = vld [vmem:[#allocation6 + $0x6c] sm:$0xf]
    %v523 = vld [vmem:[#allocation6 + $0x70] sm:$0xf]
    %v524 = vld [vmem:[#allocation6 + $0x74] sm:$0xf]
    %v525 = vld [vmem:[#allocation6 + $0x78] sm:$0xf]
    %v526 = vld [vmem:[#allocation6 + $0x7c] sm:$0xf]
    %v527 = vld [vmem:[#allocation6 + $0x80] sm:$0xf]
    %v528 = vld [vmem:[#allocation6 + $0x84] sm:$0xf]
    %v529 = vld [vmem:[#allocation6 + $0x88] sm:$0xf]
    %v530 = vld [vmem:[#allocation6 + $0x8c] sm:$0xf]
    %v531 = vld [vmem:[#allocation6 + $0x90] sm:$0xf]
    %v532 = vld [vmem:[#allocation6 + $0x94] sm:$0xf]
    %v533 = vld [vmem:[#allocation6 + $0x98] sm:$0xf]
    %v534 = vld [vmem:[#allocation6 + $0x9c] sm:$0xf]
    %v535 = vld [vmem:[#allocation6 + $0xa0] sm:$0xf]
    %v536 = vld [vmem:[#allocation6 + $0xa4] sm:$0xf]
    %v537 = vld [vmem:[#allocation6 + $0xa8] sm:$0xf]
    %v538 = vld [vmem:[#allocation6 + $0xac] sm:$0xf]
    %v539 = vld [vmem:[#allocation6 + $0xb0] sm:$0xf]
    %v540 = vld [vmem:[#allocation6 + $0xb4] sm:$0xf]
    %v541 = vld [vmem:[#allocation6 + $0xb8] sm:$0xf]
    %v542 = vld [vmem:[#allocation6 + $0xbc] sm:$0xf]
    %v543 = vpack.c.bf16 %v487, %v494
    %v544 = vpack.c.bf16 %v488, %v487
    %v545 = vpack.c.bf16 %v489, %v488
    %v546 = vpack.c.bf16 %v490, %v489
    %v547 = vpack.c.bf16 %v491, %v490
    %v548 = vpack.c.bf16 %v492, %v491
    %v549 = vpack.c.bf16 %v493, %v492
    %v550 = vpack.c.bf16 %v494, %v493
    %v551 = vld [vmem:[#allocation8] sm:$0x1]
    %v553 = vlaneseq
    %v554 = vshrl.u32 %v553, 7
    %v555 = vsub.s32 0, %v554
    %v556 = vrot.slane %v551, %v555
    %v606 = vunpack.c.l.b16 %v495
    %v607 = vunpack.c.l.b16 %v496
    %v608 = vunpack.c.l.b16 %v497
    %v609 = vunpack.c.l.b16 %v498
    %v610 = vunpack.c.l.b16 %v499
    %v611 = vunpack.c.l.b16 %v500
    %v612 = vunpack.c.l.b16 %v501
    %v613 = vunpack.c.l.b16 %v502
    %v614 = vunpack.c.l.b16 %v503
    %v615 = vunpack.c.l.b16 %v504
    %v616 = vunpack.c.l.b16 %v505
    %v617 = vunpack.c.l.b16 %v506
    %v618 = vunpack.c.l.b16 %v507
    %v619 = vunpack.c.l.b16 %v508
    %v620 = vunpack.c.l.b16 %v509
    %v621 = vunpack.c.l.b16 %v510
    %v622 = vunpack.c.l.b16 %v511
    %v623 = vunpack.c.l.b16 %v512
    %v624 = vunpack.c.l.b16 %v513
    %v625 = vunpack.c.l.b16 %v514
    %v626 = vunpack.c.l.b16 %v515
    %v627 = vunpack.c.l.b16 %v516
    %v628 = vunpack.c.l.b16 %v517
    %v629 = vunpack.c.l.b16 %v518
    %v630 = vunpack.c.l.b16 %v519
    %v631 = vunpack.c.l.b16 %v520
    %v632 = vunpack.c.l.b16 %v521
    %v633 = vunpack.c.l.b16 %v522
    %v634 = vunpack.c.l.b16 %v523
    %v635 = vunpack.c.l.b16 %v524
    %v636 = vunpack.c.l.b16 %v525
    %v637 = vunpack.c.l.b16 %v526
    %v638 = vunpack.c.l.b16 %v527
    %v639 = vunpack.c.l.b16 %v528
    %v640 = vunpack.c.l.b16 %v529
    %v641 = vunpack.c.l.b16 %v530
    %v642 = vunpack.c.l.b16 %v531
    %v643 = vunpack.c.l.b16 %v532
    %v644 = vunpack.c.l.b16 %v533
    %v645 = vunpack.c.l.b16 %v534
    %v646 = vunpack.c.l.b16 %v535
    %v647 = vunpack.c.l.b16 %v536
    %v648 = vunpack.c.l.b16 %v537
    %v649 = vunpack.c.l.b16 %v538
    %v650 = vunpack.c.l.b16 %v539
    %v651 = vunpack.c.l.b16 %v540
    %v652 = vunpack.c.l.b16 %v541
    %v653 = vunpack.c.l.b16 %v542
    %v654 = vpack.c.b16 %v607, %v606
    %v655 = vpack.c.b16 %v609, %v608
    %v656 = vpack.c.b16 %v611, %v610
    %v657 = vpack.c.b16 %v613, %v612
    %v658 = vpack.c.b16 %v615, %v614
    %v659 = vpack.c.b16 %v617, %v616
    %v660 = vpack.c.b16 %v619, %v618
    %v661 = vpack.c.b16 %v621, %v620
    %v662 = vpack.c.b16 %v623, %v622
    %v663 = vpack.c.b16 %v625, %v624
    %v664 = vpack.c.b16 %v627, %v626
    %v665 = vpack.c.b16 %v629, %v628
    %v666 = vpack.c.b16 %v631, %v630
    %v667 = vpack.c.b16 %v633, %v632
    %v668 = vpack.c.b16 %v635, %v634
    %v669 = vpack.c.b16 %v637, %v636
    %v670 = vpack.c.b16 %v639, %v638
    %v671 = vpack.c.b16 %v641, %v640
    %v672 = vpack.c.b16 %v643, %v642
    %v673 = vpack.c.b16 %v645, %v644
    %v674 = vpack.c.b16 %v647, %v646
    %v675 = vpack.c.b16 %v649, %v648
    %v676 = vpack.c.b16 %v651, %v650
    %v677 = vpack.c.b16 %v653, %v652
    %702 = vmatprep.subr.bf16.mxu0 0
    %703 = vmatpush1.bf16.msra.mxu0 %v654
    %704 = vmatprep.subr.bf16.mxu0 0
    %705 = vmatpush1.bf16.msra.mxu0 %v655
    %706 = vmatprep.subr.bf16.mxu0 0
    %707 = vmatpush1.bf16.msra.mxu0 %v656
    %708 = vmatprep.subr.bf16.mxu0 0
    %709 = vmatpush1.bf16.msra.mxu0 %v657
    %710 = vmatprep.subr.bf16.mxu0 0
    %711 = vmatpush1.bf16.msra.mxu0 %v658
    %712 = vmatprep.subr.bf16.mxu0 0
    %713 = vmatpush1.bf16.msra.mxu0 %v659
    %714 = vmatprep.subr.bf16.mxu0 0
    %715 = vmatpush1.bf16.msra.mxu0 %v660
    %716 = vmatprep.subr.bf16.mxu0 0
    %717 = vmatpush1.bf16.msra.mxu0 %v661
    %718 = vmatprep.subr.bf16.mxu0 0
    %719 = vmatpush1.bf16.msra.mxu0 %v662
    %720 = vmatprep.subr.bf16.mxu0 0
    %721 = vmatpush1.bf16.msra.mxu0 %v663
    %722 = vmatprep.subr.bf16.mxu0 0
    %723 = vmatpush1.bf16.msra.mxu0 %v664
    %724 = vmatprep.subr.bf16.mxu0 0
    %725 = vmatpush1.bf16.msra.mxu0 %v665
    %726 = vmatprep.subr.bf16.mxu0 0
    %727 = vmatpush1.bf16.msra.mxu0 %v666
    %728 = vmatprep.subr.bf16.mxu0 0
    %729 = vmatpush1.bf16.msra.mxu0 %v667
    %730 = vmatprep.subr.bf16.mxu0 0
    %731 = vmatpush1.bf16.msra.mxu0 %v668
    %732 = vmatprep.subr.bf16.mxu0 0
    %733 = vmatpush1.bf16.msra.mxu0 %v669
    %734 = vmatprep.mubr.bf16.mxu0 %v544
    %735 = vmatmul.mubr.bf16.gmra.mrb[0].mxu0 %v543
    %v736 = vpop.f32.mrb[0].mxu0
    %v737 = vadd.f32 %v556, %v736
    %v738 = vpop.f32.mrb[0].mxu0
    %v739 = vpop.f32.mrb[0].mxu0
    %v740 = vadd.f32 %v556, %v739
    %v741 = vpop.f32.mrb[0].mxu0
    %742 = vmatprep.mubr.bf16.mxu0 %v546
    %743 = vmatmul.mubr.bf16.gmra.mrb[0].mxu0 %v545
    %v744 = vpop.f32.mrb[0].mxu0
    %v745 = vadd.f32 %v556, %v744
    %v746 = vpop.f32.mrb[0].mxu0
    %v747 = vpop.f32.mrb[0].mxu0
    %v748 = vadd.f32 %v556, %v747
    %v749 = vpop.f32.mrb[0].mxu0
    %750 = vmatprep.mubr.bf16.mxu0 %v548
    %751 = vmatmul.mubr.bf16.gmra.mrb[0].mxu0 %v547
    %v752 = vpop.f32.mrb[0].mxu0
    %v753 = vadd.f32 %v556, %v752
    %v754 = vpop.f32.mrb[0].mxu0
    %v755 = vpop.f32.mrb[0].mxu0
    %v756 = vadd.f32 %v556, %v755
    %v757 = vpop.f32.mrb[0].mxu0
    %758 = vmatprep.mubr.bf16.mxu0 %v550
    %759 = vmatmul.mubr.bf16.gmra.mrb[0].mxu0 %v549
    %v760 = vpop.f32.mrb[0].mxu0
    %v761 = vadd.f32 %v556, %v760
    %v762 = vpop.f32.mrb[0].mxu0
    %v763 = vpop.f32.mrb[0].mxu0
    %v764 = vadd.f32 %v556, %v763
    %v765 = vpop.f32.mrb[0].mxu0
    %766 = vdwg.mxu0
    %767 = vmatprep.subr.bf16.mxu0 0
    %768 = vmatpush1.bf16.msra.mxu0 %v670
    %769 = vmatprep.subr.bf16.mxu0 0
    %770 = vmatpush1.bf16.msra.mxu0 %v671
    %771 = vmatprep.subr.bf16.mxu0 0
    %772 = vmatpush1.bf16.msra.mxu0 %v672
    %773 = vmatprep.subr.bf16.mxu0 0
    %774 = vmatpush1.bf16.msra.mxu0 %v673
    %775 = vmatprep.subr.bf16.mxu0 0
    %776 = vmatpush1.bf16.msra.mxu0 %v674
    %777 = vmatprep.subr.bf16.mxu0 0
    %778 = vmatpush1.bf16.msra.mxu0 %v675
    %779 = vmatprep.subr.bf16.mxu0 0
    %780 = vmatpush1.bf16.msra.mxu0 %v676
    %781 = vmatprep.subr.bf16.mxu0 0
    %782 = vmatpush1.bf16.msra.mxu0 %v677
    %783 = vmatprep.subr.bf16.mxu0 0
    %784 = vmatpush1.bf16.msra.mxu0 0
    %785 = vmatprep.subr.bf16.mxu0 0
    %786 = vmatpush1.bf16.msra.mxu0 0
    %787 = vmatprep.subr.bf16.mxu0 0
    %788 = vmatpush1.bf16.msra.mxu0 0
    %789 = vmatprep.subr.bf16.mxu0 0
    %790 = vmatpush1.bf16.msra.mxu0 0
    %791 = vmatprep.subr.bf16.mxu0 0
    %792 = vmatpush1.bf16.msra.mxu0 0
    %793 = vmatprep.subr.bf16.mxu0 0
    %794 = vmatpush1.bf16.msra.mxu0 0
    %795 = vmatprep.subr.bf16.mxu0 0
    %796 = vmatpush1.bf16.msra.mxu0 0
    %797 = vmatprep.subr.bf16.mxu0 0
    %798 = vmatpush1.bf16.msra.mxu0 0
    %799 = vmatprep.mubr.bf16.mxu0 0
    %800 = vmatmul.mubr.bf16.gmra.mrb[0].mxu0 %v545
    %v801 = vpop.f32.mrb[0].mxu0
    %v802 = vadd.f32 %v737, %v801
    %v803 = vpop.f32.mrb[0].mxu0
    %v804 = vpop.f32.mrb[0].mxu0
    %v805 = vadd.f32 %v740, %v804
    %v806 = vpop.f32.mrb[0].mxu0
    %807 = vmatprep.mubr.bf16.mxu0 0
    %808 = vmatmul.mubr.bf16.gmra.mrb[0].mxu0 %v547
    %v809 = vpop.f32.mrb[0].mxu0
    %v810 = vadd.f32 %v745, %v809
    %v811 = vpop.f32.mrb[0].mxu0
    %v812 = vpop.f32.mrb[0].mxu0
    %v813 = vadd.f32 %v748, %v812
    %v814 = vpop.f32.mrb[0].mxu0
    %815 = vmatprep.mubr.bf16.mxu0 0
    %816 = vmatmul.mubr.bf16.gmra.mrb[0].mxu0 %v549
    %v817 = vpop.f32.mrb[0].mxu0
    %v818 = vadd.f32 %v753, %v817
    %v819 = vpop.f32.mrb[0].mxu0
    %v820 = vpop.f32.mrb[0].mxu0
    %v821 = vadd.f32 %v756, %v820
    %v822 = vpop.f32.mrb[0].mxu0
    %823 = vmatprep.mubr.bf16.mxu0 0
    %824 = vmatmul.mubr.bf16.gmra.mrb[0].mxu0 %v543
    %v825 = vpop.f32.mrb[0].mxu0
    %v826 = vadd.f32 %v761, %v825
    %v827 = vpop.f32.mrb[0].mxu0
    %v828 = vpop.f32.mrb[0].mxu0
    %v829 = vadd.f32 %v764, %v828
    %v830 = vpop.f32.mrb[0].mxu0
    %831 = vdwg.mxu0
    %v832 = vxor.u32 %v802, 2147483648
    %v833 = vxor.u32 %v805, 2147483648
    %v834 = vxor.u32 %v810, 2147483648
    %v835 = vxor.u32 %v813, 2147483648
    %v836 = vxor.u32 %v818, 2147483648
    %v837 = vxor.u32 %v821, 2147483648
    %v838 = vxor.u32 %v826, 2147483648
    %v839 = vxor.u32 %v829, 2147483648
    %v840 = vmul.f32 %v832, 1.442695
    %v841 = vpow.pop %v840
    %v842 = vmul.f32 %v833, 1.442695
    %v843 = vpow.pop %v842
    %v844 = vmul.f32 %v834, 1.442695
    %v845 = vpow.pop %v844
    %v846 = vmul.f32 %v835, 1.442695
    %v847 = vpow.pop %v846
    %v848 = vmul.f32 %v836, 1.442695
    %v849 = vpow.pop %v848
    %v850 = vmul.f32 %v837, 1.442695
    %v851 = vpow.pop %v850
    %v852 = vmul.f32 %v838, 1.442695
    %v853 = vpow.pop %v852
    %v854 = vmul.f32 %v839, 1.442695
    %v855 = vpow.pop %v854
    %v856 = vadd.f32 %v841, 1.0
    %v857 = vadd.f32 %v843, 1.0
    %v858 = vadd.f32 %v845, 1.0
    %v859 = vadd.f32 %v847, 1.0
    %v860 = vadd.f32 %v849, 1.0
    %v861 = vadd.f32 %v851, 1.0
    %v862 = vadd.f32 %v853, 1.0
    %v863 = vadd.f32 %v855, 1.0
    %v864 = vrcp.pop %v856
    %v865 = vmul.f32 1.0, %v864
    %v866 = vrcp.pop %v857
    %v867 = vmul.f32 1.0, %v866
    %v868 = vrcp.pop %v858
    %v869 = vmul.f32 1.0, %v868
    %v870 = vrcp.pop %v859
    %v871 = vmul.f32 1.0, %v870
    %v872 = vrcp.pop %v860
    %v873 = vmul.f32 1.0, %v872
    %v874 = vrcp.pop %v861
    %v875 = vmul.f32 1.0, %v874
    %v876 = vrcp.pop %v862
    %v877 = vmul.f32 1.0, %v876
    %v878 = vrcp.pop %v863
    %v879 = vmul.f32 1.0, %v878
    %v880 = vmul.f32 %v802, %v865
    %v881 = vmul.f32 %v805, %v867
    %v882 = vmul.f32 %v810, %v869
    %v883 = vmul.f32 %v813, %v871
    %v884 = vmul.f32 %v818, %v873
    %v885 = vmul.f32 %v821, %v875
    %v886 = vmul.f32 %v826, %v877
    %v887 = vmul.f32 %v829, %v879
    %s888 = smul.u32 4, 128
    %s889 = smul.u32 %s888, 1
    %s890 = sshll.u32 %s889, 4
    %891 = dma.done [#allocation5], %s890
    %v892 = vld [vmem:[#allocation2] sm:$0xff]
    %v893 = vld [vmem:[#allocation2 + $0x8] sm:$0xff]
    %v894 = vld [vmem:[#allocation2 + $0x10] sm:$0xff]
    %v895 = vld [vmem:[#allocation2 + $0x18] sm:$0xff]
    %v896 = vld [vmem:[#allocation2 + $0x20] sm:$0xff]
    %v897 = vld [vmem:[#allocation2 + $0x28] sm:$0xff]
    %v898 = vld [vmem:[#allocation2 + $0x30] sm:$0xff]
    %v899 = vld [vmem:[#allocation2 + $0x38] sm:$0xff]
    %v900 = vld [vmem:[#allocation2 + $0x40] sm:$0xff]
    %v901 = vld [vmem:[#allocation2 + $0x48] sm:$0xff]
    %v902 = vld [vmem:[#allocation2 + $0x50] sm:$0xff]
    %v903 = vld [vmem:[#allocation2 + $0x58] sm:$0xff]
    %v904 = vld [vmem:[#allocation2 + $0x60] sm:$0xff]
    %v905 = vld [vmem:[#allocation2 + $0x68] sm:$0xff]
    %v906 = vld [vmem:[#allocation2 + $0x70] sm:$0xff]
    %v907 = vld [vmem:[#allocation2 + $0x78] sm:$0xff]
    %v908 = vld [vmem:[#allocation2 + $0x80] sm:$0xff]
    %v909 = vld [vmem:[#allocation2 + $0x88] sm:$0xff]
    %v910 = vld [vmem:[#allocation2 + $0x90] sm:$0xff]
    %v911 = vld [vmem:[#allocation2 + $0x98] sm:$0xff]
    %v912 = vld [vmem:[#allocation2 + $0xa0] sm:$0xff]
    %v913 = vld [vmem:[#allocation2 + $0xa8] sm:$0xff]
    %v914 = vld [vmem:[#allocation2 + $0xb0] sm:$0xff]
    %v915 = vld [vmem:[#allocation2 + $0xb8] sm:$0xff]
    %v916 = vld [vmem:[#allocation2 + $0xc0] sm:$0xff]
    %v917 = vld [vmem:[#allocation2 + $0xc8] sm:$0xff]
    %v918 = vld [vmem:[#allocation2 + $0xd0] sm:$0xff]
    %v919 = vld [vmem:[#allocation2 + $0xd8] sm:$0xff]
    %v920 = vld [vmem:[#allocation2 + $0xe0] sm:$0xff]
    %v921 = vld [vmem:[#allocation2 + $0xe8] sm:$0xff]
    %v922 = vld [vmem:[#allocation2 + $0xf0] sm:$0xff]
    %v923 = vld [vmem:[#allocation2 + $0xf8] sm:$0xff]
    %v924 = vld [vmem:[#allocation2 + $0x100] sm:$0xff]
    %v925 = vld [vmem:[#allocation2 + $0x108] sm:$0xff]
    %v926 = vld [vmem:[#allocation2 + $0x110] sm:$0xff]
    %v927 = vld [vmem:[#allocation2 + $0x118] sm:$0xff]
    %v928 = vld [vmem:[#allocation2 + $0x120] sm:$0xff]
    %v929 = vld [vmem:[#allocation2 + $0x128] sm:$0xff]
    %v930 = vld [vmem:[#allocation2 + $0x130] sm:$0xff]
    %v931 = vld [vmem:[#allocation2 + $0x138] sm:$0xff]
    %v932 = vld [vmem:[#allocation2 + $0x140] sm:$0xff]
    %v933 = vld [vmem:[#allocation2 + $0x148] sm:$0xff]
    %v934 = vld [vmem:[#allocation2 + $0x150] sm:$0xff]
    %v935 = vld [vmem:[#allocation2 + $0x158] sm:$0xff]
    %v936 = vld [vmem:[#allocation2 + $0x160] sm:$0xff]
    %v937 = vld [vmem:[#allocation2 + $0x168] sm:$0xff]
    %v938 = vld [vmem:[#allocation2 + $0x170] sm:$0xff]
    %v939 = vld [vmem:[#allocation2 + $0x178] sm:$0xff]
    %v940 = vld [vmem:[#allocation2 + $0x180] sm:$0xff]
    %v941 = vld [vmem:[#allocation2 + $0x188] sm:$0xff]
    %v942 = vld [vmem:[#allocation2 + $0x190] sm:$0xff]
    %v943 = vld [vmem:[#allocation2 + $0x198] sm:$0xff]
    %v944 = vld [vmem:[#allocation2 + $0x1a0] sm:$0xff]
    %v945 = vld [vmem:[#allocation2 + $0x1a8] sm:$0xff]
    %v946 = vld [vmem:[#allocation2 + $0x1b0] sm:$0xff]
    %v947 = vld [vmem:[#allocation2 + $0x1b8] sm:$0xff]
    %v948 = vld [vmem:[#allocation2 + $0x1c0] sm:$0xff]
    %v949 = vld [vmem:[#allocation2 + $0x1c8] sm:$0xff]
    %v950 = vld [vmem:[#allocation2 + $0x1d0] sm:$0xff]
    %v951 = vld [vmem:[#allocation2 + $0x1d8] sm:$0xff]
    %v952 = vld [vmem:[#allocation2 + $0x1e0] sm:$0xff]
    %v953 = vld [vmem:[#allocation2 + $0x1e8] sm:$0xff]
    %v954 = vld [vmem:[#allocation2 + $0x1f0] sm:$0xff]
    %v955 = vld [vmem:[#allocation2 + $0x1f8] sm:$0xff]
    %v956 = vpack.c.bf16 %v880, %v880
    %v957 = vpack.c.bf16 %v881, %v881
    %v958 = vpack.c.bf16 %v882, %v882
    %v959 = vpack.c.bf16 %v883, %v883
    %v960 = vpack.c.bf16 %v884, %v884
    %v961 = vpack.c.bf16 %v885, %v885
    %v962 = vpack.c.bf16 %v886, %v886
    %v963 = vpack.c.bf16 %v887, %v887
    %v964 = vld [vmem:[#allocation10] sm:$0x1]
    %v966 = vlaneseq
    %v967 = vshrl.u32 %v966, 7
    %v968 = vsub.s32 0, %v967
    %v969 = vrot.slane %v964, %v968
    %971 = vmatprep.subr.bf16.mxu0 0
    %972 = vmatpush1.bf16.msra.mxu0 %v892
    %973 = vmatprep.subr.bf16.mxu0 0
    %974 = vmatpush1.bf16.msra.mxu0 %v893
    %975 = vmatprep.subr.bf16.mxu0 0
    %976 = vmatpush1.bf16.msra.mxu0 %v894
    %977 = vmatprep.subr.bf16.mxu0 0
    %978 = vmatpush1.bf16.msra.mxu0 %v895
    %979 = vmatprep.subr.bf16.mxu0 0
    %980 = vmatpush1.bf16.msra.mxu0 %v896
    %981 = vmatprep.subr.bf16.mxu0 0
    %982 = vmatpush1.bf16.msra.mxu0 %v897
    %983 = vmatprep.subr.bf16.mxu0 0
    %984 = vmatpush1.bf16.msra.mxu0 %v898
    %985 = vmatprep.subr.bf16.mxu0 0
    %986 = vmatpush1.bf16.msra.mxu0 %v899
    %987 = vmatprep.subr.bf16.mxu0 0
    %988 = vmatpush1.bf16.msra.mxu0 %v900
    %989 = vmatprep.subr.bf16.mxu0 0
    %990 = vmatpush1.bf16.msra.mxu0 %v901
    %991 = vmatprep.subr.bf16.mxu0 0
    %992 = vmatpush1.bf16.msra.mxu0 %v902
    %993 = vmatprep.subr.bf16.mxu0 0
    %994 = vmatpush1.bf16.msra.mxu0 %v903
    %995 = vmatprep.subr.bf16.mxu0 0
    %996 = vmatpush1.bf16.msra.mxu0 %v904
    %997 = vmatprep.subr.bf16.mxu0 0
    %998 = vmatpush1.bf16.msra.mxu0 %v905
    %999 = vmatprep.subr.bf16.mxu0 0
    %1000 = vmatpush1.bf16.msra.mxu0 %v906
    %1001 = vmatprep.subr.bf16.mxu0 0
    %1002 = vmatpush1.bf16.msra.mxu0 %v907
    %1003 = vmatprep.mubr.bf16.mxu0 %v957
    %1004 = vmatmul.mubr.bf16.gmra.mrb[0].mxu0 %v956
    %v1005 = vpop.f32.mrb[0].mxu0
    %v1006 = vadd.f32 %v969, %v1005
    %v1007 = vpop.f32.mrb[0].mxu0
    %v1008 = vpop.f32.mrb[0].mxu0
    %v1009 = vpop.f32.mrb[0].mxu0
    %1010 = vdwg.mxu0
    %1011 = vmatprep.subr.bf16.mxu0 0
    %1012 = vmatpush1.bf16.msra.mxu0 %v908
    %1013 = vmatprep.subr.bf16.mxu0 0
    %1014 = vmatpush1.bf16.msra.mxu0 %v909
    %1015 = vmatprep.subr.bf16.mxu0 0
    %1016 = vmatpush1.bf16.msra.mxu0 %v910
    %1017 = vmatprep.subr.bf16.mxu0 0
    %1018 = vmatpush1.bf16.msra.mxu0 %v911
    %1019 = vmatprep.subr.bf16.mxu0 0
    %1020 = vmatpush1.bf16.msra.mxu0 %v912
    %1021 = vmatprep.subr.bf16.mxu0 0
    %1022 = vmatpush1.bf16.msra.mxu0 %v913
    %1023 = vmatprep.subr.bf16.mxu0 0
    %1024 = vmatpush1.bf16.msra.mxu0 %v914
    %1025 = vmatprep.subr.bf16.mxu0 0
    %1026 = vmatpush1.bf16.msra.mxu0 %v915
    %1027 = vmatprep.subr.bf16.mxu0 0
    %1028 = vmatpush1.bf16.msra.mxu0 %v916
    %1029 = vmatprep.subr.bf16.mxu0 0
    %1030 = vmatpush1.bf16.msra.mxu0 %v917
    %1031 = vmatprep.subr.bf16.mxu0 0
    %1032 = vmatpush1.bf16.msra.mxu0 %v918
    %1033 = vmatprep.subr.bf16.mxu0 0
    %1034 = vmatpush1.bf16.msra.mxu0 %v919
    %1035 = vmatprep.subr.bf16.mxu0 0
    %1036 = vmatpush1.bf16.msra.mxu0 %v920
    %1037 = vmatprep.subr.bf16.mxu0 0
    %1038 = vmatpush1.bf16.msra.mxu0 %v921
    %1039 = vmatprep.subr.bf16.mxu0 0
    %1040 = vmatpush1.bf16.msra.mxu0 %v922
    %1041 = vmatprep.subr.bf16.mxu0 0
    %1042 = vmatpush1.bf16.msra.mxu0 %v923
    %1043 = vmatprep.mubr.bf16.mxu0 %v959
    %1044 = vmatmul.mubr.bf16.gmra.mrb[0].mxu0 %v958
    %v1045 = vpop.f32.mrb[0].mxu0
    %v1046 = vadd.f32 %v1006, %v1045
    %v1047 = vpop.f32.mrb[0].mxu0
    %v1048 = vpop.f32.mrb[0].mxu0
    %v1049 = vpop.f32.mrb[0].mxu0
    %1050 = vdwg.mxu0
    %1051 = vmatprep.subr.bf16.mxu0 0
    %1052 = vmatpush1.bf16.msra.mxu0 %v924
    %1053 = vmatprep.subr.bf16.mxu0 0
    %1054 = vmatpush1.bf16.msra.mxu0 %v925
    %1055 = vmatprep.subr.bf16.mxu0 0
    %1056 = vmatpush1.bf16.msra.mxu0 %v926
    %1057 = vmatprep.subr.bf16.mxu0 0
    %1058 = vmatpush1.bf16.msra.mxu0 %v927
    %1059 = vmatprep.subr.bf16.mxu0 0
    %1060 = vmatpush1.bf16.msra.mxu0 %v928
    %1061 = vmatprep.subr.bf16.mxu0 0
    %1062 = vmatpush1.bf16.msra.mxu0 %v929
    %1063 = vmatprep.subr.bf16.mxu0 0
    %1064 = vmatpush1.bf16.msra.mxu0 %v930
    %1065 = vmatprep.subr.bf16.mxu0 0
    %1066 = vmatpush1.bf16.msra.mxu0 %v931
    %1067 = vmatprep.subr.bf16.mxu0 0
    %1068 = vmatpush1.bf16.msra.mxu0 %v932
    %1069 = vmatprep.subr.bf16.mxu0 0
    %1070 = vmatpush1.bf16.msra.mxu0 %v933
    %1071 = vmatprep.subr.bf16.mxu0 0
    %1072 = vmatpush1.bf16.msra.mxu0 %v934
    %1073 = vmatprep.subr.bf16.mxu0 0
    %1074 = vmatpush1.bf16.msra.mxu0 %v935
    %1075 = vmatprep.subr.bf16.mxu0 0
    %1076 = vmatpush1.bf16.msra.mxu0 %v936
    %1077 = vmatprep.subr.bf16.mxu0 0
    %1078 = vmatpush1.bf16.msra.mxu0 %v937
    %1079 = vmatprep.subr.bf16.mxu0 0
    %1080 = vmatpush1.bf16.msra.mxu0 %v938
    %1081 = vmatprep.subr.bf16.mxu0 0
    %1082 = vmatpush1.bf16.msra.mxu0 %v939
    %1083 = vmatprep.mubr.bf16.mxu0 %v961
    %1084 = vmatmul.mubr.bf16.gmra.mrb[0].mxu0 %v960
    %v1085 = vpop.f32.mrb[0].mxu0
    %v1086 = vadd.f32 %v1046, %v1085
    %v1087 = vpop.f32.mrb[0].mxu0
    %v1088 = vpop.f32.mrb[0].mxu0
    %v1089 = vpop.f32.mrb[0].mxu0
    %1090 = vdwg.mxu0
    %1091 = vmatprep.subr.bf16.mxu0 0
    %1092 = vmatpush1.bf16.msra.mxu0 %v940
    %1093 = vmatprep.subr.bf16.mxu0 0
    %1094 = vmatpush1.bf16.msra.mxu0 %v941
    %1095 = vmatprep.subr.bf16.mxu0 0
    %1096 = vmatpush1.bf16.msra.mxu0 %v942
    %1097 = vmatprep.subr.bf16.mxu0 0
    %1098 = vmatpush1.bf16.msra.mxu0 %v943
    %1099 = vmatprep.subr.bf16.mxu0 0
    %1100 = vmatpush1.bf16.msra.mxu0 %v944
    %1101 = vmatprep.subr.bf16.mxu0 0
    %1102 = vmatpush1.bf16.msra.mxu0 %v945
    %1103 = vmatprep.subr.bf16.mxu0 0
    %1104 = vmatpush1.bf16.msra.mxu0 %v946
    %1105 = vmatprep.subr.bf16.mxu0 0
    %1106 = vmatpush1.bf16.msra.mxu0 %v947
    %1107 = vmatprep.subr.bf16.mxu0 0
    %1108 = vmatpush1.bf16.msra.mxu0 %v948
    %1109 = vmatprep.subr.bf16.mxu0 0
    %1110 = vmatpush1.bf16.msra.mxu0 %v949
    %1111 = vmatprep.subr.bf16.mxu0 0
    %1112 = vmatpush1.bf16.msra.mxu0 %v950
    %1113 = vmatprep.subr.bf16.mxu0 0
    %1114 = vmatpush1.bf16.msra.mxu0 %v951
    %1115 = vmatprep.subr.bf16.mxu0 0
    %1116 = vmatpush1.bf16.msra.mxu0 %v952
    %1117 = vmatprep.subr.bf16.mxu0 0
    %1118 = vmatpush1.bf16.msra.mxu0 %v953
    %1119 = vmatprep.subr.bf16.mxu0 0
    %1120 = vmatpush1.bf16.msra.mxu0 %v954
    %1121 = vmatprep.subr.bf16.mxu0 0
    %1122 = vmatpush1.bf16.msra.mxu0 %v955
    %1123 = vmatprep.mubr.bf16.mxu0 %v963
    %1124 = vmatmul.mubr.bf16.gmra.mrb[0].mxu0 %v962
    %v1125 = vpop.f32.mrb[0].mxu0
    %v1126 = vadd.f32 %v1086, %v1125
    %v1127 = vpop.f32.mrb[0].mxu0
    %v1128 = vpop.f32.mrb[0].mxu0
    %v1129 = vpop.f32.mrb[0].mxu0
    %1130 = vdwg.mxu0
    %v1131 = vld [vmem:[%s6] sm:$0xf]
    %v1132 = vld [vmem:[%s6 + $0x4] sm:$0xf]
    %v1133 = vld [vmem:[#allocation11] sm:$0x1]
    %v1135 = vlaneseq
    %v1136 = vshrl.u32 %v1135, 7
    %v1137 = vsub.s32 0, %v1136
    %v1138 = vrot.slane %v1133, %v1137
    %v1142 = vunpack.c.l.b16 %v1131
    %v1143 = vunpack.c.l.b16 %v1132
    %v1144 = vpack.c.b16 %v1143, %v1142
    %v1147 = vsel %vm271, %v185, 0
    %1149 = vmatprep.subr.bf16.mxu0 0
    %1150 = vmatpush1.bf16.msra.mxu0 %v1144
    %1151 = vmatprep.subr.bf16.mxu0 0
    %1152 = vmatpush1.bf16.msra.mxu0 0
    %1153 = vmatprep.subr.bf16.mxu0 0
    %1154 = vmatpush1.bf16.msra.mxu0 0
    %1155 = vmatprep.subr.bf16.mxu0 0
    %1156 = vmatpush1.bf16.msra.mxu0 0
    %1157 = vmatprep.subr.bf16.mxu0 0
    %1158 = vmatpush1.bf16.msra.mxu0 0
    %1159 = vmatprep.subr.bf16.mxu0 0
    %1160 = vmatpush1.bf16.msra.mxu0 0
    %1161 = vmatprep.subr.bf16.mxu0 0
    %1162 = vmatpush1.bf16.msra.mxu0 0
    %1163 = vmatprep.subr.bf16.mxu0 0
    %1164 = vmatpush1.bf16.msra.mxu0 0
    %1165 = vmatprep.subr.bf16.mxu0 0
    %1166 = vmatpush1.bf16.msra.mxu0 0
    %1167 = vmatprep.subr.bf16.mxu0 0
    %1168 = vmatpush1.bf16.msra.mxu0 0
    %1169 = vmatprep.subr.bf16.mxu0 0
    %1170 = vmatpush1.bf16.msra.mxu0 0
    %1171 = vmatprep.subr.bf16.mxu0 0
    %1172 = vmatpush1.bf16.msra.mxu0 0
    %1173 = vmatprep.subr.bf16.mxu0 0
    %1174 = vmatpush1.bf16.msra.mxu0 0
    %1175 = vmatprep.subr.bf16.mxu0 0
    %1176 = vmatpush1.bf16.msra.mxu0 0
    %1177 = vmatprep.subr.bf16.mxu0 0
    %1178 = vmatpush1.bf16.msra.mxu0 0
    %1179 = vmatprep.subr.bf16.mxu0 0
    %1180 = vmatpush1.bf16.msra.mxu0 0
    %1181 = vmatprep.mubr.bf16.mxu0 0
    %1182 = vmatmul.mubr.bf16.gmra.mrb[0].mxu0 %v1147
    %v1183 = vpop.f32.mrb[0].mxu0
    %v1184 = vadd.f32 %v1138, %v1183
    %v1185 = vpop.f32.mrb[0].mxu0
    %v1186 = vpop.f32.mrb[0].mxu0
    %v1187 = vpop.f32.mrb[0].mxu0
    %1188 = vdwg.mxu0
    %s1189 = smul.u32 4, 16
    %s1190 = smul.u32 %s1189, 12
    %s1191 = sshll.u32 %s1190, 4
    %1192 = dma.done %s128, %s1191
    %v1193 = vld [vmem:[#allocation3] sm:$0xff]
    %v1194 = vld [vmem:[#allocation3 + $0x8] sm:$0xff]
    %v1195 = vld [vmem:[#allocation3 + $0x10] sm:$0xff]
    %v1196 = vld [vmem:[#allocation3 + $0x18] sm:$0xff]
    %v1197 = vld [vmem:[#allocation3 + $0x20] sm:$0xff]
    %v1198 = vld [vmem:[#allocation3 + $0x28] sm:$0xff]
    %v1199 = vld [vmem:[#allocation3 + $0x30] sm:$0xff]
    %v1200 = vld [vmem:[#allocation3 + $0x38] sm:$0xff]
    %v1201 = vld [vmem:[#allocation3 + $0x40] sm:$0xff]
    %v1202 = vld [vmem:[#allocation3 + $0x48] sm:$0xff]
    %v1203 = vld [vmem:[#allocation3 + $0x50] sm:$0xff]
    %v1204 = vld [vmem:[#allocation3 + $0x58] sm:$0xff]
    %v1205 = vld [vmem:[#allocation3 + $0x60] sm:$0xff]
    %v1206 = vld [vmem:[#allocation3 + $0x68] sm:$0xff]
    %v1207 = vld [vmem:[#allocation3 + $0x70] sm:$0xff]
    %v1208 = vld [vmem:[#allocation3 + $0x78] sm:$0xff]
    %v1209 = vld [vmem:[#allocation3 + $0x80] sm:$0xff]
    %v1210 = vld [vmem:[#allocation3 + $0x88] sm:$0xff]
    %v1211 = vld [vmem:[#allocation3 + $0x90] sm:$0xff]
    %v1212 = vld [vmem:[#allocation3 + $0x98] sm:$0xff]
    %v1213 = vld [vmem:[#allocation3 + $0xa0] sm:$0xff]
    %v1214 = vld [vmem:[#allocation3 + $0xa8] sm:$0xff]
    %v1215 = vld [vmem:[#allocation3 + $0xb0] sm:$0xff]
    %v1216 = vld [vmem:[#allocation3 + $0xb8] sm:$0xff]
    %v1217 = vld [vmem:[#allocation3 + $0xc0] sm:$0xff]
    %v1218 = vld [vmem:[#allocation3 + $0xc8] sm:$0xff]
    %v1219 = vld [vmem:[#allocation3 + $0xd0] sm:$0xff]
    %v1220 = vld [vmem:[#allocation3 + $0xd8] sm:$0xff]
    %v1221 = vld [vmem:[#allocation3 + $0xe0] sm:$0xff]
    %v1222 = vld [vmem:[#allocation3 + $0xe8] sm:$0xff]
    %v1223 = vld [vmem:[#allocation3 + $0xf0] sm:$0xff]
    %v1224 = vld [vmem:[#allocation3 + $0xf8] sm:$0xff]
    %v1225 = vld [vmem:[#allocation3 + $0x100] sm:$0xff]
    %v1226 = vld [vmem:[#allocation3 + $0x108] sm:$0xff]
    %v1227 = vld [vmem:[#allocation3 + $0x110] sm:$0xff]
    %v1228 = vld [vmem:[#allocation3 + $0x118] sm:$0xff]
    %v1229 = vld [vmem:[#allocation3 + $0x120] sm:$0xff]
    %v1230 = vld [vmem:[#allocation3 + $0x128] sm:$0xff]
    %v1231 = vld [vmem:[#allocation3 + $0x130] sm:$0xff]
    %v1232 = vld [vmem:[#allocation3 + $0x138] sm:$0xff]
    %v1233 = vld [vmem:[#allocation3 + $0x140] sm:$0xff]
    %v1234 = vld [vmem:[#allocation3 + $0x148] sm:$0xff]
    %v1235 = vld [vmem:[#allocation3 + $0x150] sm:$0xff]
    %v1236 = vld [vmem:[#allocation3 + $0x158] sm:$0xff]
    %v1237 = vld [vmem:[#allocation3 + $0x160] sm:$0xff]
    %v1238 = vld [vmem:[#allocation3 + $0x168] sm:$0xff]
    %v1239 = vld [vmem:[#allocation3 + $0x170] sm:$0xff]
    %v1240 = vld [vmem:[#allocation3 + $0x178] sm:$0xff]
    %v1241 = vld [vmem:[#allocation3 + $0x180] sm:$0xff]
    %v1242 = vld [vmem:[#allocation3 + $0x188] sm:$0xff]
    %v1243 = vld [vmem:[#allocation3 + $0x190] sm:$0xff]
    %v1244 = vld [vmem:[#allocation3 + $0x198] sm:$0xff]
    %v1245 = vld [vmem:[#allocation3 + $0x1a0] sm:$0xff]
    %v1246 = vld [vmem:[#allocation3 + $0x1a8] sm:$0xff]
    %v1247 = vld [vmem:[#allocation3 + $0x1b0] sm:$0xff]
    %v1248 = vld [vmem:[#allocation3 + $0x1b8] sm:$0xff]
    %v1249 = vld [vmem:[#allocation3 + $0x1c0] sm:$0xff]
    %v1250 = vld [vmem:[#allocation3 + $0x1c8] sm:$0xff]
    %v1251 = vld [vmem:[#allocation3 + $0x1d0] sm:$0xff]
    %v1252 = vld [vmem:[#allocation3 + $0x1d8] sm:$0xff]
    %v1253 = vld [vmem:[#allocation3 + $0x1e0] sm:$0xff]
    %v1254 = vld [vmem:[#allocation3 + $0x1e8] sm:$0xff]
    %v1255 = vld [vmem:[#allocation3 + $0x1f0] sm:$0xff]
    %v1256 = vld [vmem:[#allocation3 + $0x1f8] sm:$0xff]
    %v1257 = vld [vmem:[#allocation3 + $0x200] sm:$0xff]
    %v1258 = vld [vmem:[#allocation3 + $0x208] sm:$0xff]
    %v1259 = vld [vmem:[#allocation3 + $0x210] sm:$0xff]
    %v1260 = vld [vmem:[#allocation3 + $0x218] sm:$0xff]
    %v1261 = vld [vmem:[#allocation3 + $0x220] sm:$0xff]
    %v1262 = vld [vmem:[#allocation3 + $0x228] sm:$0xff]
    %v1263 = vld [vmem:[#allocation3 + $0x230] sm:$0xff]
    %v1264 = vld [vmem:[#allocation3 + $0x238] sm:$0xff]
    %v1265 = vld [vmem:[#allocation3 + $0x240] sm:$0xff]
    %v1266 = vld [vmem:[#allocation3 + $0x248] sm:$0xff]
    %v1267 = vld [vmem:[#allocation3 + $0x250] sm:$0xff]
    %v1268 = vld [vmem:[#allocation3 + $0x258] sm:$0xff]
    %v1269 = vld [vmem:[#allocation3 + $0x260] sm:$0xff]
    %v1270 = vld [vmem:[#allocation3 + $0x268] sm:$0xff]
    %v1271 = vld [vmem:[#allocation3 + $0x270] sm:$0xff]
    %v1272 = vld [vmem:[#allocation3 + $0x278] sm:$0xff]
    %v1273 = vld [vmem:[#allocation3 + $0x280] sm:$0xff]
    %v1274 = vld [vmem:[#allocation3 + $0x288] sm:$0xff]
    %v1275 = vld [vmem:[#allocation3 + $0x290] sm:$0xff]
    %v1276 = vld [vmem:[#allocation3 + $0x298] sm:$0xff]
    %v1277 = vld [vmem:[#allocation3 + $0x2a0] sm:$0xff]
    %v1278 = vld [vmem:[#allocation3 + $0x2a8] sm:$0xff]
    %v1279 = vld [vmem:[#allocation3 + $0x2b0] sm:$0xff]
    %v1280 = vld [vmem:[#allocation3 + $0x2b8] sm:$0xff]
    %v1281 = vld [vmem:[#allocation3 + $0x2c0] sm:$0xff]
    %v1282 = vld [vmem:[#allocation3 + $0x2c8] sm:$0xff]
    %v1283 = vld [vmem:[#allocation3 + $0x2d0] sm:$0xff]
    %v1284 = vld [vmem:[#allocation3 + $0x2d8] sm:$0xff]
    %v1285 = vld [vmem:[#allocation3 + $0x2e0] sm:$0xff]
    %v1286 = vld [vmem:[#allocation3 + $0x2e8] sm:$0xff]
    %v1287 = vld [vmem:[#allocation3 + $0x2f0] sm:$0xff]
    %v1288 = vld [vmem:[#allocation3 + $0x2f8] sm:$0xff]
    %v1289 = vpack.c.bf16 %v1126, %v1126
    %v1290 = vld [vmem:[%s8] sm:$0xff]
    %v1291 = vld [vmem:[%s8 + $0x8] sm:$0xf]
    %v1294 = vlaneseq
    %v1295 = vshrl.u32 %v1294, 7
    %v1296 = vsub.s32 0, %v1295
    %v1297 = vrot.slane %v1290, %v1296
    %v1298 = vlaneseq
    %v1299 = vshrl.u32 %v1298, 7
    %v1300 = vsub.s32 1, %v1299
    %v1301 = vrot.slane %v1290, %v1300
    %v1302 = vlaneseq
    %v1303 = vshrl.u32 %v1302, 7
    %v1304 = vsub.s32 2, %v1303
    %v1305 = vrot.slane %v1290, %v1304
    %v1306 = vlaneseq
    %v1307 = vshrl.u32 %v1306, 7
    %v1308 = vsub.s32 3, %v1307
    %v1309 = vrot.slane %v1290, %v1308
    %v1310 = vlaneseq
    %v1311 = vshrl.u32 %v1310, 7
    %v1312 = vsub.s32 4, %v1311
    %v1313 = vrot.slane %v1290, %v1312
    %v1314 = vlaneseq
    %v1315 = vshrl.u32 %v1314, 7
    %v1316 = vsub.s32 5, %v1315
    %v1317 = vrot.slane %v1290, %v1316
    %v1318 = vlaneseq
    %v1319 = vshrl.u32 %v1318, 7
    %v1320 = vsub.s32 6, %v1319
    %v1321 = vrot.slane %v1290, %v1320
    %v1322 = vlaneseq
    %v1323 = vshrl.u32 %v1322, 7
    %v1324 = vsub.s32 7, %v1323
    %v1325 = vrot.slane %v1290, %v1324
    %v1326 = vlaneseq
    %v1327 = vshrl.u32 %v1326, 7
    %v1328 = vsub.s32 0, %v1327
    %v1329 = vrot.slane %v1291, %v1328
    %v1330 = vlaneseq
    %v1331 = vshrl.u32 %v1330, 7
    %v1332 = vsub.s32 1, %v1331
    %v1333 = vrot.slane %v1291, %v1332
    %v1334 = vlaneseq
    %v1335 = vshrl.u32 %v1334, 7
    %v1336 = vsub.s32 2, %v1335
    %v1337 = vrot.slane %v1291, %v1336
    %v1338 = vlaneseq
    %v1339 = vshrl.u32 %v1338, 7
    %v1340 = vsub.s32 3, %v1339
    %v1341 = vrot.slane %v1291, %v1340
    %1354 = vmatprep.subr.bf16.mxu0 %v1194
    %1355 = vmatpush1.bf16.msra.mxu0 %v1193
    %1356 = vmatprep.subr.bf16.mxu0 %v1206
    %1357 = vmatpush1.bf16.msra.mxu0 %v1205
    %1358 = vmatprep.subr.bf16.mxu0 %v1218
    %1359 = vmatpush1.bf16.msra.mxu0 %v1217
    %1360 = vmatprep.subr.bf16.mxu0 %v1230
    %1361 = vmatpush1.bf16.msra.mxu0 %v1229
    %1362 = vmatprep.subr.bf16.mxu0 %v1242
    %1363 = vmatpush1.bf16.msra.mxu0 %v1241
    %1364 = vmatprep.subr.bf16.mxu0 %v1254
    %1365 = vmatpush1.bf16.msra.mxu0 %v1253
    %1366 = vmatprep.subr.bf16.mxu0 %v1266
    %1367 = vmatpush1.bf16.msra.mxu0 %v1265
    %1368 = vmatprep.subr.bf16.mxu0 %v1278
    %1369 = vmatpush1.bf16.msra.mxu0 %v1277
    %1370 = vmatprep.subr.bf16.mxu0 0
    %1371 = vmatpush1.bf16.msra.mxu0 0
    %1372 = vmatprep.subr.bf16.mxu0 0
    %1373 = vmatpush1.bf16.msra.mxu0 0
    %1374 = vmatprep.subr.bf16.mxu0 0
    %1375 = vmatpush1.bf16.msra.mxu0 0
    %1376 = vmatprep.subr.bf16.mxu0 0
    %1377 = vmatpush1.bf16.msra.mxu0 0
    %1378 = vmatprep.subr.bf16.mxu0 0
    %1379 = vmatpush1.bf16.msra.mxu0 0
    %1380 = vmatprep.subr.bf16.mxu0 0
    %1381 = vmatpush1.bf16.msra.mxu0 0
    %1382 = vmatprep.subr.bf16.mxu0 0
    %1383 = vmatpush1.bf16.msra.mxu0 0
    %1384 = vmatprep.subr.bf16.mxu0 0
    %1385 = vmatpush1.bf16.msra.mxu0 0
    %1386 = vmatprep.mubr.bf16.mxu0 0
    %1387 = vmatmul.mubr.bf16.gmra.mrb[0].mxu0 %v1289
    %v1388 = vpop.f32.mrb[0].mxu0
    %v1389 = vadd.f32 %v1297, %v1388
    %v1390 = vpop.f32.mrb[0].mxu0
    %v1391 = vadd.f32 %v1301, %v1390
    %v1392 = vpop.f32.mrb[0].mxu0
    %v1393 = vpop.f32.mrb[0].mxu0
    %1394 = vdwg.mxu0
    %1395 = vmatprep.subr.bf16.mxu0 %v1196
    %1396 = vmatpush1.bf16.msra.mxu0 %v1195
    %1397 = vmatprep.subr.bf16.mxu0 %v1208
    %1398 = vmatpush1.bf16.msra.mxu0 %v1207
    %1399 = vmatprep.subr.bf16.mxu0 %v1220
    %1400 = vmatpush1.bf16.msra.mxu0 %v1219
    %1401 = vmatprep.subr.bf16.mxu0 %v1232
    %1402 = vmatpush1.bf16.msra.mxu0 %v1231
    %1403 = vmatprep.subr.bf16.mxu0 %v1244
    %1404 = vmatpush1.bf16.msra.mxu0 %v1243
    %1405 = vmatprep.subr.bf16.mxu0 %v1256
    %1406 = vmatpush1.bf16.msra.mxu0 %v1255
    %1407 = vmatprep.subr.bf16.mxu0 %v1268
    %1408 = vmatpush1.bf16.msra.mxu0 %v1267
    %1409 = vmatprep.subr.bf16.mxu0 %v1280
    %1410 = vmatpush1.bf16.msra.mxu0 %v1279
    %1411 = vmatprep.subr.bf16.mxu0 0
    %1412 = vmatpush1.bf16.msra.mxu0 0
    %1413 = vmatprep.subr.bf16.mxu0 0
    %1414 = vmatpush1.bf16.msra.mxu0 0
    %1415 = vmatprep.subr.bf16.mxu0 0
    %1416 = vmatpush1.bf16.msra.mxu0 0
    %1417 = vmatprep.subr.bf16.mxu0 0
    %1418 = vmatpush1.bf16.msra.mxu0 0
    %1419 = vmatprep.subr.bf16.mxu0 0
    %1420 = vmatpush1.bf16.msra.mxu0 0
    %1421 = vmatprep.subr.bf16.mxu0 0
    %1422 = vmatpush1.bf16.msra.mxu0 0
    %1423 = vmatprep.subr.bf16.mxu0 0
    %1424 = vmatpush1.bf16.msra.mxu0 0
    %1425 = vmatprep.subr.bf16.mxu0 0
    %1426 = vmatpush1.bf16.msra.mxu0 0
    %1427 = vmatprep.mubr.bf16.mxu0 0
    %1428 = vmatmul.mubr.bf16.gmra.mrb[0].mxu0 %v1289
    %v1429 = vpop.f32.mrb[0].mxu0
    %v1430 = vadd.f32 %v1305, %v1429
    %v1431 = vpop.f32.mrb[0].mxu0
    %v1432 = vadd.f32 %v1309, %v1431
    %v1433 = vpop.f32.mrb[0].mxu0
    %v1434 = vpop.f32.mrb[0].mxu0
    %1435 = vdwg.mxu0
    %1436 = vmatprep.subr.bf16.mxu0 %v1198
    %1437 = vmatpush1.bf16.msra.mxu0 %v1197
    %1438 = vmatprep.subr.bf16.mxu0 %v1210
    %1439 = vmatpush1.bf16.msra.mxu0 %v1209
    %1440 = vmatprep.subr.bf16.mxu0 %v1222
    %1441 = vmatpush1.bf16.msra.mxu0 %v1221
    %1442 = vmatprep.subr.bf16.mxu0 %v1234
    %1443 = vmatpush1.bf16.msra.mxu0 %v1233
    %1444 = vmatprep.subr.bf16.mxu0 %v1246
    %1445 = vmatpush1.bf16.msra.mxu0 %v1245
    %1446 = vmatprep.subr.bf16.mxu0 %v1258
    %1447 = vmatpush1.bf16.msra.mxu0 %v1257
    %1448 = vmatprep.subr.bf16.mxu0 %v1270
    %1449 = vmatpush1.bf16.msra.mxu0 %v1269
    %1450 = vmatprep.subr.bf16.mxu0 %v1282
    %1451 = vmatpush1.bf16.msra.mxu0 %v1281
    %1452 = vmatprep.subr.bf16.mxu0 0
    %1453 = vmatpush1.bf16.msra.mxu0 0
    %1454 = vmatprep.subr.bf16.mxu0 0
    %1455 = vmatpush1.bf16.msra.mxu0 0
    %1456 = vmatprep.subr.bf16.mxu0 0
    %1457 = vmatpush1.bf16.msra.mxu0 0
    %1458 = vmatprep.subr.bf16.mxu0 0
    %1459 = vmatpush1.bf16.msra.mxu0 0
    %1460 = vmatprep.subr.bf16.mxu0 0
    %1461 = vmatpush1.bf16.msra.mxu0 0
    %1462 = vmatprep.subr.bf16.mxu0 0
    %1463 = vmatpush1.bf16.msra.mxu0 0
    %1464 = vmatprep.subr.bf16.mxu0 0
    %1465 = vmatpush1.bf16.msra.mxu0 0
    %1466 = vmatprep.subr.bf16.mxu0 0
    %1467 = vmatpush1.bf16.msra.mxu0 0
    %1468 = vmatprep.mubr.bf16.mxu0 0
    %1469 = vmatmul.mubr.bf16.gmra.mrb[0].mxu0 %v1289
    %v1470 = vpop.f32.mrb[0].mxu0
    %v1471 = vadd.f32 %v1313, %v1470
    %v1472 = vpop.f32.mrb[0].mxu0
    %v1473 = vadd.f32 %v1317, %v1472
    %v1474 = vpop.f32.mrb[0].mxu0
    %v1475 = vpop.f32.mrb[0].mxu0
    %1476 = vdwg.mxu0
    %1477 = vmatprep.subr.bf16.mxu0 %v1200
    %1478 = vmatpush1.bf16.msra.mxu0 %v1199
    %1479 = vmatprep.subr.bf16.mxu0 %v1212
    %1480 = vmatpush1.bf16.msra.mxu0 %v1211
    %1481 = vmatprep.subr.bf16.mxu0 %v1224
    %1482 = vmatpush1.bf16.msra.mxu0 %v1223
    %1483 = vmatprep.subr.bf16.mxu0 %v1236
    %1484 = vmatpush1.bf16.msra.mxu0 %v1235
    %1485 = vmatprep.subr.bf16.mxu0 %v1248
    %1486 = vmatpush1.bf16.msra.mxu0 %v1247
    %1487 = vmatprep.subr.bf16.mxu0 %v1260
    %1488 = vmatpush1.bf16.msra.mxu0 %v1259
    %1489 = vmatprep.subr.bf16.mxu0 %v1272
    %1490 = vmatpush1.bf16.msra.mxu0 %v1271
    %1491 = vmatprep.subr.bf16.mxu0 %v1284
    %1492 = vmatpush1.bf16.msra.mxu0 %v1283
    %1493 = vmatprep.subr.bf16.mxu0 0
    %1494 = vmatpush1.bf16.msra.mxu0 0
    %1495 = vmatprep.subr.bf16.mxu0 0
    %1496 = vmatpush1.bf16.msra.mxu0 0
    %1497 = vmatprep.subr.bf16.mxu0 0
    %1498 = vmatpush1.bf16.msra.mxu0 0
    %1499 = vmatprep.subr.bf16.mxu0 0
    %1500 = vmatpush1.bf16.msra.mxu0 0
    %1501 = vmatprep.subr.bf16.mxu0 0
    %1502 = vmatpush1.bf16.msra.mxu0 0
    %1503 = vmatprep.subr.bf16.mxu0 0
    %1504 = vmatpush1.bf16.msra.mxu0 0
    %1505 = vmatprep.subr.bf16.mxu0 0
    %1506 = vmatpush1.bf16.msra.mxu0 0
    %1507 = vmatprep.subr.bf16.mxu0 0
    %1508 = vmatpush1.bf16.msra.mxu0 0
    %1509 = vmatprep.mubr.bf16.mxu0 0
    %1510 = vmatmul.mubr.bf16.gmra.mrb[0].mxu0 %v1289
    %v1511 = vpop.f32.mrb[0].mxu0
    %v1512 = vadd.f32 %v1321, %v1511
    %v1513 = vpop.f32.mrb[0].mxu0
    %v1514 = vadd.f32 %v1325, %v1513
    %v1515 = vpop.f32.mrb[0].mxu0
    %v1516 = vpop.f32.mrb[0].mxu0
    %1517 = vdwg.mxu0
    %1518 = vmatprep.subr.bf16.mxu0 %v1202
    %1519 = vmatpush1.bf16.msra.mxu0 %v1201
    %1520 = vmatprep.subr.bf16.mxu0 %v1214
    %1521 = vmatpush1.bf16.msra.mxu0 %v1213
    %1522 = vmatprep.subr.bf16.mxu0 %v1226
    %1523 = vmatpush1.bf16.msra.mxu0 %v1225
    %1524 = vmatprep.subr.bf16.mxu0 %v1238
    %1525 = vmatpush1.bf16.msra.mxu0 %v1237
    %1526 = vmatprep.subr.bf16.mxu0 %v1250
    %1527 = vmatpush1.bf16.msra.mxu0 %v1249
    %1528 = vmatprep.subr.bf16.mxu0 %v1262
    %1529 = vmatpush1.bf16.msra.mxu0 %v1261
    %1530 = vmatprep.subr.bf16.mxu0 %v1274
    %1531 = vmatpush1.bf16.msra.mxu0 %v1273
    %1532 = vmatprep.subr.bf16.mxu0 %v1286
    %1533 = vmatpush1.bf16.msra.mxu0 %v1285
    %1534 = vmatprep.subr.bf16.mxu0 0
    %1535 = vmatpush1.bf16.msra.mxu0 0
    %1536 = vmatprep.subr.bf16.mxu0 0
    %1537 = vmatpush1.bf16.msra.mxu0 0
    %1538 = vmatprep.subr.bf16.mxu0 0
    %1539 = vmatpush1.bf16.msra.mxu0 0
    %1540 = vmatprep.subr.bf16.mxu0 0
    %1541 = vmatpush1.bf16.msra.mxu0 0
    %1542 = vmatprep.subr.bf16.mxu0 0
    %1543 = vmatpush1.bf16.msra.mxu0 0
    %1544 = vmatprep.subr.bf16.mxu0 0
    %1545 = vmatpush1.bf16.msra.mxu0 0
    %1546 = vmatprep.subr.bf16.mxu0 0
    %1547 = vmatpush1.bf16.msra.mxu0 0
    %1548 = vmatprep.subr.bf16.mxu0 0
    %1549 = vmatpush1.bf16.msra.mxu0 0
    %1550 = vmatprep.mubr.bf16.mxu0 0
    %1551 = vmatmul.mubr.bf16.gmra.mrb[0].mxu0 %v1289
    %v1552 = vpop.f32.mrb[0].mxu0
    %v1553 = vadd.f32 %v1329, %v1552
    %v1554 = vpop.f32.mrb[0].mxu0
    %v1555 = vadd.f32 %v1333, %v1554
    %v1556 = vpop.f32.mrb[0].mxu0
    %v1557 = vpop.f32.mrb[0].mxu0
    %1558 = vdwg.mxu0
    %1559 = vmatprep.subr.bf16.mxu0 %v1204
    %1560 = vmatpush1.bf16.msra.mxu0 %v1203
    %1561 = vmatprep.subr.bf16.mxu0 %v1216
    %1562 = vmatpush1.bf16.msra.mxu0 %v1215
    %1563 = vmatprep.subr.bf16.mxu0 %v1228
    %1564 = vmatpush1.bf16.msra.mxu0 %v1227
    %1565 = vmatprep.subr.bf16.mxu0 %v1240
    %1566 = vmatpush1.bf16.msra.mxu0 %v1239
    %1567 = vmatprep.subr.bf16.mxu0 %v1252
    %1568 = vmatpush1.bf16.msra.mxu0 %v1251
    %1569 = vmatprep.subr.bf16.mxu0 %v1264
    %1570 = vmatpush1.bf16.msra.mxu0 %v1263
    %1571 = vmatprep.subr.bf16.mxu0 %v1276
    %1572 = vmatpush1.bf16.msra.mxu0 %v1275
    %1573 = vmatprep.subr.bf16.mxu0 %v1288
    %1574 = vmatpush1.bf16.msra.mxu0 %v1287
    %1575 = vmatprep.subr.bf16.mxu0 0
    %1576 = vmatpush1.bf16.msra.mxu0 0
    %1577 = vmatprep.subr.bf16.mxu0 0
    %1578 = vmatpush1.bf16.msra.mxu0 0
    %1579 = vmatprep.subr.bf16.mxu0 0
    %1580 = vmatpush1.bf16.msra.mxu0 0
    %1581 = vmatprep.subr.bf16.mxu0 0
    %1582 = vmatpush1.bf16.msra.mxu0 0
    %1583 = vmatprep.subr.bf16.mxu0 0
    %1584 = vmatpush1.bf16.msra.mxu0 0
    %1585 = vmatprep.subr.bf16.mxu0 0
    %1586 = vmatpush1.bf16.msra.mxu0 0
    %1587 = vmatprep.subr.bf16.mxu0 0
    %1588 = vmatpush1.bf16.msra.mxu0 0
    %1589 = vmatprep.subr.bf16.mxu0 0
    %1590 = vmatpush1.bf16.msra.mxu0 0
    %1591 = vmatprep.mubr.bf16.mxu0 0
    %1592 = vmatmul.mubr.bf16.gmra.mrb[0].mxu0 %v1289
    %v1593 = vpop.f32.mrb[0].mxu0
    %v1594 = vadd.f32 %v1337, %v1593
    %v1595 = vpop.f32.mrb[0].mxu0
    %v1596 = vadd.f32 %v1341, %v1595
    %v1597 = vpop.f32.mrb[0].mxu0
    %v1598 = vpop.f32.mrb[0].mxu0
    %1599 = vdwg.mxu0
    %v1600 = vxor.u32 %v1389, 2147483648
    %v1601 = vxor.u32 %v1391, 2147483648
    %v1602 = vxor.u32 %v1430, 2147483648
    %v1603 = vxor.u32 %v1432, 2147483648
    %v1604 = vxor.u32 %v1471, 2147483648
    %v1605 = vxor.u32 %v1473, 2147483648
    %v1606 = vxor.u32 %v1512, 2147483648
    %v1607 = vxor.u32 %v1514, 2147483648
    %v1608 = vxor.u32 %v1553, 2147483648
    %v1609 = vxor.u32 %v1555, 2147483648
    %v1610 = vxor.u32 %v1594, 2147483648
    %v1611 = vxor.u32 %v1596, 2147483648
    %v1612 = vmul.f32 %v1600, 1.442695
    %v1613 = vpow.pop %v1612
    %v1614 = vmul.f32 %v1601, 1.442695
    %v1615 = vpow.pop %v1614
    %v1616 = vmul.f32 %v1602, 1.442695
    %v1617 = vpow.pop %v1616
    %v1618 = vmul.f32 %v1603, 1.442695
    %v1619 = vpow.pop %v1618
    %v1620 = vmul.f32 %v1604, 1.442695
    %v1621 = vpow.pop %v1620
    %v1622 = vmul.f32 %v1605, 1.442695
    %v1623 = vpow.pop %v1622
    %v1624 = vmul.f32 %v1606, 1.442695
    %v1625 = vpow.pop %v1624
    %v1626 = vmul.f32 %v1607, 1.442695
    %v1627 = vpow.pop %v1626
    %v1628 = vmul.f32 %v1608, 1.442695
    %v1629 = vpow.pop %v1628
    %v1630 = vmul.f32 %v1609, 1.442695
    %v1631 = vpow.pop %v1630
    %v1632 = vmul.f32 %v1610, 1.442695
    %v1633 = vpow.pop %v1632
    %v1634 = vmul.f32 %v1611, 1.442695
    %v1635 = vpow.pop %v1634
    %v1636 = vadd.f32 %v1613, 1.0
    %v1637 = vadd.f32 %v1615, 1.0
    %v1638 = vadd.f32 %v1617, 1.0
    %v1639 = vadd.f32 %v1619, 1.0
    %v1640 = vadd.f32 %v1621, 1.0
    %v1641 = vadd.f32 %v1623, 1.0
    %v1642 = vadd.f32 %v1625, 1.0
    %v1643 = vadd.f32 %v1627, 1.0
    %v1644 = vadd.f32 %v1629, 1.0
    %v1645 = vadd.f32 %v1631, 1.0
    %v1646 = vadd.f32 %v1633, 1.0
    %v1647 = vadd.f32 %v1635, 1.0
    %v1648 = vrcp.pop %v1636
    %v1649 = vmul.f32 1.0, %v1648
    %v1650 = vrcp.pop %v1637
    %v1651 = vmul.f32 1.0, %v1650
    %v1652 = vrcp.pop %v1638
    %v1653 = vmul.f32 1.0, %v1652
    %v1654 = vrcp.pop %v1639
    %v1655 = vmul.f32 1.0, %v1654
    %v1656 = vrcp.pop %v1640
    %v1657 = vmul.f32 1.0, %v1656
    %v1658 = vrcp.pop %v1641
    %v1659 = vmul.f32 1.0, %v1658
    %v1660 = vrcp.pop %v1642
    %v1661 = vmul.f32 1.0, %v1660
    %v1662 = vrcp.pop %v1643
    %v1663 = vmul.f32 1.0, %v1662
    %v1664 = vrcp.pop %v1644
    %v1665 = vmul.f32 1.0, %v1664
    %v1666 = vrcp.pop %v1645
    %v1667 = vmul.f32 1.0, %v1666
    %v1668 = vrcp.pop %v1646
    %v1669 = vmul.f32 1.0, %v1668
    %v1670 = vrcp.pop %v1647
    %v1671 = vmul.f32 1.0, %v1670
    %v1672 = vmul.f32 %v1389, %v1649
    %v1673 = vmul.f32 %v1391, %v1651
    %v1674 = vmul.f32 %v1430, %v1653
    %v1675 = vmul.f32 %v1432, %v1655
    %v1676 = vmul.f32 %v1471, %v1657
    %v1677 = vmul.f32 %v1473, %v1659
    %v1678 = vmul.f32 %v1512, %v1661
    %v1679 = vmul.f32 %v1514, %v1663
    %v1680 = vmul.f32 %v1553, %v1665
    %v1681 = vmul.f32 %v1555, %v1667
    %v1682 = vmul.f32 %v1594, %v1669
    %v1683 = vmul.f32 %v1596, %v1671
    %s1684 = smul.u32 4, 6
    %s1685 = smul.u32 %s1684, 16
    %s1686 = smul.u32 %s1685, 1
    %s1687 = sshll.u32 %s1686, 4
    %1688 = dma.done %s164, %s1687
    %v1689 = vld [vmem:[%s10] sm:$0x1]
    %v1691 = vlaneseq
    %v1692 = vshrl.u32 %v1691, 7
    %v1693 = vsub.s32 0, %v1692
    %v1694 = vrot.slane %v1689, %v1693
    %v1696 = vmul.f32 %v1694, %v1184
    %v1697 = vld [vmem:[%s11] sm:$0x1]
    %v1699 = vlaneseq
    %v1700 = vshrl.u32 %v1699, 7
    %v1701 = vsub.s32 0, %v1700
    %v1702 = vrot.slane %v1697, %v1701
    %v1704 = vadd.f32 %v1696, %v1702
    %v1705 = vadd.f32 %v1672, 1.0
    %v1706 = vmul.f32 %v1704, %v1705
    %v1707 = vadd.f32 %v1673, %v1706
    %v1708 = vxor.u32 %v1707, 2147483648
    %v1709 = vmul.f32 %v1708, 1.442695
    %v1710 = vpow.pop %v1709
    %v1711 = vadd.f32 %v1710, 1.0
    %v1712 = vrcp.pop %v1711
    %v1713 = vmul.f32 1.0, %v1712
    %v1714 = vmul.f32 %v1707, %v1713
    %v1715 = vld [vmem:[#allocation4] sm:$0xff]
    %v1716 = vld [vmem:[#allocation4 + $0x8] sm:$0xff]
    %v1717 = vld [vmem:[#allocation4 + $0x10] sm:$0xff]
    %v1718 = vld [vmem:[#allocation4 + $0x18] sm:$0xff]
    %v1719 = vld [vmem:[#allocation4 + $0x20] sm:$0xff]
    %v1720 = vld [vmem:[#allocation4 + $0x28] sm:$0xff]
    %v1721 = vld [vmem:[#allocation4 + $0x30] sm:$0xff]
    %v1722 = vld [vmem:[#allocation4 + $0x38] sm:$0xff]
    %v1723 = vpack.c.bf16 %v1714, %v1714
    %v1724 = vld [vmem:[%s9] sm:$0x1]
    %v1726 = vlaneseq
    %v1727 = vshrl.u32 %v1726, 7
    %v1728 = vsub.s32 0, %v1727
    %v1729 = vrot.slane %v1724, %v1728
    %1731 = vmatprep.subr.bf16.mxu0 0
    %1732 = vmatpush1.bf16.msra.mxu0 %v1715
    %1733 = vmatprep.subr.bf16.mxu0 0
    %1734 = vmatpush1.bf16.msra.mxu0 %v1716
    %1735 = vmatprep.subr.bf16.mxu0 0
    %1736 = vmatpush1.bf16.msra.mxu0 %v1717
    %1737 = vmatprep.subr.bf16.mxu0 0
    %1738 = vmatpush1.bf16.msra.mxu0 %v1718
    %1739 = vmatprep.subr.bf16.mxu0 0
    %1740 = vmatpush1.bf16.msra.mxu0 %v1719
    %1741 = vmatprep.subr.bf16.mxu0 0
    %1742 = vmatpush1.bf16.msra.mxu0 %v1720
    %1743 = vmatprep.subr.bf16.mxu0 0
    %1744 = vmatpush1.bf16.msra.mxu0 %v1721
    %1745 = vmatprep.subr.bf16.mxu0 0
    %1746 = vmatpush1.bf16.msra.mxu0 %v1722
    %1747 = vmatprep.subr.bf16.mxu0 0
    %1748 = vmatpush1.bf16.msra.mxu0 0
    %1749 = vmatprep.subr.bf16.mxu0 0
    %1750 = vmatpush1.bf16.msra.mxu0 0
    %1751 = vmatprep.subr.bf16.mxu0 0
    %1752 = vmatpush1.bf16.msra.mxu0 0
    %1753 = vmatprep.subr.bf16.mxu0 0
    %1754 = vmatpush1.bf16.msra.mxu0 0
    %1755 = vmatprep.subr.bf16.mxu0 0
    %1756 = vmatpush1.bf16.msra.mxu0 0
    %1757 = vmatprep.subr.bf16.mxu0 0
    %1758 = vmatpush1.bf16.msra.mxu0 0
    %1759 = vmatprep.subr.bf16.mxu0 0
    %1760 = vmatpush1.bf16.msra.mxu0 0
    %1761 = vmatprep.subr.bf16.mxu0 0
    %1762 = vmatpush1.bf16.msra.mxu0 0
    %1763 = vmatprep.mubr.bf16.mxu0 0
    %1764 = vmatmul.mubr.bf16.gmra.mrb[0].mxu0 %v1723
    %v1765 = vpop.f32.mrb[0].mxu0
    %v1766 = vadd.f32 %v1729, %v1765
    %v1767 = vpop.f32.mrb[0].mxu0
    %v1768 = vpop.f32.mrb[0].mxu0
    %v1769 = vpop.f32.mrb[0].mxu0
    %1770 = vdwg.mxu0
    %v1771 = vld [vmem:[%s12] sm:$0x1]
    %v1773 = vlaneseq
    %v1774 = vshrl.u32 %v1773, 7
    %v1775 = vsub.s32 0, %v1774
    %v1776 = vrot.slane %v1771, %v1775
    %v1778 = vmul.f32 %v1776, %v1766
    %v1779 = vld [vmem:[%s13] sm:$0x1]
    %v1781 = vlaneseq
    %v1782 = vshrl.u32 %v1781, 7
    %v1783 = vsub.s32 0, %v1782
    %v1784 = vrot.slane %v1779, %v1783
    %v1786 = vadd.f32 %v1778, %v1784
    %v1787 = vadd.f32 %v1786, %v1184
    %s1788 = scalar_lea.vmem %s10, 1
    %v1789 = vld [vmem:[%s1788] sm:$0x1]
    %v1791 = vlaneseq
    %v1792 = vshrl.u32 %v1791, 7
    %v1793 = vsub.s32 0, %v1792
    %v1794 = vrot.slane %v1789, %v1793
    %v1796 = vmul.f32 %v1794, %v1787
    %s1797 = scalar_lea.vmem %s11, 1
    %v1798 = vld [vmem:[%s1797] sm:$0x1]
    %v1800 = vlaneseq
    %v1801 = vshrl.u32 %v1800, 7
    %v1802 = vsub.s32 0, %v1801
    %v1803 = vrot.slane %v1798, %v1802
    %v1805 = vadd.f32 %v1796, %v1803
    %v1806 = vadd.f32 %v1674, 1.0
    %v1807 = vmul.f32 %v1805, %v1806
    %v1808 = vadd.f32 %v1675, %v1807
    %v1809 = vxor.u32 %v1808, 2147483648
    %v1810 = vmul.f32 %v1809, 1.442695
    %v1811 = vpow.pop %v1810
    %v1812 = vadd.f32 %v1811, 1.0
    %v1813 = vrcp.pop %v1812
    %v1814 = vmul.f32 1.0, %v1813
    %v1815 = vmul.f32 %v1808, %v1814
    %s1816 = scalar_lea.vmem [#allocation4], 64
    %v1817 = vld [vmem:[%s1816] sm:$0xff]
    %v1818 = vld [vmem:[%s1816 + $0x8] sm:$0xff]
    %v1819 = vld [vmem:[%s1816 + $0x10] sm:$0xff]
    %v1820 = vld [vmem:[%s1816 + $0x18] sm:$0xff]
    %v1821 = vld [vmem:[%s1816 + $0x20] sm:$0xff]
    %v1822 = vld [vmem:[%s1816 + $0x28] sm:$0xff]
    %v1823 = vld [vmem:[%s1816 + $0x30] sm:$0xff]
    %v1824 = vld [vmem:[%s1816 + $0x38] sm:$0xff]
    %v1825 = vpack.c.bf16 %v1815, %v1815
    %s1826 = scalar_lea.vmem %s9, 1
    %v1827 = vld [vmem:[%s1826] sm:$0x1]
    %v1829 = vlaneseq
    %v1830 = vshrl.u32 %v1829, 7
    %v1831 = vsub.s32 0, %v1830
    %v1832 = vrot.slane %v1827, %v1831
    %1834 = vmatprep.subr.bf16.mxu0 0
    %1835 = vmatpush1.bf16.msra.mxu0 %v1817
    %1836 = vmatprep.subr.bf16.mxu0 0
    %1837 = vmatpush1.bf16.msra.mxu0 %v1818
    %1838 = vmatprep.subr.bf16.mxu0 0
    %1839 = vmatpush1.bf16.msra.mxu0 %v1819
    %1840 = vmatprep.subr.bf16.mxu0 0
    %1841 = vmatpush1.bf16.msra.mxu0 %v1820
    %1842 = vmatprep.subr.bf16.mxu0 0
    %1843 = vmatpush1.bf16.msra.mxu0 %v1821
    %1844 = vmatprep.subr.bf16.mxu0 0
    %1845 = vmatpush1.bf16.msra.mxu0 %v1822
    %1846 = vmatprep.subr.bf16.mxu0 0
    %1847 = vmatpush1.bf16.msra.mxu0 %v1823
    %1848 = vmatprep.subr.bf16.mxu0 0
    %1849 = vmatpush1.bf16.msra.mxu0 %v1824
    %1850 = vmatprep.subr.bf16.mxu0 0
    %1851 = vmatpush1.bf16.msra.mxu0 0
    %1852 = vmatprep.subr.bf16.mxu0 0
    %1853 = vmatpush1.bf16.msra.mxu0 0
    %1854 = vmatprep.subr.bf16.mxu0 0
    %1855 = vmatpush1.bf16.msra.mxu0 0
    %1856 = vmatprep.subr.bf16.mxu0 0
    %1857 = vmatpush1.bf16.msra.mxu0 0
    %1858 = vmatprep.subr.bf16.mxu0 0
    %1859 = vmatpush1.bf16.msra.mxu0 0
    %1860 = vmatprep.subr.bf16.mxu0 0
    %1861 = vmatpush1.bf16.msra.mxu0 0
    %1862 = vmatprep.subr.bf16.mxu0 0
    %1863 = vmatpush1.bf16.msra.mxu0 0
    %1864 = vmatprep.subr.bf16.mxu0 0
    %1865 = vmatpush1.bf16.msra.mxu0 0
    %1866 = vmatprep.mubr.bf16.mxu0 0
    %1867 = vmatmul.mubr.bf16.gmra.mrb[0].mxu0 %v1825
    %v1868 = vpop.f32.mrb[0].mxu0
    %v1869 = vadd.f32 %v1832, %v1868
    %v1870 = vpop.f32.mrb[0].mxu0
    %v1871 = vpop.f32.mrb[0].mxu0
    %v1872 = vpop.f32.mrb[0].mxu0
    %1873 = vdwg.mxu0
    %s1874 = scalar_lea.vmem %s12, 1
    %v1875 = vld [vmem:[%s1874] sm:$0x1]
    %v1877 = vlaneseq
    %v1878 = vshrl.u32 %v1877, 7
    %v1879 = vsub.s32 0, %v1878
    %v1880 = vrot.slane %v1875, %v1879
    %v1882 = vmul.f32 %v1880, %v1869
    %s1883 = scalar_lea.vmem %s13, 1
    %v1884 = vld [vmem:[%s1883] sm:$0x1]
    %v1886 = vlaneseq
    %v1887 = vshrl.u32 %v1886, 7
    %v1888 = vsub.s32 0, %v1887
    %v1889 = vrot.slane %v1884, %v1888
    %v1891 = vadd.f32 %v1882, %v1889
    %v1892 = vadd.f32 %v1891, %v1787
    %s1893 = scalar_lea.vmem %s10, 2
    %v1894 = vld [vmem:[%s1893] sm:$0x1]
    %v1896 = vlaneseq
    %v1897 = vshrl.u32 %v1896, 7
    %v1898 = vsub.s32 0, %v1897
    %v1899 = vrot.slane %v1894, %v1898
    %v1901 = vmul.f32 %v1899, %v1892
    %s1902 = scalar_lea.vmem %s11, 2
    %v1903 = vld [vmem:[%s1902] sm:$0x1]
    %v1905 = vlaneseq
    %v1906 = vshrl.u32 %v1905, 7
    %v1907 = vsub.s32 0, %v1906
    %v1908 = vrot.slane %v1903, %v1907
    %v1910 = vadd.f32 %v1901, %v1908
    %v1911 = vadd.f32 %v1676, 1.0
    %v1912 = vmul.f32 %v1910, %v1911
    %v1913 = vadd.f32 %v1677, %v1912
    %v1914 = vxor.u32 %v1913, 2147483648
    %v1915 = vmul.f32 %v1914, 1.442695
    %v1916 = vpow.pop %v1915
    %v1917 = vadd.f32 %v1916, 1.0
    %v1918 = vrcp.pop %v1917
    %v1919 = vmul.f32 1.0, %v1918
    %v1920 = vmul.f32 %v1913, %v1919
    %s1921 = scalar_lea.vmem [#allocation4], 128
    %v1922 = vld [vmem:[%s1921] sm:$0xff]
    %v1923 = vld [vmem:[%s1921 + $0x8] sm:$0xff]
    %v1924 = vld [vmem:[%s1921 + $0x10] sm:$0xff]
    %v1925 = vld [vmem:[%s1921 + $0x18] sm:$0xff]
    %v1926 = vld [vmem:[%s1921 + $0x20] sm:$0xff]
    %v1927 = vld [vmem:[%s1921 + $0x28] sm:$0xff]
    %v1928 = vld [vmem:[%s1921 + $0x30] sm:$0xff]
    %v1929 = vld [vmem:[%s1921 + $0x38] sm:$0xff]
    %v1930 = vpack.c.bf16 %v1920, %v1920
    %s1931 = scalar_lea.vmem %s9, 2
    %v1932 = vld [vmem:[%s1931] sm:$0x1]
    %v1934 = vlaneseq
    %v1935 = vshrl.u32 %v1934, 7
    %v1936 = vsub.s32 0, %v1935
    %v1937 = vrot.slane %v1932, %v1936
    %1939 = vmatprep.subr.bf16.mxu0 0
    %1940 = vmatpush1.bf16.msra.mxu0 %v1922
    %1941 = vmatprep.subr.bf16.mxu0 0
    %1942 = vmatpush1.bf16.msra.mxu0 %v1923
    %1943 = vmatprep.subr.bf16.mxu0 0
    %1944 = vmatpush1.bf16.msra.mxu0 %v1924
    %1945 = vmatprep.subr.bf16.mxu0 0
    %1946 = vmatpush1.bf16.msra.mxu0 %v1925
    %1947 = vmatprep.subr.bf16.mxu0 0
    %1948 = vmatpush1.bf16.msra.mxu0 %v1926
    %1949 = vmatprep.subr.bf16.mxu0 0
    %1950 = vmatpush1.bf16.msra.mxu0 %v1927
    %1951 = vmatprep.subr.bf16.mxu0 0
    %1952 = vmatpush1.bf16.msra.mxu0 %v1928
    %1953 = vmatprep.subr.bf16.mxu0 0
    %1954 = vmatpush1.bf16.msra.mxu0 %v1929
    %1955 = vmatprep.subr.bf16.mxu0 0
    %1956 = vmatpush1.bf16.msra.mxu0 0
    %1957 = vmatprep.subr.bf16.mxu0 0
    %1958 = vmatpush1.bf16.msra.mxu0 0
    %1959 = vmatprep.subr.bf16.mxu0 0
    %1960 = vmatpush1.bf16.msra.mxu0 0
    %1961 = vmatprep.subr.bf16.mxu0 0
    %1962 = vmatpush1.bf16.msra.mxu0 0
    %1963 = vmatprep.subr.bf16.mxu0 0
    %1964 = vmatpush1.bf16.msra.mxu0 0
    %1965 = vmatprep.subr.bf16.mxu0 0
    %1966 = vmatpush1.bf16.msra.mxu0 0
    %1967 = vmatprep.subr.bf16.mxu0 0
    %1968 = vmatpush1.bf16.msra.mxu0 0
    %1969 = vmatprep.subr.bf16.mxu0 0
    %1970 = vmatpush1.bf16.msra.mxu0 0
    %1971 = vmatprep.mubr.bf16.mxu0 0
    %1972 = vmatmul.mubr.bf16.gmra.mrb[0].mxu0 %v1930
    %v1973 = vpop.f32.mrb[0].mxu0
    %v1974 = vadd.f32 %v1937, %v1973
    %v1975 = vpop.f32.mrb[0].mxu0
    %v1976 = vpop.f32.mrb[0].mxu0
    %v1977 = vpop.f32.mrb[0].mxu0
    %1978 = vdwg.mxu0
    %s1979 = scalar_lea.vmem %s12, 2
    %v1980 = vld [vmem:[%s1979] sm:$0x1]
    %v1982 = vlaneseq
    %v1983 = vshrl.u32 %v1982, 7
    %v1984 = vsub.s32 0, %v1983
    %v1985 = vrot.slane %v1980, %v1984
    %v1987 = vmul.f32 %v1985, %v1974
    %s1988 = scalar_lea.vmem %s13, 2
    %v1989 = vld [vmem:[%s1988] sm:$0x1]
    %v1991 = vlaneseq
    %v1992 = vshrl.u32 %v1991, 7
    %v1993 = vsub.s32 0, %v1992
    %v1994 = vrot.slane %v1989, %v1993
    %v1996 = vadd.f32 %v1987, %v1994
    %v1997 = vadd.f32 %v1996, %v1892
    %s1998 = scalar_lea.vmem %s10, 3
    %v1999 = vld [vmem:[%s1998] sm:$0x1]
    %v2001 = vlaneseq
    %v2002 = vshrl.u32 %v2001, 7
    %v2003 = vsub.s32 0, %v2002
    %v2004 = vrot.slane %v1999, %v2003
    %v2006 = vmul.f32 %v2004, %v1997
    %s2007 = scalar_lea.vmem %s11, 3
    %v2008 = vld [vmem:[%s2007] sm:$0x1]
    %v2010 = vlaneseq
    %v2011 = vshrl.u32 %v2010, 7
    %v2012 = vsub.s32 0, %v2011
    %v2013 = vrot.slane %v2008, %v2012
    %v2015 = vadd.f32 %v2006, %v2013
    %v2016 = vadd.f32 %v1678, 1.0
    %v2017 = vmul.f32 %v2015, %v2016
    %v2018 = vadd.f32 %v1679, %v2017
    %v2019 = vxor.u32 %v2018, 2147483648
    %v2020 = vmul.f32 %v2019, 1.442695
    %v2021 = vpow.pop %v2020
    %v2022 = vadd.f32 %v2021, 1.0
    %v2023 = vrcp.pop %v2022
    %v2024 = vmul.f32 1.0, %v2023
    %v2025 = vmul.f32 %v2018, %v2024
    %s2026 = scalar_lea.vmem [#allocation4], 192
    %v2027 = vld [vmem:[%s2026] sm:$0xff]
    %v2028 = vld [vmem:[%s2026 + $0x8] sm:$0xff]
    %v2029 = vld [vmem:[%s2026 + $0x10] sm:$0xff]
    %v2030 = vld [vmem:[%s2026 + $0x18] sm:$0xff]
    %v2031 = vld [vmem:[%s2026 + $0x20] sm:$0xff]
    %v2032 = vld [vmem:[%s2026 + $0x28] sm:$0xff]
    %v2033 = vld [vmem:[%s2026 + $0x30] sm:$0xff]
    %v2034 = vld [vmem:[%s2026 + $0x38] sm:$0xff]
    %v2035 = vpack.c.bf16 %v2025, %v2025
    %s2036 = scalar_lea.vmem %s9, 3
    %v2037 = vld [vmem:[%s2036] sm:$0x1]
    %v2039 = vlaneseq
    %v2040 = vshrl.u32 %v2039, 7
    %v2041 = vsub.s32 0, %v2040
    %v2042 = vrot.slane %v2037, %v2041
    %2044 = vmatprep.subr.bf16.mxu0 0
    %2045 = vmatpush1.bf16.msra.mxu0 %v2027
    %2046 = vmatprep.subr.bf16.mxu0 0
    %2047 = vmatpush1.bf16.msra.mxu0 %v2028
    %2048 = vmatprep.subr.bf16.mxu0 0
    %2049 = vmatpush1.bf16.msra.mxu0 %v2029
    %2050 = vmatprep.subr.bf16.mxu0 0
    %2051 = vmatpush1.bf16.msra.mxu0 %v2030
    %2052 = vmatprep.subr.bf16.mxu0 0
    %2053 = vmatpush1.bf16.msra.mxu0 %v2031
    %2054 = vmatprep.subr.bf16.mxu0 0
    %2055 = vmatpush1.bf16.msra.mxu0 %v2032
    %2056 = vmatprep.subr.bf16.mxu0 0
    %2057 = vmatpush1.bf16.msra.mxu0 %v2033
    %2058 = vmatprep.subr.bf16.mxu0 0
    %2059 = vmatpush1.bf16.msra.mxu0 %v2034
    %2060 = vmatprep.subr.bf16.mxu0 0
    %2061 = vmatpush1.bf16.msra.mxu0 0
    %2062 = vmatprep.subr.bf16.mxu0 0
    %2063 = vmatpush1.bf16.msra.mxu0 0
    %2064 = vmatprep.subr.bf16.mxu0 0
    %2065 = vmatpush1.bf16.msra.mxu0 0
    %2066 = vmatprep.subr.bf16.mxu0 0
    %2067 = vmatpush1.bf16.msra.mxu0 0
    %2068 = vmatprep.subr.bf16.mxu0 0
    %2069 = vmatpush1.bf16.msra.mxu0 0
    %2070 = vmatprep.subr.bf16.mxu0 0
    %2071 = vmatpush1.bf16.msra.mxu0 0
    %2072 = vmatprep.subr.bf16.mxu0 0
    %2073 = vmatpush1.bf16.msra.mxu0 0
    %2074 = vmatprep.subr.bf16.mxu0 0
    %2075 = vmatpush1.bf16.msra.mxu0 0
    %2076 = vmatprep.mubr.bf16.mxu0 0
    %2077 = vmatmul.mubr.bf16.gmra.mrb[0].mxu0 %v2035
    %v2078 = vpop.f32.mrb[0].mxu0
    %v2079 = vadd.f32 %v2042, %v2078
    %v2080 = vpop.f32.mrb[0].mxu0
    %v2081 = vpop.f32.mrb[0].mxu0
    %v2082 = vpop.f32.mrb[0].mxu0
    %2083 = vdwg.mxu0
    %s2084 = scalar_lea.vmem %s12, 3
    %v2085 = vld [vmem:[%s2084] sm:$0x1]
    %v2087 = vlaneseq
    %v2088 = vshrl.u32 %v2087, 7
    %v2089 = vsub.s32 0, %v2088
    %v2090 = vrot.slane %v2085, %v2089
    %v2092 = vmul.f32 %v2090, %v2079
    %s2093 = scalar_lea.vmem %s13, 3
    %v2094 = vld [vmem:[%s2093] sm:$0x1]
    %v2096 = vlaneseq
    %v2097 = vshrl.u32 %v2096, 7
    %v2098 = vsub.s32 0, %v2097
    %v2099 = vrot.slane %v2094, %v2098
    %v2101 = vadd.f32 %v2092, %v2099
    %v2102 = vadd.f32 %v2101, %v1997
    %s2103 = scalar_lea.vmem %s10, 4
    %v2104 = vld [vmem:[%s2103] sm:$0x1]
    %v2106 = vlaneseq
    %v2107 = vshrl.u32 %v2106, 7
    %v2108 = vsub.s32 0, %v2107
    %v2109 = vrot.slane %v2104, %v2108
    %v2111 = vmul.f32 %v2109, %v2102
    %s2112 = scalar_lea.vmem %s11, 4
    %v2113 = vld [vmem:[%s2112] sm:$0x1]
    %v2115 = vlaneseq
    %v2116 = vshrl.u32 %v2115, 7
    %v2117 = vsub.s32 0, %v2116
    %v2118 = vrot.slane %v2113, %v2117
    %v2120 = vadd.f32 %v2111, %v2118
    %v2121 = vadd.f32 %v1680, 1.0
    %v2122 = vmul.f32 %v2120, %v2121
    %v2123 = vadd.f32 %v1681, %v2122
    %v2124 = vxor.u32 %v2123, 2147483648
    %v2125 = vmul.f32 %v2124, 1.442695
    %v2126 = vpow.pop %v2125
    %v2127 = vadd.f32 %v2126, 1.0
    %v2128 = vrcp.pop %v2127
    %v2129 = vmul.f32 1.0, %v2128
    %v2130 = vmul.f32 %v2123, %v2129
    %s2131 = scalar_lea.vmem [#allocation4], 256
    %v2132 = vld [vmem:[%s2131] sm:$0xff]
    %v2133 = vld [vmem:[%s2131 + $0x8] sm:$0xff]
    %v2134 = vld [vmem:[%s2131 + $0x10] sm:$0xff]
    %v2135 = vld [vmem:[%s2131 + $0x18] sm:$0xff]
    %v2136 = vld [vmem:[%s2131 + $0x20] sm:$0xff]
    %v2137 = vld [vmem:[%s2131 + $0x28] sm:$0xff]
    %v2138 = vld [vmem:[%s2131 + $0x30] sm:$0xff]
    %v2139 = vld [vmem:[%s2131 + $0x38] sm:$0xff]
    %v2140 = vpack.c.bf16 %v2130, %v2130
    %s2141 = scalar_lea.vmem %s9, 4
    %v2142 = vld [vmem:[%s2141] sm:$0x1]
    %v2144 = vlaneseq
    %v2145 = vshrl.u32 %v2144, 7
    %v2146 = vsub.s32 0, %v2145
    %v2147 = vrot.slane %v2142, %v2146
    %2149 = vmatprep.subr.bf16.mxu0 0
    %2150 = vmatpush1.bf16.msra.mxu0 %v2132
    %2151 = vmatprep.subr.bf16.mxu0 0
    %2152 = vmatpush1.bf16.msra.mxu0 %v2133
    %2153 = vmatprep.subr.bf16.mxu0 0
    %2154 = vmatpush1.bf16.msra.mxu0 %v2134
    %2155 = vmatprep.subr.bf16.mxu0 0
    %2156 = vmatpush1.bf16.msra.mxu0 %v2135
    %2157 = vmatprep.subr.bf16.mxu0 0
    %2158 = vmatpush1.bf16.msra.mxu0 %v2136
    %2159 = vmatprep.subr.bf16.mxu0 0
    %2160 = vmatpush1.bf16.msra.mxu0 %v2137
    %2161 = vmatprep.subr.bf16.mxu0 0
    %2162 = vmatpush1.bf16.msra.mxu0 %v2138
    %2163 = vmatprep.subr.bf16.mxu0 0
    %2164 = vmatpush1.bf16.msra.mxu0 %v2139
    %2165 = vmatprep.subr.bf16.mxu0 0
    %2166 = vmatpush1.bf16.msra.mxu0 0
    %2167 = vmatprep.subr.bf16.mxu0 0
    %2168 = vmatpush1.bf16.msra.mxu0 0
    %2169 = vmatprep.subr.bf16.mxu0 0
    %2170 = vmatpush1.bf16.msra.mxu0 0
    %2171 = vmatprep.subr.bf16.mxu0 0
    %2172 = vmatpush1.bf16.msra.mxu0 0
    %2173 = vmatprep.subr.bf16.mxu0 0
    %2174 = vmatpush1.bf16.msra.mxu0 0
    %2175 = vmatprep.subr.bf16.mxu0 0
    %2176 = vmatpush1.bf16.msra.mxu0 0
    %2177 = vmatprep.subr.bf16.mxu0 0
    %2178 = vmatpush1.bf16.msra.mxu0 0
    %2179 = vmatprep.subr.bf16.mxu0 0
    %2180 = vmatpush1.bf16.msra.mxu0 0
    %2181 = vmatprep.mubr.bf16.mxu0 0
    %2182 = vmatmul.mubr.bf16.gmra.mrb[0].mxu0 %v2140
    %v2183 = vpop.f32.mrb[0].mxu0
    %v2184 = vadd.f32 %v2147, %v2183
    %v2185 = vpop.f32.mrb[0].mxu0
    %v2186 = vpop.f32.mrb[0].mxu0
    %v2187 = vpop.f32.mrb[0].mxu0
    %2188 = vdwg.mxu0
    %s2189 = scalar_lea.vmem %s12, 4
    %v2190 = vld [vmem:[%s2189] sm:$0x1]
    %v2192 = vlaneseq
    %v2193 = vshrl.u32 %v2192, 7
    %v2194 = vsub.s32 0, %v2193
    %v2195 = vrot.slane %v2190, %v2194
    %v2197 = vmul.f32 %v2195, %v2184
    %s2198 = scalar_lea.vmem %s13, 4
    %v2199 = vld [vmem:[%s2198] sm:$0x1]
    %v2201 = vlaneseq
    %v2202 = vshrl.u32 %v2201, 7
    %v2203 = vsub.s32 0, %v2202
    %v2204 = vrot.slane %v2199, %v2203
    %v2206 = vadd.f32 %v2197, %v2204
    %v2207 = vadd.f32 %v2206, %v2102
    %s2208 = scalar_lea.vmem %s10, 5
    %v2209 = vld [vmem:[%s2208] sm:$0x1]
    %v2211 = vlaneseq
    %v2212 = vshrl.u32 %v2211, 7
    %v2213 = vsub.s32 0, %v2212
    %v2214 = vrot.slane %v2209, %v2213
    %v2216 = vmul.f32 %v2214, %v2207
    %s2217 = scalar_lea.vmem %s11, 5
    %v2218 = vld [vmem:[%s2217] sm:$0x1]
    %v2220 = vlaneseq
    %v2221 = vshrl.u32 %v2220, 7
    %v2222 = vsub.s32 0, %v2221
    %v2223 = vrot.slane %v2218, %v2222
    %v2225 = vadd.f32 %v2216, %v2223
    %v2226 = vadd.f32 %v1682, 1.0
    %v2227 = vmul.f32 %v2225, %v2226
    %v2228 = vadd.f32 %v1683, %v2227
    %v2229 = vxor.u32 %v2228, 2147483648
    %v2230 = vmul.f32 %v2229, 1.442695
    %v2231 = vpow.pop %v2230
    %v2232 = vadd.f32 %v2231, 1.0
    %v2233 = vrcp.pop %v2232
    %v2234 = vmul.f32 1.0, %v2233
    %v2235 = vmul.f32 %v2228, %v2234
    %s2236 = scalar_lea.vmem [#allocation4], 320
    %v2237 = vld [vmem:[%s2236] sm:$0xff]
    %v2238 = vld [vmem:[%s2236 + $0x8] sm:$0xff]
    %v2239 = vld [vmem:[%s2236 + $0x10] sm:$0xff]
    %v2240 = vld [vmem:[%s2236 + $0x18] sm:$0xff]
    %v2241 = vld [vmem:[%s2236 + $0x20] sm:$0xff]
    %v2242 = vld [vmem:[%s2236 + $0x28] sm:$0xff]
    %v2243 = vld [vmem:[%s2236 + $0x30] sm:$0xff]
    %v2244 = vld [vmem:[%s2236 + $0x38] sm:$0xff]
    %v2245 = vpack.c.bf16 %v2235, %v2235
    %s2246 = scalar_lea.vmem %s9, 5
    %v2247 = vld [vmem:[%s2246] sm:$0x1]
    %v2249 = vlaneseq
    %v2250 = vshrl.u32 %v2249, 7
    %v2251 = vsub.s32 0, %v2250
    %v2252 = vrot.slane %v2247, %v2251
    %2254 = vmatprep.subr.bf16.mxu0 0
    %2255 = vmatpush1.bf16.msra.mxu0 %v2237
    %2256 = vmatprep.subr.bf16.mxu0 0
    %2257 = vmatpush1.bf16.msra.mxu0 %v2238
    %2258 = vmatprep.subr.bf16.mxu0 0
    %2259 = vmatpush1.bf16.msra.mxu0 %v2239
    %2260 = vmatprep.subr.bf16.mxu0 0
    %2261 = vmatpush1.bf16.msra.mxu0 %v2240
    %2262 = vmatprep.subr.bf16.mxu0 0
    %2263 = vmatpush1.bf16.msra.mxu0 %v2241
    %2264 = vmatprep.subr.bf16.mxu0 0
    %2265 = vmatpush1.bf16.msra.mxu0 %v2242
    %2266 = vmatprep.subr.bf16.mxu0 0
    %2267 = vmatpush1.bf16.msra.mxu0 %v2243
    %2268 = vmatprep.subr.bf16.mxu0 0
    %2269 = vmatpush1.bf16.msra.mxu0 %v2244
    %2270 = vmatprep.subr.bf16.mxu0 0
    %2271 = vmatpush1.bf16.msra.mxu0 0
    %2272 = vmatprep.subr.bf16.mxu0 0
    %2273 = vmatpush1.bf16.msra.mxu0 0
    %2274 = vmatprep.subr.bf16.mxu0 0
    %2275 = vmatpush1.bf16.msra.mxu0 0
    %2276 = vmatprep.subr.bf16.mxu0 0
    %2277 = vmatpush1.bf16.msra.mxu0 0
    %2278 = vmatprep.subr.bf16.mxu0 0
    %2279 = vmatpush1.bf16.msra.mxu0 0
    %2280 = vmatprep.subr.bf16.mxu0 0
    %2281 = vmatpush1.bf16.msra.mxu0 0
    %2282 = vmatprep.subr.bf16.mxu0 0
    %2283 = vmatpush1.bf16.msra.mxu0 0
    %2284 = vmatprep.subr.bf16.mxu0 0
    %2285 = vmatpush1.bf16.msra.mxu0 0
    %2286 = vmatprep.mubr.bf16.mxu0 0
    %2287 = vmatmul.mubr.bf16.gmra.mrb[0].mxu0 %v2245
    %v2288 = vpop.f32.mrb[0].mxu0
    %v2289 = vadd.f32 %v2252, %v2288
    %v2290 = vpop.f32.mrb[0].mxu0
    %v2291 = vpop.f32.mrb[0].mxu0
    %v2292 = vpop.f32.mrb[0].mxu0
    %2293 = vdwg.mxu0
    %s2294 = scalar_lea.vmem %s12, 5
    %v2295 = vld [vmem:[%s2294] sm:$0x1]
    %v2297 = vlaneseq
    %v2298 = vshrl.u32 %v2297, 7
    %v2299 = vsub.s32 0, %v2298
    %v2300 = vrot.slane %v2295, %v2299
    %v2302 = vmul.f32 %v2300, %v2289
    %s2303 = scalar_lea.vmem %s13, 5
    %v2304 = vld [vmem:[%s2303] sm:$0x1]
    %v2306 = vlaneseq
    %v2307 = vshrl.u32 %v2306, 7
    %v2308 = vsub.s32 0, %v2307
    %v2309 = vrot.slane %v2304, %v2308
    %v2311 = vadd.f32 %v2302, %v2309
    %v2312 = vadd.f32 %v2311, %v2207
    %v2313 = vxor.u32 %v2312, 2147483648
    %v2314 = vmul.f32 %v2313, 1.442695
    %v2315 = vpow.pop %v2314
    %v2316 = vadd.f32 %v2315, 1.0
    %v2317 = vrcp.pop %v2316
    %v2318 = vmul.f32 1.0, %v2317
    %v2319 = vmul.f32 %v2312, %v2318
    %v2320 = vld [vmem:[%s14] sm:$0xf]
    %v2321 = vld [vmem:[%s14 + $0x4] sm:$0xf]
    %v2322 = vld [vmem:[%s14 + $0x8] sm:$0xf]
    %v2323 = vld [vmem:[%s14 + $0xc] sm:$0xf]
    %v2324 = vld [vmem:[%s14 + $0x10] sm:$0xf]
    %v2325 = vld [vmem:[%s14 + $0x14] sm:$0xf]
    %v2326 = vld [vmem:[%s14 + $0x18] sm:$0xf]
    %v2327 = vld [vmem:[%s14 + $0x1c] sm:$0xf]
    %v2328 = vld [vmem:[%s14 + $0x20] sm:$0xf]
    %v2329 = vld [vmem:[%s14 + $0x24] sm:$0xf]
    %v2330 = vld [vmem:[%s14 + $0x28] sm:$0xf]
    %v2331 = vld [vmem:[%s14 + $0x2c] sm:$0xf]
    %v2332 = vld [vmem:[%s14 + $0x30] sm:$0xf]
    %v2333 = vld [vmem:[%s14 + $0x34] sm:$0xf]
    %v2334 = vld [vmem:[%s14 + $0x38] sm:$0xf]
    %v2335 = vld [vmem:[%s14 + $0x3c] sm:$0xf]
    %v2336 = vpack.c.bf16 %v2319, %v2319
    %v2337 = vld [vmem:[#allocation13] sm:$0x1]
    %v2339 = vlaneseq
    %v2340 = vshrl.u32 %v2339, 7
    %v2341 = vsub.s32 0, %v2340
    %v2342 = vrot.slane %v2337, %v2341
    %v2360 = vunpack.c.l.b16 %v2320
    %v2361 = vunpack.c.l.b16 %v2321
    %v2362 = vunpack.c.l.b16 %v2322
    %v2363 = vunpack.c.l.b16 %v2323
    %v2364 = vunpack.c.l.b16 %v2324
    %v2365 = vunpack.c.l.b16 %v2325
    %v2366 = vunpack.c.l.b16 %v2326
    %v2367 = vunpack.c.l.b16 %v2327
    %v2368 = vunpack.c.l.b16 %v2328
    %v2369 = vunpack.c.l.b16 %v2329
    %v2370 = vunpack.c.l.b16 %v2330
    %v2371 = vunpack.c.l.b16 %v2331
    %v2372 = vunpack.c.l.b16 %v2332
    %v2373 = vunpack.c.l.b16 %v2333
    %v2374 = vunpack.c.l.b16 %v2334
    %v2375 = vunpack.c.l.b16 %v2335
    %v2376 = vpack.c.b16 %v2361, %v2360
    %v2377 = vpack.c.b16 %v2363, %v2362
    %v2378 = vpack.c.b16 %v2365, %v2364
    %v2379 = vpack.c.b16 %v2367, %v2366
    %v2380 = vpack.c.b16 %v2369, %v2368
    %v2381 = vpack.c.b16 %v2371, %v2370
    %v2382 = vpack.c.b16 %v2373, %v2372
    %v2383 = vpack.c.b16 %v2375, %v2374
    %2392 = vmatprep.subr.bf16.mxu0 0
    %2393 = vmatpush1.bf16.msra.mxu0 %v2376
    %2394 = vmatprep.subr.bf16.mxu0 0
    %2395 = vmatpush1.bf16.msra.mxu0 %v2377
    %2396 = vmatprep.subr.bf16.mxu0 0
    %2397 = vmatpush1.bf16.msra.mxu0 %v2378
    %2398 = vmatprep.subr.bf16.mxu0 0
    %2399 = vmatpush1.bf16.msra.mxu0 %v2379
    %2400 = vmatprep.subr.bf16.mxu0 0
    %2401 = vmatpush1.bf16.msra.mxu0 %v2380
    %2402 = vmatprep.subr.bf16.mxu0 0
    %2403 = vmatpush1.bf16.msra.mxu0 %v2381
    %2404 = vmatprep.subr.bf16.mxu0 0
    %2405 = vmatpush1.bf16.msra.mxu0 %v2382
    %2406 = vmatprep.subr.bf16.mxu0 0
    %2407 = vmatpush1.bf16.msra.mxu0 %v2383
    %2408 = vmatprep.subr.bf16.mxu0 0
    %2409 = vmatpush1.bf16.msra.mxu0 0
    %2410 = vmatprep.subr.bf16.mxu0 0
    %2411 = vmatpush1.bf16.msra.mxu0 0
    %2412 = vmatprep.subr.bf16.mxu0 0
    %2413 = vmatpush1.bf16.msra.mxu0 0
    %2414 = vmatprep.subr.bf16.mxu0 0
    %2415 = vmatpush1.bf16.msra.mxu0 0
    %2416 = vmatprep.subr.bf16.mxu0 0
    %2417 = vmatpush1.bf16.msra.mxu0 0
    %2418 = vmatprep.subr.bf16.mxu0 0
    %2419 = vmatpush1.bf16.msra.mxu0 0
    %2420 = vmatprep.subr.bf16.mxu0 0
    %2421 = vmatpush1.bf16.msra.mxu0 0
    %2422 = vmatprep.subr.bf16.mxu0 0
    %2423 = vmatpush1.bf16.msra.mxu0 0
    %2424 = vmatprep.mubr.bf16.mxu0 0
    %2425 = vmatmul.mubr.bf16.gmra.mrb[0].mxu0 %v2336
    %v2426 = vpop.f32.mrb[0].mxu0
    %v2427 = vadd.f32 %v2342, %v2426
    %v2428 = vpop.f32.mrb[0].mxu0
    %v2429 = vpop.f32.mrb[0].mxu0
    %v2430 = vpop.f32.mrb[0].mxu0
    %2431 = vdwg.mxu0
    %vm2432 = vcmask 64512
    %2433 = vst.msk [vmem:[%s19] sm:$0xff] %vm2432, %v2427
    // Predicated region
    $region94: #{resnet_forward.1} parent=1 // pred_check
      _
    $region95: #{resnet_forward.1} parent=1 // pred_check_branch
      %2435 = sbr.rel (0) target = $region97
    $region96: #{resnet_forward.1} parent=1 // pred_region
      _
    $region97: #{resnet_forward.1} parent=1 // pred_fallthru
      _
    // Predicated region
    $region98: #{resnet_forward.1} parent=1 // pred_check
      _
    $region99: #{resnet_forward.1} parent=1 // pred_check_branch
      %2437 = sbr.rel (0) target = $region101
    $region100: #{resnet_forward.1} parent=1 // pred_region
      _
    $region101: #{resnet_forward.1} parent=1 // pred_fallthru
      _
    %2438 = vsyncpa [#allocation7], 1
    %2439 = vsyncpa [#allocation9], 1
    %2440 = vsyncpa [#allocation12], 1
  %2441 = vsyncmov [#allocation5]
  %s2442 = vpop.sfrf %2441
  %p2443 = scmp.eq.s32.totalorder %s2442, 0
  %p2444 = pneg %p2443
  %2446 = shalt.err (%p2444)
  %s2447 = scalar_lea.sflag [#allocation5], 1
  %2448 = vsyncmov %s2447
  %s2449 = vpop.sfrf %2448
  %p2450 = scmp.eq.s32.totalorder %s2449, 0
  %p2451 = pneg %p2450
  %2453 = shalt.err (%p2451)
  %s2454 = scalar_lea.sflag [#allocation5], 2
  %2455 = vsyncmov %s2454
  %s2456 = vpop.sfrf %2455
  %p2457 = scmp.eq.s32.totalorder %s2456, 0
  %p2458 = pneg %p2457
  %2460 = shalt.err (%p2458)

</llo_original>
